<compile_context>
chip_gen: v7x
topology: tpu7x:2x2x1
jax: 0.10.0
libtpu: 0.0.40
codegen_flags: <defaults>
</compile_context>

<pallas_src>
import functools

import jax
import jax.numpy as jnp
from jax import lax
from jax.experimental import pallas as pl
from jax.experimental.pallas import tpu as pltpu


# --------------------------------------------------------------------------- #
# Phase 1: Q projection + attention + mh_filter + cat_filter conv #1
#          (pre-BatchNorm activations + per-tile BN partial stats)
# --------------------------------------------------------------------------- #
def _attn_conv1_kernel(head, hd, scale, mxu_dtype,
                       d1_ref, kh_ref, vh_ref,
                       wq_ref, bq_ref, wmh_ref, bm_ref,
                       wc1a_ref, wc1b_ref, bc1_ref,
                       pre_ref, sum_ref, sq_ref):
    B, TN, C = d1_ref.shape
    C2 = pre_ref.shape[-1]
    cast = lambda a: a.astype(mxu_dtype)          # no-op on the f32 path

    # Fold batch into rows: one big MXU matmul per 1x1 conv instead of B tiny ones.
    x1 = d1_ref[...].reshape(B * TN, C)
    x1c = cast(x1)

    # Full-width Q projection: single (B*TN, C) @ (C, C) matmul (fills MXU lanes).
    q = jnp.dot(x1c, wq_ref[...], preferred_element_type=jnp.float32) + bq_ref[...]
    qc = cast(q)

    mh = jnp.zeros((B * TN, C), jnp.float32)
    for h in range(head):                         # head is small; static unroll
        q3 = qc[:, h * hd:(h + 1) * hd].reshape(B, TN, hd)
        k3 = kh_ref[h]                            # (B, M, hd) hoisted to wrapper
        v3 = vh_ref[h]                            # (B, M, hd) already * weight_v

        # Attention for this head, batched over B in one dot_general each.
        s = jnp.einsum('bnd,bmd->bnm', q3, k3,
                       preferred_element_type=jnp.float32) * scale
        s = s - jnp.max(s, axis=-1, keepdims=True)
        p = jnp.exp(s)
        denom = jnp.sum(p, axis=-1, keepdims=True)     # (B, TN, 1), >= 1
        o = jnp.einsum('bnm,bmd->bnd', cast(p), v3,
                       preferred_element_type=jnp.float32)
        # Deferred softmax normalization: scale o (hd lanes) instead of p (M lanes).
        o = o * pl.reciprocal(denom, approx=False)

        # mh_filter accumulated per head (full C-wide output lanes, no concat).
        mh = mh + jnp.dot(cast(o.reshape(B * TN, hd)), wmh_ref[h],
                          preferred_element_type=jnp.float32)
    mh = mh + bm_ref[...]

    # cat_filter conv #1 with wc1 pre-split: no (N, 2C) channel concat.
    pre = (jnp.dot(x1c, wc1a_ref[...], preferred_element_type=jnp.float32)
           + jnp.dot(cast(mh), wc1b_ref[...], preferred_element_type=jnp.float32)
           + bc1_ref[...])
    pre_ref[...] = pre.reshape(B, TN, C2)

    # Per-tile BN partial stats (reduced host-side) so phase 2 can stay tiled.
    sum_ref[...] = jnp.sum(pre, axis=0).reshape(1, 1, C2)
    sq_ref[...] = jnp.sum(pre * pre, axis=0).reshape(1, 1, C2)


# --------------------------------------------------------------------------- #
# Phase 2 (tiled): BN affine (precomputed scale/shift) + ReLU + conv #2 + residual
# --------------------------------------------------------------------------- #
def _bn_conv2_kernel(mxu_dtype,
                     d1_ref, pre_ref, scale_ref, shift_ref, wc2_ref, bc2_ref,
                     out_ref):
    B, TN, C = d1_ref.shape
    C2 = pre_ref.shape[-1]
    pre = pre_ref[...].reshape(B * TN, C2)

    act = jnp.maximum(pre * scale_ref[...] + shift_ref[...], 0.0)
    y = jnp.dot(act.astype(mxu_dtype), wc2_ref[...],
                preferred_element_type=jnp.float32) + bc2_ref[...]
    out = d1_ref[...].reshape(B * TN, C) + y       # residual, lane-dense store
    out_ref[...] = out.reshape(B, TN, C).astype(out_ref.dtype)


# --------------------------------------------------------------------------- #
# Wrapper
# --------------------------------------------------------------------------- #
def _pick_tile(n, cap=512):
    # Sweep tile_n upward toward the VMEM budget; B*tile_n >= 256 keeps the MXU
    # M-dimension filled on v6e/v7x (>=128 on v5e). On v7x (64 MiB VMEM) keep the
    # per-step working set roughly half of what v6e would allow.
    for cand in (512, 256, 128, 64, 32, 16, 8):
        if cand <= cap and n % cand == 0:
            return cand
    return n


def attention_propagation(desc1, desc2, params, head, weight_v=None,
                          eps=1e-5, tile_n=None, mxu_dtype=jnp.float32):
    """desc1: (B, C, N), desc2: (B, C, M) -- PyTorch NCW layout at the boundary."""
    (wq, bq, wk, bk, wvl, bv, wm, bm,
     wc1, bc1, gamma, beta, wc2, bc2) = params
    B, C, N = desc1.shape
    M = desc2.shape[2]
    assert C % head == 0, "channel must be divisible by head"
    hd = C // head

    # Host-side layout plumbing (free): channels-last activations.
    d1 = jnp.transpose(desc1, (0, 2, 1)).astype(jnp.float32)   # (B, N, C)
    d2 = jnp.transpose(desc2, (0, 2, 1)).astype(jnp.float32)   # (B, M, C)

    # K/V projections hoisted out of the N-tile grid: depend only on desc2, so
    # compute them once with plain XLA matmuls and pass per-head slabs in.
    x2 = d2.reshape(B * M, C)
    k = (x2 @ wk + bk).reshape(B, M, head, hd)
    v = (x2 @ wvl + bv).reshape(B, M, head, hd)
    if weight_v is not None:
        v = v * jnp.asarray(weight_v, jnp.float32).reshape(B, M, 1, 1)
    kh = jnp.transpose(k, (2, 0, 1, 3)).astype(mxu_dtype)      # (head, B, M, hd)
    vh = jnp.transpose(v, (2, 0, 1, 3)).astype(mxu_dtype)

    # Weight splits / casts (concat elimination for wc1, per-head wm rows).
    wq_c = wq.astype(mxu_dtype)                                # (C, C)
    wmh = wm.reshape(head, hd, C).astype(mxu_dtype)            # (head, hd, C)
    wc1a = wc1[:C, :].astype(mxu_dtype)                        # (C, 2C)
    wc1b = wc1[C:, :].astype(mxu_dtype)                        # (C, 2C)
    wc2_c = wc2.astype(mxu_dtype)                              # (2C, C)

    if tile_n is None:
        tile_n = _pick_tile(N)
    assert N % tile_n == 0
    num_tiles = N // tile_n
    scale = 1.0 / (hd ** 0.5)

    full = lambda a: pl.BlockSpec(a.shape, lambda i: (0,) * a.ndim)

    # Phase 1: gridded over N tiles, independent -> "parallel" (megacore on v7x,
    # auto double-buffered DMA pipelining of the d1 / pre_bn tiles everywhere).
    pre_bn, sums, sqs = pl.pallas_call(
        functools.partial(_attn_conv1_kernel, head, hd, scale, mxu_dtype),
        out_shape=(
            jax.ShapeDtypeStruct((B, N, 2 * C), jnp.float32),
            jax.ShapeDtypeStruct((num_tiles, 1, 2 * C), jnp.float32),
            jax.ShapeDtypeStruct((num_tiles, 1, 2 * C), jnp.float32),
        ),
        grid=(num_tiles,),
        in_specs=[
            pl.BlockSpec((B, tile_n, C), lambda i: (0, i, 0)),   # d1 tile
            full(kh), full(vh),
            full(wq_c), full(bq), full(wmh), full(bm),
            full(wc1a), full(wc1b), full(bc1),
        ],
        out_specs=(
            pl.BlockSpec((B, tile_n, 2 * C), lambda i: (0, i, 0)),
            pl.BlockSpec((1, 1, 2 * C), lambda i: (i, 0, 0)),
            pl.BlockSpec((1, 1, 2 * C), lambda i: (i, 0, 0)),
        ),
        compiler_params=pltpu.CompilerParams(
            dimension_semantics=("parallel",)),
    )(d1, kh, vh, wq_c, bq, wmh, bm, wc1a, wc1b, bc1)

    # Tiny host-side BN-stat reduction (biased variance, training mode), then
    # fold the affine so phase 2 only needs a fused multiply-add per element.
    cnt = float(B * N)
    mean = jnp.sum(sums, axis=0) / cnt                         # (1, 2C)
    var = jnp.maximum(jnp.sum(sqs, axis=0) / cnt - mean * mean, 0.0)
    bn_scale = gamma * lax.rsqrt(var + eps)                    # (1, 2C)
    bn_shift = beta - mean * bn_scale                          # (1, 2C)

    # Phase 2: tiled over N as well -> pipelined DMA, no full pre-BN VMEM slab,
    # both TensorCores usable on v7x.
    out = pl.pallas_call(
        functools.partial(_bn_conv2_kernel, mxu_dtype),
        out_shape=jax.ShapeDtypeStruct((B, N, C), jnp.float32),
        grid=(num_tiles,),
        in_specs=[
            pl.BlockSpec((B, tile_n, C), lambda i: (0, i, 0)),       # d1 tile
            pl.BlockSpec((B, tile_n, 2 * C), lambda i: (0, i, 0)),   # pre_bn tile
            full(bn_scale), full(bn_shift), full(wc2_c), full(bc2),
        ],
        out_specs=pl.BlockSpec((B, tile_n, C), lambda i: (0, i, 0)),
        compiler_params=pltpu.CompilerParams(
            dimension_semantics=("parallel",)),
    )(d1, pre_bn, bn_scale, bn_shift, wc2_c, bc2)

    return jnp.transpose(out, (0, 2, 1))                       # back to (B, C, N)


# --------------------------------------------------------------------------- #
# Parameters + pure-JAX reference
# --------------------------------------------------------------------------- #
def init_params(key, C):
    """Deterministic synthetic parameters. Conv weights stored as (C_in, C_out)."""
    ks = jax.random.split(key, 14)
    w = lambda k, s: 0.1 * jax.random.normal(k, s, jnp.float32)
    wq, bq = w(ks[0], (C, C)), w(ks[1], (1, C))
    wk, bk = w(ks[2], (C, C)), w(ks[3], (1, C))
    wv, bv = w(ks[4], (C, C)), w(ks[5], (1, C))
    wm, bm = w(ks[6], (C, C)), w(ks[7], (1, C))
    wc1, bc1 = w(ks[8], (2 * C, 2 * C)), w(ks[9], (1, 2 * C))
    gamma = 1.0 + 0.1 * jax.random.normal(ks[10], (1, 2 * C), jnp.float32)
    beta = 0.1 * jax.random.normal(ks[11], (1, 2 * C), jnp.float32)
    wc2, bc2 = w(ks[12], (2 * C, C)), w(ks[13], (1, C))
    return (wq, bq, wk, bk, wv, bv, wm, bm, wc1, bc1, gamma, beta, wc2, bc2)


def reference(desc1, desc2, params, head, weight_v=None, eps=1e-5):
    """Pure-JAX replica of the PyTorch forward (for correctness check)."""
    wq, bq, wk, bk, wvl, bv, wm, bm, wc1, bc1, gamma, beta, wc2, bc2 = params
    B, C, N = desc1.shape
    hd = C // head
    conv = lambda x, w, b: jnp.einsum('bcl,cd->bdl', x, w) + b[0][None, :, None]
    q = conv(desc1, wq, bq).reshape(B, head, hd, N)
    k = conv(desc2, wk, bk).reshape(B, head, hd, -1)
    v = conv(desc2, wvl, bv).reshape(B, head, hd, -1)
    if weight_v is not None:
        v = v * weight_v.reshape(B, 1, 1, -1)
    score = jax.nn.softmax(jnp.einsum('bhdn,bhdm->bhnm', q, k) / hd ** 0.5, axis=-1)
    add = jnp.einsum('bhnm,bhdm->bhdn', score, v).reshape(B, C, N)
    add = conv(add, wm, bm)
    y = conv(jnp.concatenate([desc1, add], axis=1), wc1, bc1)
    mean = jnp.mean(y, axis=(0, 2), keepdims=True)
    var = jnp.mean((y - mean) ** 2, axis=(0, 2), keepdims=True)
    y = (y - mean) / jnp.sqrt(var + eps)
    y = jnp.maximum(y * gamma[0][None, :, None] + beta[0][None, :, None], 0.0)
    return desc1 + conv(y, wc2, bc2)


if __name__ == "__main__":
    B, C, N, M, HEAD = 2, 32, 32, 16, 4
    key = jax.random.PRNGKey(0)
    k1, k2, k3, kp = jax.random.split(key, 4)
    desc1 = jax.random.normal(k1, (B, C, N), jnp.float32)
    desc2 = jax.random.normal(k2, (B, C, M), jnp.float32)
    weight_v = jax.random.uniform(k3, (B, M), jnp.float32)
    params = init_params(kp, C)

    ref = reference(desc1, desc2, params, HEAD, weight_v=weight_v)

    # f32 MXU operands: exercises a 2-step parallel grid + per-tile BN stats.
    out = attention_propagation(desc1, desc2, params, HEAD,
                                weight_v=weight_v, tile_n=16)
    out = jax.block_until_ready(out)
    assert out.shape == (B, C, N)
    err = jnp.max(jnp.abs(out - ref))
    assert jnp.allclose(out, ref, rtol=1e-4, atol=1e-4), f"f32 max abs err {err}"

    # bf16 MXU operands with f32 accumulation: main throughput lever on
    # v5e/v6e/v7x. Loose tolerance — bf16 operand rounding, not a bug.
    out_bf = attention_propagation(desc1, desc2, params, HEAD,
                                   weight_v=weight_v, tile_n=16,
                                   mxu_dtype=jnp.bfloat16)
    out_bf = jax.block_until_ready(out_bf)
    err_bf = jnp.max(jnp.abs(out_bf - ref))
    assert jnp.allclose(out_bf, ref, rtol=1e-1, atol=1e-1), f"bf16 max abs err {err_bf}"

    print("KERNEL_OK")
</pallas_src>

<mosaic_0001>
module attributes {stable_mosaic.version = 11 : i64} {
  func.func @_attn_conv1_kernel(%arg0: i32, %arg1: memref<2x16x32xf32, #tpu.memory_space<vmem>>, %arg2: memref<4x2x16x8xf32, #tpu.memory_space<vmem>>, %arg3: memref<4x2x16x8xf32, #tpu.memory_space<vmem>>, %arg4: memref<32x32xf32, #tpu.memory_space<vmem>>, %arg5: memref<1x32xf32, #tpu.memory_space<vmem>>, %arg6: memref<4x8x32xf32, #tpu.memory_space<vmem>>, %arg7: memref<1x32xf32, #tpu.memory_space<vmem>>, %arg8: memref<32x64xf32, #tpu.memory_space<vmem>>, %arg9: memref<32x64xf32, #tpu.memory_space<vmem>>, %arg10: memref<1x64xf32, #tpu.memory_space<vmem>>, %arg11: memref<2x16x64xf32, #tpu.memory_space<vmem>>, %arg12: memref<1x1x64xf32, #tpu.memory_space<vmem>>, %arg13: memref<1x1x64xf32, #tpu.memory_space<vmem>>) attributes {dimension_semantics = [#tpu.dimension_semantics<parallel>], iteration_bounds = array<i64: 2>, scalar_prefetch = 0 : i64, scratch_operands = 0 : i64, tpu.core_type = #tpu.core_type<tc>, window_params = [{transform_indices = @transform_0, window_bounds = array<i64: 2, 16, 32>}, {pipeline_mode = #tpu.pipeline_mode<synchronous>, transform_indices = @transform_1, window_bounds = array<i64: 4, 2, 16, 8>}, {pipeline_mode = #tpu.pipeline_mode<synchronous>, transform_indices = @transform_2, window_bounds = array<i64: 4, 2, 16, 8>}, {pipeline_mode = #tpu.pipeline_mode<synchronous>, transform_indices = @transform_3, window_bounds = array<i64: 32, 32>}, {pipeline_mode = #tpu.pipeline_mode<synchronous>, transform_indices = @transform_4, window_bounds = array<i64: 1, 32>}, {pipeline_mode = #tpu.pipeline_mode<synchronous>, transform_indices = @transform_5, window_bounds = array<i64: 4, 8, 32>}, {pipeline_mode = #tpu.pipeline_mode<synchronous>, transform_indices = @transform_6, window_bounds = array<i64: 1, 32>}, {pipeline_mode = #tpu.pipeline_mode<synchronous>, transform_indices = @transform_7, window_bounds = array<i64: 32, 64>}, {pipeline_mode = #tpu.pipeline_mode<synchronous>, transform_indices = @transform_8, window_bounds = array<i64: 32, 64>}, {pipeline_mode = #tpu.pipeline_mode<synchronous>, transform_indices = @transform_9, window_bounds = array<i64: 1, 64>}, {transform_indices = @transform_10, window_bounds = array<i64: 2, 16, 64>}, {transform_indices = @transform_11, window_bounds = array<i64: 1, 1, 64>}, {transform_indices = @transform_12, window_bounds = array<i64: 1, 1, 64>}]} {
    %c0 = arith.constant 0 : index
    %c0_0 = arith.constant 0 : index
    %c0_1 = arith.constant 0 : index
    %0 = vector.load %arg1[%c0, %c0_0, %c0_1] : memref<2x16x32xf32, #tpu.memory_space<vmem>>, vector<2x16x32xf32>
    %1 = vector.shape_cast %0 : vector<2x16x32xf32> to vector<32x32xf32>
    %c0_2 = arith.constant 0 : index
    %c0_3 = arith.constant 0 : index
    %2 = vector.load %arg4[%c0_2, %c0_3] : memref<32x32xf32, #tpu.memory_space<vmem>>, vector<32x32xf32>
    %cst = arith.constant dense<0.000000e+00> : vector<32x32xf32>
    %3 = tpu.matmul %1, %2, %cst {dimension_numbers = #tpu.dot_dimension_numbers<[1], [0], [0], [1], [0, 0, 1, 1], [], []>} : vector<32x32xf32>, vector<32x32xf32>, vector<32x32xf32> -> vector<32x32xf32>
    %c0_4 = arith.constant 0 : index
    %c0_5 = arith.constant 0 : index
    %4 = vector.load %arg5[%c0_4, %c0_5] : memref<1x32xf32, #tpu.memory_space<vmem>>, vector<1x32xf32>
    %5 = vector.broadcast %4 : vector<1x32xf32> to vector<32x32xf32>
    %6 = arith.addf %3, %5 : vector<32x32xf32>
    %cst_6 = arith.constant 0.000000e+00 : f32
    %7 = vector.broadcast %cst_6 : f32 to vector<32x32xf32>
    %8 = vector.extract_strided_slice %6 {offsets = [0, 0], sizes = [32, 8], strides = [1, 1]} : vector<32x32xf32> to vector<32x8xf32>
    %9 = vector.shape_cast %8 : vector<32x8xf32> to vector<2x16x8xf32>
    %c0_7 = arith.constant 0 : index
    %c0_8 = arith.constant 0 : index
    %c0_9 = arith.constant 0 : index
    %c0_10 = arith.constant 0 : index
    %10 = vector.load %arg2[%c0_7, %c0_8, %c0_9, %c0_10] : memref<4x2x16x8xf32, #tpu.memory_space<vmem>>, vector<1x2x16x8xf32>
    %11 = vector.shape_cast %10 : vector<1x2x16x8xf32> to vector<2x16x8xf32>
    %c0_11 = arith.constant 0 : index
    %c0_12 = arith.constant 0 : index
    %c0_13 = arith.constant 0 : index
    %c0_14 = arith.constant 0 : index
    %12 = vector.load %arg3[%c0_11, %c0_12, %c0_13, %c0_14] : memref<4x2x16x8xf32, #tpu.memory_space<vmem>>, vector<1x2x16x8xf32>
    %13 = vector.shape_cast %12 : vector<1x2x16x8xf32> to vector<2x16x8xf32>
    "tpu.trace_start"() <{level = 10 : i32, message = "bnd,bmd->bnm"}> : () -> ()
    %cst_15 = arith.constant dense<0.000000e+00> : vector<2x16x16xf32>
    %14 = tpu.matmul %9, %11, %cst_15 {dimension_numbers = #tpu.dot_dimension_numbers<[2], [2], [1], [1], [0, 0, 0, 1, 1, 1], [0], [0]>} : vector<2x16x8xf32>, vector<2x16x8xf32>, vector<2x16x16xf32> -> vector<2x16x16xf32>
    "tpu.trace_stop"() : () -> ()
    %cst_16 = arith.constant 0.353553385 : f32
    %15 = vector.broadcast %cst_16 : f32 to vector<2x16x16xf32>
    %16 = arith.mulf %14, %15 : vector<2x16x16xf32>
    %cst_17 = arith.constant dense<0xFF800000> : vector<2x16xf32>
    %17 = vector.multi_reduction <maximumf>, %16, %cst_17 [2] : vector<2x16x16xf32> to vector<2x16xf32>
    %18 = vector.shape_cast %17 : vector<2x16xf32> to vector<2x16x1xf32>
    %19 = vector.broadcast %18 : vector<2x16x1xf32> to vector<2x16x16xf32>
    %20 = arith.subf %16, %19 : vector<2x16x16xf32>
    %21 = math.exp %20 : vector<2x16x16xf32>
    %cst_18 = arith.constant dense<0.000000e+00> : vector<2x16xf32>
    %22 = vector.multi_reduction <add>, %21, %cst_18 [2] : vector<2x16x16xf32> to vector<2x16xf32>
    %23 = vector.shape_cast %22 : vector<2x16xf32> to vector<2x16x1xf32>
    "tpu.trace_start"() <{level = 10 : i32, message = "bnm,bmd->bnd"}> : () -> ()
    %cst_19 = arith.constant dense<0.000000e+00> : vector<2x16x8xf32>
    %24 = tpu.matmul %21, %13, %cst_19 {dimension_numbers = #tpu.dot_dimension_numbers<[2], [1], [1], [2], [0, 0, 0, 1, 1, 2], [0], [0]>} : vector<2x16x16xf32>, vector<2x16x8xf32>, vector<2x16x8xf32> -> vector<2x16x8xf32>
    "tpu.trace_stop"() : () -> ()
    %25 = tpu.reciprocal %23 : vector<2x16x1xf32> -> vector<2x16x1xf32>
    %26 = vector.broadcast %25 : vector<2x16x1xf32> to vector<2x16x8xf32>
    %27 = arith.mulf %24, %26 : vector<2x16x8xf32>
    %28 = vector.shape_cast %27 : vector<2x16x8xf32> to vector<32x8xf32>
    %c0_20 = arith.constant 0 : index
    %c0_21 = arith.constant 0 : index
    %c0_22 = arith.constant 0 : index
    %29 = vector.load %arg6[%c0_20, %c0_21, %c0_22] : memref<4x8x32xf32, #tpu.memory_space<vmem>>, vector<1x8x32xf32>
    %30 = vector.shape_cast %29 : vector<1x8x32xf32> to vector<8x32xf32>
    %cst_23 = arith.constant dense<0.000000e+00> : vector<32x32xf32>
    %31 = tpu.matmul %28, %30, %cst_23 {dimension_numbers = #tpu.dot_dimension_numbers<[1], [0], [0], [1], [0, 0, 1, 1], [], []>} : vector<32x8xf32>, vector<8x32xf32>, vector<32x32xf32> -> vector<32x32xf32>
    %32 = arith.addf %7, %31 : vector<32x32xf32>
    %33 = vector.extract_strided_slice %6 {offsets = [0, 8], sizes = [32, 8], strides = [1, 1]} : vector<32x32xf32> to vector<32x8xf32>
    %34 = vector.shape_cast %33 : vector<32x8xf32> to vector<2x16x8xf32>
    %c1 = arith.constant 1 : index
    %c0_24 = arith.constant 0 : index
    %c0_25 = arith.constant 0 : index
    %c0_26 = arith.constant 0 : index
    %35 = vector.load %arg2[%c1, %c0_24, %c0_25, %c0_26] : memref<4x2x16x8xf32, #tpu.memory_space<vmem>>, vector<1x2x16x8xf32>
    %36 = vector.shape_cast %35 : vector<1x2x16x8xf32> to vector<2x16x8xf32>
    %c1_27 = arith.constant 1 : index
    %c0_28 = arith.constant 0 : index
    %c0_29 = arith.constant 0 : index
    %c0_30 = arith.constant 0 : index
    %37 = vector.load %arg3[%c1_27, %c0_28, %c0_29, %c0_30] : memref<4x2x16x8xf32, #tpu.memory_space<vmem>>, vector<1x2x16x8xf32>
    %38 = vector.shape_cast %37 : vector<1x2x16x8xf32> to vector<2x16x8xf32>
    "tpu.trace_start"() <{level = 10 : i32, message = "bnd,bmd->bnm"}> : () -> ()
    %cst_31 = arith.constant dense<0.000000e+00> : vector<2x16x16xf32>
    %39 = tpu.matmul %34, %36, %cst_31 {dimension_numbers = #tpu.dot_dimension_numbers<[2], [2], [1], [1], [0, 0, 0, 1, 1, 1], [0], [0]>} : vector<2x16x8xf32>, vector<2x16x8xf32>, vector<2x16x16xf32> -> vector<2x16x16xf32>
    "tpu.trace_stop"() : () -> ()
    %cst_32 = arith.constant 0.353553385 : f32
    %40 = vector.broadcast %cst_32 : f32 to vector<2x16x16xf32>
    %41 = arith.mulf %39, %40 : vector<2x16x16xf32>
    %cst_33 = arith.constant dense<0xFF800000> : vector<2x16xf32>
    %42 = vector.multi_reduction <maximumf>, %41, %cst_33 [2] : vector<2x16x16xf32> to vector<2x16xf32>
    %43 = vector.shape_cast %42 : vector<2x16xf32> to vector<2x16x1xf32>
    %44 = vector.broadcast %43 : vector<2x16x1xf32> to vector<2x16x16xf32>
    %45 = arith.subf %41, %44 : vector<2x16x16xf32>
    %46 = math.exp %45 : vector<2x16x16xf32>
    %cst_34 = arith.constant dense<0.000000e+00> : vector<2x16xf32>
    %47 = vector.multi_reduction <add>, %46, %cst_34 [2] : vector<2x16x16xf32> to vector<2x16xf32>
    %48 = vector.shape_cast %47 : vector<2x16xf32> to vector<2x16x1xf32>
    "tpu.trace_start"() <{level = 10 : i32, message = "bnm,bmd->bnd"}> : () -> ()
    %cst_35 = arith.constant dense<0.000000e+00> : vector<2x16x8xf32>
    %49 = tpu.matmul %46, %38, %cst_35 {dimension_numbers = #tpu.dot_dimension_numbers<[2], [1], [1], [2], [0, 0, 0, 1, 1, 2], [0], [0]>} : vector<2x16x16xf32>, vector<2x16x8xf32>, vector<2x16x8xf32> -> vector<2x16x8xf32>
    "tpu.trace_stop"() : () -> ()
    %50 = tpu.reciprocal %48 : vector<2x16x1xf32> -> vector<2x16x1xf32>
    %51 = vector.broadcast %50 : vector<2x16x1xf32> to vector<2x16x8xf32>
    %52 = arith.mulf %49, %51 : vector<2x16x8xf32>
    %53 = vector.shape_cast %52 : vector<2x16x8xf32> to vector<32x8xf32>
    %c1_36 = arith.constant 1 : index
    %c0_37 = arith.constant 0 : index
    %c0_38 = arith.constant 0 : index
    %54 = vector.load %arg6[%c1_36, %c0_37, %c0_38] : memref<4x8x32xf32, #tpu.memory_space<vmem>>, vector<1x8x32xf32>
    %55 = vector.shape_cast %54 : vector<1x8x32xf32> to vector<8x32xf32>
    %cst_39 = arith.constant dense<0.000000e+00> : vector<32x32xf32>
    %56 = tpu.matmul %53, %55, %cst_39 {dimension_numbers = #tpu.dot_dimension_numbers<[1], [0], [0], [1], [0, 0, 1, 1], [], []>} : vector<32x8xf32>, vector<8x32xf32>, vector<32x32xf32> -> vector<32x32xf32>
    %57 = arith.addf %32, %56 : vector<32x32xf32>
    %58 = vector.extract_strided_slice %6 {offsets = [0, 16], sizes = [32, 8], strides = [1, 1]} : vector<32x32xf32> to vector<32x8xf32>
    %59 = vector.shape_cast %58 : vector<32x8xf32> to vector<2x16x8xf32>
    %c2 = arith.constant 2 : index
    %c0_40 = arith.constant 0 : index
    %c0_41 = arith.constant 0 : index
    %c0_42 = arith.constant 0 : index
    %60 = vector.load %arg2[%c2, %c0_40, %c0_41, %c0_42] : memref<4x2x16x8xf32, #tpu.memory_space<vmem>>, vector<1x2x16x8xf32>
    %61 = vector.shape_cast %60 : vector<1x2x16x8xf32> to vector<2x16x8xf32>
    %c2_43 = arith.constant 2 : index
    %c0_44 = arith.constant 0 : index
    %c0_45 = arith.constant 0 : index
    %c0_46 = arith.constant 0 : index
    %62 = vector.load %arg3[%c2_43, %c0_44, %c0_45, %c0_46] : memref<4x2x16x8xf32, #tpu.memory_space<vmem>>, vector<1x2x16x8xf32>
    %63 = vector.shape_cast %62 : vector<1x2x16x8xf32> to vector<2x16x8xf32>
    "tpu.trace_start"() <{level = 10 : i32, message = "bnd,bmd->bnm"}> : () -> ()
    %cst_47 = arith.constant dense<0.000000e+00> : vector<2x16x16xf32>
    %64 = tpu.matmul %59, %61, %cst_47 {dimension_numbers = #tpu.dot_dimension_numbers<[2], [2], [1], [1], [0, 0, 0, 1, 1, 1], [0], [0]>} : vector<2x16x8xf32>, vector<2x16x8xf32>, vector<2x16x16xf32> -> vector<2x16x16xf32>
    "tpu.trace_stop"() : () -> ()
    %cst_48 = arith.constant 0.353553385 : f32
    %65 = vector.broadcast %cst_48 : f32 to vector<2x16x16xf32>
    %66 = arith.mulf %64, %65 : vector<2x16x16xf32>
    %cst_49 = arith.constant dense<0xFF800000> : vector<2x16xf32>
    %67 = vector.multi_reduction <maximumf>, %66, %cst_49 [2] : vector<2x16x16xf32> to vector<2x16xf32>
    %68 = vector.shape_cast %67 : vector<2x16xf32> to vector<2x16x1xf32>
    %69 = vector.broadcast %68 : vector<2x16x1xf32> to vector<2x16x16xf32>
    %70 = arith.subf %66, %69 : vector<2x16x16xf32>
    %71 = math.exp %70 : vector<2x16x16xf32>
    %cst_50 = arith.constant dense<0.000000e+00> : vector<2x16xf32>
    %72 = vector.multi_reduction <add>, %71, %cst_50 [2] : vector<2x16x16xf32> to vector<2x16xf32>
    %73 = vector.shape_cast %72 : vector<2x16xf32> to vector<2x16x1xf32>
    "tpu.trace_start"() <{level = 10 : i32, message = "bnm,bmd->bnd"}> : () -> ()
    %cst_51 = arith.constant dense<0.000000e+00> : vector<2x16x8xf32>
    %74 = tpu.matmul %71, %63, %cst_51 {dimension_numbers = #tpu.dot_dimension_numbers<[2], [1], [1], [2], [0, 0, 0, 1, 1, 2], [0], [0]>} : vector<2x16x16xf32>, vector<2x16x8xf32>, vector<2x16x8xf32> -> vector<2x16x8xf32>
    "tpu.trace_stop"() : () -> ()
    %75 = tpu.reciprocal %73 : vector<2x16x1xf32> -> vector<2x16x1xf32>
    %76 = vector.broadcast %75 : vector<2x16x1xf32> to vector<2x16x8xf32>
    %77 = arith.mulf %74, %76 : vector<2x16x8xf32>
    %78 = vector.shape_cast %77 : vector<2x16x8xf32> to vector<32x8xf32>
    %c2_52 = arith.constant 2 : index
    %c0_53 = arith.constant 0 : index
    %c0_54 = arith.constant 0 : index
    %79 = vector.load %arg6[%c2_52, %c0_53, %c0_54] : memref<4x8x32xf32, #tpu.memory_space<vmem>>, vector<1x8x32xf32>
    %80 = vector.shape_cast %79 : vector<1x8x32xf32> to vector<8x32xf32>
    %cst_55 = arith.constant dense<0.000000e+00> : vector<32x32xf32>
    %81 = tpu.matmul %78, %80, %cst_55 {dimension_numbers = #tpu.dot_dimension_numbers<[1], [0], [0], [1], [0, 0, 1, 1], [], []>} : vector<32x8xf32>, vector<8x32xf32>, vector<32x32xf32> -> vector<32x32xf32>
    %82 = arith.addf %57, %81 : vector<32x32xf32>
    %83 = vector.extract_strided_slice %6 {offsets = [0, 24], sizes = [32, 8], strides = [1, 1]} : vector<32x32xf32> to vector<32x8xf32>
    %84 = vector.shape_cast %83 : vector<32x8xf32> to vector<2x16x8xf32>
    %c3 = arith.constant 3 : index
    %c0_56 = arith.constant 0 : index
    %c0_57 = arith.constant 0 : index
    %c0_58 = arith.constant 0 : index
    %85 = vector.load %arg2[%c3, %c0_56, %c0_57, %c0_58] : memref<4x2x16x8xf32, #tpu.memory_space<vmem>>, vector<1x2x16x8xf32>
    %86 = vector.shape_cast %85 : vector<1x2x16x8xf32> to vector<2x16x8xf32>
    %c3_59 = arith.constant 3 : index
    %c0_60 = arith.constant 0 : index
    %c0_61 = arith.constant 0 : index
    %c0_62 = arith.constant 0 : index
    %87 = vector.load %arg3[%c3_59, %c0_60, %c0_61, %c0_62] : memref<4x2x16x8xf32, #tpu.memory_space<vmem>>, vector<1x2x16x8xf32>
    %88 = vector.shape_cast %87 : vector<1x2x16x8xf32> to vector<2x16x8xf32>
    "tpu.trace_start"() <{level = 10 : i32, message = "bnd,bmd->bnm"}> : () -> ()
    %cst_63 = arith.constant dense<0.000000e+00> : vector<2x16x16xf32>
    %89 = tpu.matmul %84, %86, %cst_63 {dimension_numbers = #tpu.dot_dimension_numbers<[2], [2], [1], [1], [0, 0, 0, 1, 1, 1], [0], [0]>} : vector<2x16x8xf32>, vector<2x16x8xf32>, vector<2x16x16xf32> -> vector<2x16x16xf32>
    "tpu.trace_stop"() : () -> ()
    %cst_64 = arith.constant 0.353553385 : f32
    %90 = vector.broadcast %cst_64 : f32 to vector<2x16x16xf32>
    %91 = arith.mulf %89, %90 : vector<2x16x16xf32>
    %cst_65 = arith.constant dense<0xFF800000> : vector<2x16xf32>
    %92 = vector.multi_reduction <maximumf>, %91, %cst_65 [2] : vector<2x16x16xf32> to vector<2x16xf32>
    %93 = vector.shape_cast %92 : vector<2x16xf32> to vector<2x16x1xf32>
    %94 = vector.broadcast %93 : vector<2x16x1xf32> to vector<2x16x16xf32>
    %95 = arith.subf %91, %94 : vector<2x16x16xf32>
    %96 = math.exp %95 : vector<2x16x16xf32>
    %cst_66 = arith.constant dense<0.000000e+00> : vector<2x16xf32>
    %97 = vector.multi_reduction <add>, %96, %cst_66 [2] : vector<2x16x16xf32> to vector<2x16xf32>
    %98 = vector.shape_cast %97 : vector<2x16xf32> to vector<2x16x1xf32>
    "tpu.trace_start"() <{level = 10 : i32, message = "bnm,bmd->bnd"}> : () -> ()
    %cst_67 = arith.constant dense<0.000000e+00> : vector<2x16x8xf32>
    %99 = tpu.matmul %96, %88, %cst_67 {dimension_numbers = #tpu.dot_dimension_numbers<[2], [1], [1], [2], [0, 0, 0, 1, 1, 2], [0], [0]>} : vector<2x16x16xf32>, vector<2x16x8xf32>, vector<2x16x8xf32> -> vector<2x16x8xf32>
    "tpu.trace_stop"() : () -> ()
    %100 = tpu.reciprocal %98 : vector<2x16x1xf32> -> vector<2x16x1xf32>
    %101 = vector.broadcast %100 : vector<2x16x1xf32> to vector<2x16x8xf32>
    %102 = arith.mulf %99, %101 : vector<2x16x8xf32>
    %103 = vector.shape_cast %102 : vector<2x16x8xf32> to vector<32x8xf32>
    %c3_68 = arith.constant 3 : index
    %c0_69 = arith.constant 0 : index
    %c0_70 = arith.constant 0 : index
    %104 = vector.load %arg6[%c3_68, %c0_69, %c0_70] : memref<4x8x32xf32, #tpu.memory_space<vmem>>, vector<1x8x32xf32>
    %105 = vector.shape_cast %104 : vector<1x8x32xf32> to vector<8x32xf32>
    %cst_71 = arith.constant dense<0.000000e+00> : vector<32x32xf32>
    %106 = tpu.matmul %103, %105, %cst_71 {dimension_numbers = #tpu.dot_dimension_numbers<[1], [0], [0], [1], [0, 0, 1, 1], [], []>} : vector<32x8xf32>, vector<8x32xf32>, vector<32x32xf32> -> vector<32x32xf32>
    %107 = arith.addf %82, %106 : vector<32x32xf32>
    %c0_72 = arith.constant 0 : index
    %c0_73 = arith.constant 0 : index
    %108 = vector.load %arg7[%c0_72, %c0_73] : memref<1x32xf32, #tpu.memory_space<vmem>>, vector<1x32xf32>
    %109 = vector.broadcast %108 : vector<1x32xf32> to vector<32x32xf32>
    %110 = arith.addf %107, %109 : vector<32x32xf32>
    %c0_74 = arith.constant 0 : index
    %c0_75 = arith.constant 0 : index
    %111 = vector.load %arg8[%c0_74, %c0_75] : memref<32x64xf32, #tpu.memory_space<vmem>>, vector<32x64xf32>
    %cst_76 = arith.constant dense<0.000000e+00> : vector<32x64xf32>
    %112 = tpu.matmul %1, %111, %cst_76 {dimension_numbers = #tpu.dot_dimension_numbers<[1], [0], [0], [1], [0, 0, 1, 1], [], []>} : vector<32x32xf32>, vector<32x64xf32>, vector<32x64xf32> -> vector<32x64xf32>
    %c0_77 = arith.constant 0 : index
    %c0_78 = arith.constant 0 : index
    %113 = vector.load %arg9[%c0_77, %c0_78] : memref<32x64xf32, #tpu.memory_space<vmem>>, vector<32x64xf32>
    %cst_79 = arith.constant dense<0.000000e+00> : vector<32x64xf32>
    %114 = tpu.matmul %110, %113, %cst_79 {dimension_numbers = #tpu.dot_dimension_numbers<[1], [0], [0], [1], [0, 0, 1, 1], [], []>} : vector<32x32xf32>, vector<32x64xf32>, vector<32x64xf32> -> vector<32x64xf32>
    %115 = arith.addf %112, %114 : vector<32x64xf32>
    %c0_80 = arith.constant 0 : index
    %c0_81 = arith.constant 0 : index
    %116 = vector.load %arg10[%c0_80, %c0_81] : memref<1x64xf32, #tpu.memory_space<vmem>>, vector<1x64xf32>
    %117 = vector.broadcast %116 : vector<1x64xf32> to vector<32x64xf32>
    %118 = arith.addf %115, %117 : vector<32x64xf32>
    %119 = vector.shape_cast %118 : vector<32x64xf32> to vector<2x16x64xf32>
    %c0_82 = arith.constant 0 : index
    %c0_83 = arith.constant 0 : index
    %c0_84 = arith.constant 0 : index
    %120 = vector.load %arg11[%c0_82, %c0_83, %c0_84] : memref<2x16x64xf32, #tpu.memory_space<vmem>>, vector<2x16x64xf32>
    tpu.vector_store %arg11[%c0_82, %c0_83, %c0_84], %119 {strides = array<i32>} : memref<2x16x64xf32, #tpu.memory_space<vmem>>, vector<2x16x64xf32>,
    %cst_85 = arith.constant dense<0.000000e+00> : vector<64xf32>
    %121 = vector.multi_reduction <add>, %118, %cst_85 [0] : vector<32x64xf32> to vector<64xf32>
    %122 = vector.shape_cast %121 : vector<64xf32> to vector<1x1x64xf32>
    %c0_86 = arith.constant 0 : index
    %c0_87 = arith.constant 0 : index
    %c0_88 = arith.constant 0 : index
    %123 = vector.load %arg12[%c0_86, %c0_87, %c0_88] : memref<1x1x64xf32, #tpu.memory_space<vmem>>, vector<1x1x64xf32>
    tpu.vector_store %arg12[%c0_86, %c0_87, %c0_88], %122 {strides = array<i32>} : memref<1x1x64xf32, #tpu.memory_space<vmem>>, vector<1x1x64xf32>,
    %124 = arith.mulf %118, %118 : vector<32x64xf32>
    %cst_89 = arith.constant dense<0.000000e+00> : vector<64xf32>
    %125 = vector.multi_reduction <add>, %124, %cst_89 [0] : vector<32x64xf32> to vector<64xf32>
    %126 = vector.shape_cast %125 : vector<64xf32> to vector<1x1x64xf32>
    %c0_90 = arith.constant 0 : index
    %c0_91 = arith.constant 0 : index
    %c0_92 = arith.constant 0 : index
    %127 = vector.load %arg13[%c0_90, %c0_91, %c0_92] : memref<1x1x64xf32, #tpu.memory_space<vmem>>, vector<1x1x64xf32>
    tpu.vector_store %arg13[%c0_90, %c0_91, %c0_92], %126 {strides = array<i32>} : memref<1x1x64xf32, #tpu.memory_space<vmem>>, vector<1x1x64xf32>,
    return
  }
  func.func @transform_0(%arg0: i32) -> (i32, i32, i32) {
    %c0_i32 = arith.constant 0 : i32
    %c0_i32_0 = arith.constant 0 : i32
    %c0_i32_1 = arith.constant 0 : i32
    return %c0_i32, %arg0, %c0_i32_0 : i32, i32, i32
  }
  func.func @transform_1(%arg0: i32) -> (i32, i32, i32, i32) {
    %c0_i32 = arith.constant 0 : i32
    %c0_i32_0 = arith.constant 0 : i32
    %c0_i32_1 = arith.constant 0 : i32
    %c0_i32_2 = arith.constant 0 : i32
    %c0_i32_3 = arith.constant 0 : i32
    return %c0_i32, %c0_i32_0, %c0_i32_1, %c0_i32_2 : i32, i32, i32, i32
  }
  func.func @transform_2(%arg0: i32) -> (i32, i32, i32, i32) {
    %c0_i32 = arith.constant 0 : i32
    %c0_i32_0 = arith.constant 0 : i32
    %c0_i32_1 = arith.constant 0 : i32
    %c0_i32_2 = arith.constant 0 : i32
    %c0_i32_3 = arith.constant 0 : i32
    return %c0_i32, %c0_i32_0, %c0_i32_1, %c0_i32_2 : i32, i32, i32, i32
  }
  func.func @transform_3(%arg0: i32) -> (i32, i32) {
    %c0_i32 = arith.constant 0 : i32
    %c0_i32_0 = arith.constant 0 : i32
    %c0_i32_1 = arith.constant 0 : i32
    return %c0_i32, %c0_i32_0 : i32, i32
  }
  func.func @transform_4(%arg0: i32) -> (i32, i32) {
    %c0_i32 = arith.constant 0 : i32
    %c0_i32_0 = arith.constant 0 : i32
    %c0_i32_1 = arith.constant 0 : i32
    return %c0_i32, %c0_i32_0 : i32, i32
  }
  func.func @transform_5(%arg0: i32) -> (i32, i32, i32) {
    %c0_i32 = arith.constant 0 : i32
    %c0_i32_0 = arith.constant 0 : i32
    %c0_i32_1 = arith.constant 0 : i32
    %c0_i32_2 = arith.constant 0 : i32
    return %c0_i32, %c0_i32_0, %c0_i32_1 : i32, i32, i32
  }
  func.func @transform_6(%arg0: i32) -> (i32, i32) {
    %c0_i32 = arith.constant 0 : i32
    %c0_i32_0 = arith.constant 0 : i32
    %c0_i32_1 = arith.constant 0 : i32
    return %c0_i32, %c0_i32_0 : i32, i32
  }
  func.func @transform_7(%arg0: i32) -> (i32, i32) {
    %c0_i32 = arith.constant 0 : i32
    %c0_i32_0 = arith.constant 0 : i32
    %c0_i32_1 = arith.constant 0 : i32
    return %c0_i32, %c0_i32_0 : i32, i32
  }
  func.func @transform_8(%arg0: i32) -> (i32, i32) {
    %c0_i32 = arith.constant 0 : i32
    %c0_i32_0 = arith.constant 0 : i32
    %c0_i32_1 = arith.constant 0 : i32
    return %c0_i32, %c0_i32_0 : i32, i32
  }
  func.func @transform_9(%arg0: i32) -> (i32, i32) {
    %c0_i32 = arith.constant 0 : i32
    %c0_i32_0 = arith.constant 0 : i32
    %c0_i32_1 = arith.constant 0 : i32
    return %c0_i32, %c0_i32_0 : i32, i32
  }
  func.func @transform_10(%arg0: i32) -> (i32, i32, i32) {
    %c0_i32 = arith.constant 0 : i32
    %c0_i32_0 = arith.constant 0 : i32
    %c0_i32_1 = arith.constant 0 : i32
    return %c0_i32, %arg0, %c0_i32_0 : i32, i32, i32
  }
  func.func @transform_11(%arg0: i32) -> (i32, i32, i32) {
    %c0_i32 = arith.constant 0 : i32
    %c0_i32_0 = arith.constant 0 : i32
    %c0_i32_1 = arith.constant 0 : i32
    return %arg0, %c0_i32, %c0_i32_0 : i32, i32, i32
  }
  func.func @transform_12(%arg0: i32) -> (i32, i32, i32) {
    %c0_i32 = arith.constant 0 : i32
    %c0_i32_0 = arith.constant 0 : i32
    %c0_i32_1 = arith.constant 0 : i32
    return %arg0, %c0_i32, %c0_i32_0 : i32, i32, i32
  }
}

</mosaic_0001>

<llo_original>
// kernel: tpu_custom_call.1
$region0: #{tpu_custom_call.1}
  #allocation0 [shape = 'u32[]', space=smem, size = 0x4, offset = 0x4, fixed_abs, tag = 'smem constant byte address 0x4 - core index']
  #allocation1 [shape = 'u32[144,128]{1,0:T(1,128)}', space=vmem, size = 0x12000, scoped, tag = 'internal scratch']
  #allocation8 [shape = 's32[]', space=sflag, size = 0x4, offset = 0, fixed_abs, tag = 'sflag constant byte address 0x0 - dummy sync flag']
  %s0 = inlined_call_operand.vmem [shape: f32[2,32,32], index: 0, kind: input, shape index: {}]
  %s1 = inlined_call_operand.vmem [shape: f32[4,2,16,8], index: 1, kind: input, shape index: {}]
  %s2 = inlined_call_operand.vmem [shape: f32[4,2,16,8], index: 2, kind: input, shape index: {}]
  %s3 = inlined_call_operand.vmem [shape: f32[32,32], index: 3, kind: input, shape index: {}]
  %s4 = inlined_call_operand.vmem [shape: f32[1,32], index: 4, kind: input, shape index: {}]
  %s5 = inlined_call_operand.vmem [shape: f32[4,8,32], index: 5, kind: input, shape index: {}]
  %s6 = inlined_call_operand.vmem [shape: f32[1,32], index: 6, kind: input, shape index: {}]
  %s7 = inlined_call_operand.vmem [shape: f32[32,64], index: 7, kind: input, shape index: {}]
  %s8 = inlined_call_operand.vmem [shape: f32[32,64], index: 8, kind: input, shape index: {}]
  %s9 = inlined_call_operand.vmem [shape: f32[1,64], index: 9, kind: input, shape index: {}]
  %s10 = inlined_call_operand.hbm [shape: f32[2,32,64], index: 10, kind: output, shape index: {0}]
  %s11 = inlined_call_operand.hbm [shape: f32[2,1,64], index: 11, kind: output, shape index: {1}]
  %s12 = inlined_call_operand.hbm [shape: f32[2,1,64], index: 12, kind: output, shape index: {2}]
  %13 = xla_tuple %s10, %s11, %s12
  %s14 = sld [smem:[#allocation0]]
  $region127: #{tpu_custom_call.1} parent=0
    _
  %s16 = ssub.s32 1, %s14
  %s17 = scalar_select 0, %s16, %s14
  $region1: #{tpu_custom_call.1} parent=0
    #allocation2 [shape = 'u8[32768]{0}', space=vmem, size = 0x8000, scoped, tag = 'input window, operand 0']
    #allocation3 [shape = 'u8[32768]{0}', space=vmem, size = 0x8000, scoped, tag = 'output window, operand 0']
    #allocation4 [shape = 's32[2]{0}', space=sflag, size = 0x8, scoped, tag = 'scoped memory for tpu_custom_call.1']
    #allocation5 [shape = 'u8[1024]{0}', space=vmem, size = 0x400, scoped, tag = 'output window, operand 1']
    #allocation6 [shape = 's32[2]{0}', space=sflag, size = 0x8, scoped, tag = 'scoped memory for tpu_custom_call.1']
    #allocation7 [shape = 'u8[1024]{0}', space=vmem, size = 0x400, scoped, tag = 'output window, operand 2']
    %18 = vsyncpa [#allocation4], 0
    %s19 = scalar_lea.sflag [#allocation4], 1
    %20 = vsyncpa %s19, 0
    %21 = vsyncpa [#allocation6], 0
    %s22 = scalar_lea.sflag [#allocation6], 1
    %23 = vsyncpa %s22, 0
    loop: start=0, step=1, limit=4
    $region2: #{tpu_custom_call.1} parent=1 // loop_pre_header
      _
    $region3: #{tpu_custom_call.1} parent=1 // loop_header
      %s25 = sphi 0, %s29
      %p26 = scmp.ge.s32.totalorder %s25, 4
      %s35 = sphi 0, %s37
      %s38 = sphi 0, %s35
      %s39 = sphi 0, %s38
      %s55 = sphi 0, %s39
      %s59 = sphi 0, %s59
      %s61 = sphi 0, %s59
      %s62 = sphi 0, %s61
      %s76 = sphi 0, %s62
      %s80 = sphi 0, %s80
      %s82 = sphi 0, %s80
      %s83 = sphi 0, %s82
      %s97 = sphi 0, %s83
      %s101 = sphi 0, %s101
      %s103 = sphi 0, %s101
      %s104 = sphi 0, %s103
      %s118 = sphi 0, %s104
      %s122 = sphi 0, %s122
      %s124 = sphi 0, %s122
      %s125 = sphi 0, %s124
      %s139 = sphi 0, %s125
      %s143 = sphi 0, %s143
      %s145 = sphi 0, %s143
      %s146 = sphi 0, %s145
      %s160 = sphi 0, %s146
      %s164 = sphi 0, %s164
      %s166 = sphi 0, %s164
      %s167 = sphi 0, %s166
      %s181 = sphi 0, %s167
      %s185 = sphi 0, %s185
      %s187 = sphi 0, %s185
      %s188 = sphi 0, %s187
      %s202 = sphi 0, %s188
      %s206 = sphi 0, %s206
      %s208 = sphi 0, %s206
      %s209 = sphi 0, %s208
      %s223 = sphi 0, %s209
      %s227 = sphi 0, %s227
      %s229 = sphi 0, %s227
      %s230 = sphi 0, %s229
      %s244 = sphi 0, %s230
      %s250 = sphi 0, %s252
      %s253 = sphi 0, %s250
      %s254 = sphi 0, %s253
      %s270 = sphi 0, %s254
      %s276 = sphi 0, %s278
      %s279 = sphi 0, %s276
      %s280 = sphi 0, %s279
      %s296 = sphi 0, %s280
      %s302 = sphi 0, %s304
      %s305 = sphi 0, %s302
      %s306 = sphi 0, %s305
      %s322 = sphi 0, %s306
    $region4: #{tpu_custom_call.1} parent=1 // loop_header_branch
      %28 = sbr.rel (%p26) target = $region8
    $region5: #{tpu_custom_call.1} parent=1 // loop_body
      %s30 = ssub.s32 %s25, 1
      %s31 = ssub.s32 %s25, 2
      %s32 = sadd.s32 %s25, 1
      %s33 = ssub.s32 %s25, %s32
      %p34 = scmp.eq.s32.totalorder %s33, 0
      %s36 = sadd.s32 %s35, 1
      %s37 = scalar_select %p34, %s35, %s36
      %p40 = pneg %p34
      %p41 = scmp.eq.s32.totalorder %s25, 1
      %p42 = por %p40, %p41
      %p43 = scmp.ne.s32.totalorder %s35, %s38
      %p44 = scmp.eq.s32.totalorder %s25, 0
      %p45 = por %p43, %p44
      %p46 = scmp.ne.s32.totalorder %s35, %s38
      %p47 = scmp.eq.s32.totalorder %s30, 1
      %p48 = por %p46, %p47
      %p49 = scmp.ne.s32.totalorder %s38, %s39
      %p50 = scmp.eq.s32.totalorder %s30, 0
      %p51 = por %p49, %p50
      %p52 = scmp.ne.s32.totalorder %s38, %s39
      %p53 = scmp.eq.s32.totalorder %s31, 1
      %p54 = por %p52, %p53
      %p56 = scmp.ne.s32.totalorder %s39, %s55
      %p57 = scmp.eq.s32.totalorder %s31, 0
      %p58 = por %p56, %p57
      %s60 = sadd.s32 %s59, 1
      %p63 = scmp.eq.s32.totalorder %s25, 1
      %p64 = scmp.ne.s32.totalorder %s59, %s61
      %p65 = scmp.eq.s32.totalorder %s25, 0
      %p66 = por %p64, %p65
      %p67 = scmp.ne.s32.totalorder %s59, %s61
      %p68 = scmp.eq.s32.totalorder %s30, 1
      %p69 = por %p67, %p68
      %p70 = scmp.ne.s32.totalorder %s61, %s62
      %p71 = scmp.eq.s32.totalorder %s30, 0
      %p72 = por %p70, %p71
      %p73 = scmp.ne.s32.totalorder %s61, %s62
      %p74 = scmp.eq.s32.totalorder %s31, 1
      %p75 = por %p73, %p74
      %p77 = scmp.ne.s32.totalorder %s62, %s76
      %p78 = scmp.eq.s32.totalorder %s31, 0
      %p79 = por %p77, %p78
      %s81 = sadd.s32 %s80, 1
      %p84 = scmp.eq.s32.totalorder %s25, 1
      %p85 = scmp.ne.s32.totalorder %s80, %s82
      %p86 = scmp.eq.s32.totalorder %s25, 0
      %p87 = por %p85, %p86
      %p88 = scmp.ne.s32.totalorder %s80, %s82
      %p89 = scmp.eq.s32.totalorder %s30, 1
      %p90 = por %p88, %p89
      %p91 = scmp.ne.s32.totalorder %s82, %s83
      %p92 = scmp.eq.s32.totalorder %s30, 0
      %p93 = por %p91, %p92
      %p94 = scmp.ne.s32.totalorder %s82, %s83
      %p95 = scmp.eq.s32.totalorder %s31, 1
      %p96 = por %p94, %p95
      %p98 = scmp.ne.s32.totalorder %s83, %s97
      %p99 = scmp.eq.s32.totalorder %s31, 0
      %p100 = por %p98, %p99
      %s102 = sadd.s32 %s101, 1
      %p105 = scmp.eq.s32.totalorder %s25, 1
      %p106 = scmp.ne.s32.totalorder %s101, %s103
      %p107 = scmp.eq.s32.totalorder %s25, 0
      %p108 = por %p106, %p107
      %p109 = scmp.ne.s32.totalorder %s101, %s103
      %p110 = scmp.eq.s32.totalorder %s30, 1
      %p111 = por %p109, %p110
      %p112 = scmp.ne.s32.totalorder %s103, %s104
      %p113 = scmp.eq.s32.totalorder %s30, 0
      %p114 = por %p112, %p113
      %p115 = scmp.ne.s32.totalorder %s103, %s104
      %p116 = scmp.eq.s32.totalorder %s31, 1
      %p117 = por %p115, %p116
      %p119 = scmp.ne.s32.totalorder %s104, %s118
      %p120 = scmp.eq.s32.totalorder %s31, 0
      %p121 = por %p119, %p120
      %s123 = sadd.s32 %s122, 1
      %p126 = scmp.eq.s32.totalorder %s25, 1
      %p127 = scmp.ne.s32.totalorder %s122, %s124
      %p128 = scmp.eq.s32.totalorder %s25, 0
      %p129 = por %p127, %p128
      %p130 = scmp.ne.s32.totalorder %s122, %s124
      %p131 = scmp.eq.s32.totalorder %s30, 1
      %p132 = por %p130, %p131
      %p133 = scmp.ne.s32.totalorder %s124, %s125
      %p134 = scmp.eq.s32.totalorder %s30, 0
      %p135 = por %p133, %p134
      %p136 = scmp.ne.s32.totalorder %s124, %s125
      %p137 = scmp.eq.s32.totalorder %s31, 1
      %p138 = por %p136, %p137
      %p140 = scmp.ne.s32.totalorder %s125, %s139
      %p141 = scmp.eq.s32.totalorder %s31, 0
      %p142 = por %p140, %p141
      %s144 = sadd.s32 %s143, 1
      %p147 = scmp.eq.s32.totalorder %s25, 1
      %p148 = scmp.ne.s32.totalorder %s143, %s145
      %p149 = scmp.eq.s32.totalorder %s25, 0
      %p150 = por %p148, %p149
      %p151 = scmp.ne.s32.totalorder %s143, %s145
      %p152 = scmp.eq.s32.totalorder %s30, 1
      %p153 = por %p151, %p152
      %p154 = scmp.ne.s32.totalorder %s145, %s146
      %p155 = scmp.eq.s32.totalorder %s30, 0
      %p156 = por %p154, %p155
      %p157 = scmp.ne.s32.totalorder %s145, %s146
      %p158 = scmp.eq.s32.totalorder %s31, 1
      %p159 = por %p157, %p158
      %p161 = scmp.ne.s32.totalorder %s146, %s160
      %p162 = scmp.eq.s32.totalorder %s31, 0
      %p163 = por %p161, %p162
      %s165 = sadd.s32 %s164, 1
      %p168 = scmp.eq.s32.totalorder %s25, 1
      %p169 = scmp.ne.s32.totalorder %s164, %s166
      %p170 = scmp.eq.s32.totalorder %s25, 0
      %p171 = por %p169, %p170
      %p172 = scmp.ne.s32.totalorder %s164, %s166
      %p173 = scmp.eq.s32.totalorder %s30, 1
      %p174 = por %p172, %p173
      %p175 = scmp.ne.s32.totalorder %s166, %s167
      %p176 = scmp.eq.s32.totalorder %s30, 0
      %p177 = por %p175, %p176
      %p178 = scmp.ne.s32.totalorder %s166, %s167
      %p179 = scmp.eq.s32.totalorder %s31, 1
      %p180 = por %p178, %p179
      %p182 = scmp.ne.s32.totalorder %s167, %s181
      %p183 = scmp.eq.s32.totalorder %s31, 0
      %p184 = por %p182, %p183
      %s186 = sadd.s32 %s185, 1
      %p189 = scmp.eq.s32.totalorder %s25, 1
      %p190 = scmp.ne.s32.totalorder %s185, %s187
      %p191 = scmp.eq.s32.totalorder %s25, 0
      %p192 = por %p190, %p191
      %p193 = scmp.ne.s32.totalorder %s185, %s187
      %p194 = scmp.eq.s32.totalorder %s30, 1
      %p195 = por %p193, %p194
      %p196 = scmp.ne.s32.totalorder %s187, %s188
      %p197 = scmp.eq.s32.totalorder %s30, 0
      %p198 = por %p196, %p197
      %p199 = scmp.ne.s32.totalorder %s187, %s188
      %p200 = scmp.eq.s32.totalorder %s31, 1
      %p201 = por %p199, %p200
      %p203 = scmp.ne.s32.totalorder %s188, %s202
      %p204 = scmp.eq.s32.totalorder %s31, 0
      %p205 = por %p203, %p204
      %s207 = sadd.s32 %s206, 1
      %p210 = scmp.eq.s32.totalorder %s25, 1
      %p211 = scmp.ne.s32.totalorder %s206, %s208
      %p212 = scmp.eq.s32.totalorder %s25, 0
      %p213 = por %p211, %p212
      %p214 = scmp.ne.s32.totalorder %s206, %s208
      %p215 = scmp.eq.s32.totalorder %s30, 1
      %p216 = por %p214, %p215
      %p217 = scmp.ne.s32.totalorder %s208, %s209
      %p218 = scmp.eq.s32.totalorder %s30, 0
      %p219 = por %p217, %p218
      %p220 = scmp.ne.s32.totalorder %s208, %s209
      %p221 = scmp.eq.s32.totalorder %s31, 1
      %p222 = por %p220, %p221
      %p224 = scmp.ne.s32.totalorder %s209, %s223
      %p225 = scmp.eq.s32.totalorder %s31, 0
      %p226 = por %p224, %p225
      %s228 = sadd.s32 %s227, 1
      %p231 = scmp.eq.s32.totalorder %s25, 1
      %p232 = scmp.ne.s32.totalorder %s227, %s229
      %p233 = scmp.eq.s32.totalorder %s25, 0
      %p234 = por %p232, %p233
      %p235 = scmp.ne.s32.totalorder %s227, %s229
      %p236 = scmp.eq.s32.totalorder %s30, 1
      %p237 = por %p235, %p236
      %p238 = scmp.ne.s32.totalorder %s229, %s230
      %p239 = scmp.eq.s32.totalorder %s30, 0
      %p240 = por %p238, %p239
      %p241 = scmp.ne.s32.totalorder %s229, %s230
      %p242 = scmp.eq.s32.totalorder %s31, 1
      %p243 = por %p241, %p242
      %p245 = scmp.ne.s32.totalorder %s230, %s244
      %p246 = scmp.eq.s32.totalorder %s31, 0
      %p247 = por %p245, %p246
      %s248 = ssub.s32 %s25, %s32
      %p249 = scmp.eq.s32.totalorder %s248, 0
      %s251 = sadd.s32 %s250, 1
      %s252 = scalar_select %p249, %s250, %s251
      %p255 = pneg %p249
      %p256 = scmp.eq.s32.totalorder %s25, 1
      %p257 = por %p255, %p256
      %p258 = scmp.ne.s32.totalorder %s250, %s253
      %p259 = scmp.eq.s32.totalorder %s25, 0
      %p260 = por %p258, %p259
      %p261 = scmp.ne.s32.totalorder %s250, %s253
      %p262 = scmp.eq.s32.totalorder %s30, 1
      %p263 = por %p261, %p262
      %p264 = scmp.ne.s32.totalorder %s253, %s254
      %p265 = scmp.eq.s32.totalorder %s30, 0
      %p266 = por %p264, %p265
      %p267 = scmp.ne.s32.totalorder %s253, %s254
      %p268 = scmp.eq.s32.totalorder %s31, 1
      %p269 = por %p267, %p268
      %p271 = scmp.ne.s32.totalorder %s254, %s270
      %p272 = scmp.eq.s32.totalorder %s31, 0
      %p273 = por %p271, %p272
      %s274 = ssub.s32 %s25, %s32
      %p275 = scmp.eq.s32.totalorder %s274, 0
      %s277 = sadd.s32 %s276, 1
      %s278 = scalar_select %p275, %s276, %s277
      %p281 = pneg %p275
      %p282 = scmp.eq.s32.totalorder %s25, 1
      %p283 = por %p281, %p282
      %p284 = scmp.ne.s32.totalorder %s276, %s279
      %p285 = scmp.eq.s32.totalorder %s25, 0
      %p286 = por %p284, %p285
      %p287 = scmp.ne.s32.totalorder %s276, %s279
      %p288 = scmp.eq.s32.totalorder %s30, 1
      %p289 = por %p287, %p288
      %p290 = scmp.ne.s32.totalorder %s279, %s280
      %p291 = scmp.eq.s32.totalorder %s30, 0
      %p292 = por %p290, %p291
      %p293 = scmp.ne.s32.totalorder %s279, %s280
      %p294 = scmp.eq.s32.totalorder %s31, 1
      %p295 = por %p293, %p294
      %p297 = scmp.ne.s32.totalorder %s280, %s296
      %p298 = scmp.eq.s32.totalorder %s31, 0
      %p299 = por %p297, %p298
      %s300 = ssub.s32 %s25, %s32
      %p301 = scmp.eq.s32.totalorder %s300, 0
      %s303 = sadd.s32 %s302, 1
      %s304 = scalar_select %p301, %s302, %s303
      %p307 = pneg %p301
      %p308 = scmp.eq.s32.totalorder %s25, 1
      %p309 = por %p307, %p308
      %p310 = scmp.ne.s32.totalorder %s302, %s305
      %p311 = scmp.eq.s32.totalorder %s25, 0
      %p312 = por %p310, %p311
      %p313 = scmp.ne.s32.totalorder %s302, %s305
      %p314 = scmp.eq.s32.totalorder %s30, 1
      %p315 = por %p313, %p314
      %p316 = scmp.ne.s32.totalorder %s305, %s306
      %p317 = scmp.eq.s32.totalorder %s30, 0
      %p318 = por %p316, %p317
      %p319 = scmp.ne.s32.totalorder %s305, %s306
      %p320 = scmp.eq.s32.totalorder %s31, 1
      %p321 = por %p319, %p320
      %p323 = scmp.ne.s32.totalorder %s306, %s322
      %p324 = scmp.eq.s32.totalorder %s31, 0
      %p325 = por %p323, %p324
      %p326 = scmp.le.s32.totalorder 1, %s25
      %p327 = scmp.lt.s32.totalorder %s25, 3
      %p328 = pnand %p326, %p327
      %p329 = pneg %p328
      // Predicated region
      $region9: #{tpu_custom_call.1} parent=5 // pred_check
        _
      $region10: #{tpu_custom_call.1} parent=5 // pred_check_branch
        %331 = sbr.rel (%p328) target = $region12
      $region11: #{tpu_custom_call.1} parent=5 // pred_region
        %s332 = ssub.s32 %s25, 1
        // Predicated region
        $region13: #{tpu_custom_call.1} parent=11 // pred_check
          %p333 = pneg %p72
        $region14: #{tpu_custom_call.1} parent=11 // pred_check_branch
          %335 = sbr.rel (%p333) target = $region16
        $region15: #{tpu_custom_call.1} parent=11 // pred_region
          _
        $region16: #{tpu_custom_call.1} parent=11 // pred_fallthru
          _
        // Predicated region
        $region17: #{tpu_custom_call.1} parent=11 // pred_check
          %p336 = pneg %p93
        $region18: #{tpu_custom_call.1} parent=11 // pred_check_branch
          %338 = sbr.rel (%p336) target = $region20
        $region19: #{tpu_custom_call.1} parent=11 // pred_region
          _
        $region20: #{tpu_custom_call.1} parent=11 // pred_fallthru
          _
        // Predicated region
        $region21: #{tpu_custom_call.1} parent=11 // pred_check
          %p339 = pneg %p114
        $region22: #{tpu_custom_call.1} parent=11 // pred_check_branch
          %341 = sbr.rel (%p339) target = $region24
        $region23: #{tpu_custom_call.1} parent=11 // pred_region
          _
        $region24: #{tpu_custom_call.1} parent=11 // pred_fallthru
          _
        // Predicated region
        $region25: #{tpu_custom_call.1} parent=11 // pred_check
          %p342 = pneg %p135
        $region26: #{tpu_custom_call.1} parent=11 // pred_check_branch
          %344 = sbr.rel (%p342) target = $region28
        $region27: #{tpu_custom_call.1} parent=11 // pred_region
          _
        $region28: #{tpu_custom_call.1} parent=11 // pred_fallthru
          _
        // Predicated region
        $region29: #{tpu_custom_call.1} parent=11 // pred_check
          %p345 = pneg %p156
        $region30: #{tpu_custom_call.1} parent=11 // pred_check_branch
          %347 = sbr.rel (%p345) target = $region32
        $region31: #{tpu_custom_call.1} parent=11 // pred_region
          _
        $region32: #{tpu_custom_call.1} parent=11 // pred_fallthru
          _
        // Predicated region
        $region33: #{tpu_custom_call.1} parent=11 // pred_check
          %p348 = pneg %p177
        $region34: #{tpu_custom_call.1} parent=11 // pred_check_branch
          %350 = sbr.rel (%p348) target = $region36
        $region35: #{tpu_custom_call.1} parent=11 // pred_region
          _
        $region36: #{tpu_custom_call.1} parent=11 // pred_fallthru
          _
        // Predicated region
        $region37: #{tpu_custom_call.1} parent=11 // pred_check
          %p351 = pneg %p198
        $region38: #{tpu_custom_call.1} parent=11 // pred_check_branch
          %353 = sbr.rel (%p351) target = $region40
        $region39: #{tpu_custom_call.1} parent=11 // pred_region
          _
        $region40: #{tpu_custom_call.1} parent=11 // pred_fallthru
          _
        // Predicated region
        $region41: #{tpu_custom_call.1} parent=11 // pred_check
          %p354 = pneg %p219
        $region42: #{tpu_custom_call.1} parent=11 // pred_check_branch
          %356 = sbr.rel (%p354) target = $region44
        $region43: #{tpu_custom_call.1} parent=11 // pred_region
          _
        $region44: #{tpu_custom_call.1} parent=11 // pred_fallthru
          _
        // Predicated region
        $region45: #{tpu_custom_call.1} parent=11 // pred_check
          %p357 = pneg %p240
        $region46: #{tpu_custom_call.1} parent=11 // pred_check_branch
          %359 = sbr.rel (%p357) target = $region48
        $region47: #{tpu_custom_call.1} parent=11 // pred_region
          _
        $region48: #{tpu_custom_call.1} parent=11 // pred_fallthru
          _
      $region12: #{tpu_custom_call.1} parent=5 // pred_fallthru
        _
      %p360 = scmp.lt.s32.totalorder %s25, 2
      // Predicated region
      $region49: #{tpu_custom_call.1} parent=5 // pred_check
        %p361 = pneg %p360
      $region50: #{tpu_custom_call.1} parent=5 // pred_check_branch
        %363 = sbr.rel (%p361) target = $region52
      $region51: #{tpu_custom_call.1} parent=5 // pred_region
        // Predicated region
        $region53: #{tpu_custom_call.1} parent=51 // pred_check
          %p364 = pneg %p45
        $region54: #{tpu_custom_call.1} parent=51 // pred_check_branch
          %366 = sbr.rel (%p364) target = $region56
        $region55: #{tpu_custom_call.1} parent=51 // pred_region
          %s367 = sand.u32 %s35, 1
          %s368 = sand.u32 %s35, 1
          %s369 = smul.addr %s368, 32
          %s370 = scalar_lea.vmem [#allocation2], %s369
          %s371 = smul.u32 2, %s25
          %s372 = smul.addr %s371, 8
          %s373 = scalar_lea.vmem %s0, %s372
          // Predicated region
          $region57: #{tpu_custom_call.1} parent=55 // pred_check
            _
          $region58: #{tpu_custom_call.1} parent=55 // pred_check_branch
            %375 = sbr.rel (0) target = $region60
          $region59: #{tpu_custom_call.1} parent=55 // pred_region
            // Predicated region
            $region61: #{tpu_custom_call.1} parent=59 // pred_check
              _
            $region62: #{tpu_custom_call.1} parent=59 // pred_check_branch
              %377 = sbr.rel (0) target = $region64
            $region63: #{tpu_custom_call.1} parent=59 // pred_region
              // Predicated region
              $region76: #{tpu_custom_call.1} parent=63 // pred_check
                _
              $region77: #{tpu_custom_call.1} parent=63 // pred_check_branch
                %398 = sbr.rel (0) target = $region79
              $region78: #{tpu_custom_call.1} parent=63 // pred_region
                loop: start=0, step=1, limit=1
                $region80: #{tpu_custom_call.1} parent=78 // loop_pre_header
                  _
                $region81: #{tpu_custom_call.1} parent=78 // loop_header
                  %s400 = sphi 0, %s404
                  %p401 = scmp.ge.s32.totalorder %s400, 1
                  %s405 = sphi %s373, %s373
                  %s406 = sphi %s370, %s370
                $region82: #{tpu_custom_call.1} parent=78 // loop_header_branch
                  %403 = sbr.rel (%p401) target = $region86
                $region83: #{tpu_custom_call.1} parent=78 // loop_body
                  %v407 = vld [vmem:[%s405] sm:$0xff]
                  %408 = vst [vmem:[%s406] sm:$0xff] %v407
                  %v409 = vld [vmem:[%s405 + $0x8] sm:$0xff]
                  %410 = vst [vmem:[%s406 + $0x8] sm:$0xff] %v409
                  %v411 = vld [vmem:[%s405 + $0x20] sm:$0xff]
                  %412 = vst [vmem:[%s406 + $0x10] sm:$0xff] %v411
                  %v413 = vld [vmem:[%s405 + $0x28] sm:$0xff]
                  %414 = vst [vmem:[%s406 + $0x18] sm:$0xff] %v413
                $region84: #{tpu_custom_call.1} parent=78 // loop_footer
                  %s404 = sadd.s32 1, %s400
                $region85: #{tpu_custom_call.1} parent=78 // loop_footer_branch
                  %399 = sbr.rel target = $region81
                $region86: #{tpu_custom_call.1} parent=78 // loop_exit
                  _
              $region79: #{tpu_custom_call.1} parent=63 // pred_fallthru
                _
              // Predicated region
              $region87: #{tpu_custom_call.1} parent=63 // pred_check
                _
              $region88: #{tpu_custom_call.1} parent=63 // pred_check_branch
                %416 = sbr.rel target = $region90
              $region89: #{tpu_custom_call.1} parent=63 // pred_region
                _
              $region90: #{tpu_custom_call.1} parent=63 // pred_fallthru
                _
            $region64: #{tpu_custom_call.1} parent=59 // pred_fallthru
              _
            // Predicated region
            $region65: #{tpu_custom_call.1} parent=59 // pred_check
              _
            $region66: #{tpu_custom_call.1} parent=59 // pred_check_branch
              %379 = sbr.rel target = $region68
            $region67: #{tpu_custom_call.1} parent=59 // pred_region
              loop: start=0, step=1, limit=1
              $region69: #{tpu_custom_call.1} parent=67 // loop_pre_header
                _
              $region70: #{tpu_custom_call.1} parent=67 // loop_header
                %s382 = sphi 0, %s386
                %p383 = scmp.ge.s32.totalorder %s382, 1
                %s387 = sphi %s373, %s373
                %s388 = sphi %s370, %s370
              $region71: #{tpu_custom_call.1} parent=67 // loop_header_branch
                %385 = sbr.rel (%p383) target = $region75
              $region72: #{tpu_custom_call.1} parent=67 // loop_body
                %v389 = vld [vmem:[%s387] sm:$0xff]
                %390 = vst [vmem:[%s388] sm:$0xff] %v389
                %v391 = vld [vmem:[%s387 + $0x8] sm:$0xff]
                %392 = vst [vmem:[%s388 + $0x8] sm:$0xff] %v391
                %v393 = vld [vmem:[%s387 + $0x20] sm:$0xff]
                %394 = vst [vmem:[%s388 + $0x10] sm:$0xff] %v393
                %v395 = vld [vmem:[%s387 + $0x28] sm:$0xff]
                %396 = vst [vmem:[%s388 + $0x18] sm:$0xff] %v395
              $region73: #{tpu_custom_call.1} parent=67 // loop_footer
                %s386 = sadd.s32 1, %s382
              $region74: #{tpu_custom_call.1} parent=67 // loop_footer_branch
                %381 = sbr.rel target = $region70
              $region75: #{tpu_custom_call.1} parent=67 // loop_exit
                _
            $region68: #{tpu_custom_call.1} parent=59 // pred_fallthru
              _
          $region60: #{tpu_custom_call.1} parent=55 // pred_fallthru
            _
          %417 = vnop
        $region56: #{tpu_custom_call.1} parent=51 // pred_fallthru
          _
      $region52: #{tpu_custom_call.1} parent=5 // pred_fallthru
        _
      %p418 = scmp.le.s32.totalorder 1, %s25
      %p419 = scmp.lt.s32.totalorder %s25, 3
      %p420 = pnand %p418, %p419
      %p421 = pneg %p420
      // Predicated region
      $region91: #{tpu_custom_call.1} parent=5 // pred_check
        _
      $region92: #{tpu_custom_call.1} parent=5 // pred_check_branch
        %423 = sbr.rel (%p420) target = $region94
      $region93: #{tpu_custom_call.1} parent=5 // pred_region
        %s424 = ssub.s32 %s25, 1
        %s425 = sand.u32 %s38, 1
        %s426 = sand.u32 %s38, 1
        %s427 = smul.addr %s426, 32
        %s428 = scalar_lea.vmem [#allocation2], %s427
        // Predicated region
        $region95: #{tpu_custom_call.1} parent=93 // pred_check
          %p429 = pneg %p51
        $region96: #{tpu_custom_call.1} parent=93 // pred_check_branch
          %431 = sbr.rel (%p429) target = $region98
        $region97: #{tpu_custom_call.1} parent=93 // pred_region
          _
        $region98: #{tpu_custom_call.1} parent=93 // pred_fallthru
          _
        %s432 = sand.u32 %s38, 1
        %s433 = sand.u32 %s38, 1
        %s434 = smul.addr %s433, 32
        %s435 = scalar_lea.vmem [#allocation2], %s434
        %p436 = pneg %p51
        %p437 = pneg %p48
        %p438 = pneg %p72
        %p439 = pneg %p69
        %p440 = pneg %p93
        %p441 = pneg %p90
        %p442 = pneg %p114
        %p443 = pneg %p111
        %p444 = pneg %p135
        %p445 = pneg %p132
        %p446 = pneg %p156
        %p447 = pneg %p153
        %p448 = pneg %p177
        %p449 = pneg %p174
        %p450 = pneg %p198
        %p451 = pneg %p195
        %p452 = pneg %p219
        %p453 = pneg %p216
        %p454 = pneg %p240
        %p455 = pneg %p237
        %p456 = pneg %p266
        %p457 = pneg %p263
        %s458 = sand.u32 %s253, 1
        %s459 = scalar_lea.sflag [#allocation4], %s458
        %s460 = sand.u32 %s253, 1
        %s461 = smul.addr %s460, 32
        %s462 = scalar_lea.vmem [#allocation3], %s461
        %p463 = pneg %p292
        %p464 = pneg %p289
        %s465 = sand.u32 %s30, 1
        %s466 = scalar_lea.sflag [#allocation6], %s465
        %s467 = sand.u32 %s279, 1
        %s468 = scalar_lea.vmem [#allocation5], %s467
        %p469 = pneg %p318
        %p470 = pneg %p315
        %s471 = sand.u32 %s30, 1
        %s472 = scalar_lea.sflag [#allocation6], %s471
        %s473 = sand.u32 %s305, 1
        %s474 = scalar_lea.vmem [#allocation7], %s473
        %s475 = smul.u32 2, %s30
        %s476 = smul.u32 2, %s30
        %v477 = vld [vmem:[%s428] sm:$0xff]
        %v478 = vld [vmem:[%s428 + $0x8] sm:$0xff]
        %v479 = vld [vmem:[%s428 + $0x10] sm:$0xff]
        %v480 = vld [vmem:[%s428 + $0x18] sm:$0xff]
        %v481 = vld [vmem:[%s3] sm:$0xff]
        %v482 = vld [vmem:[%s3 + $0x8] sm:$0xff]
        %v483 = vld [vmem:[%s3 + $0x10] sm:$0xff]
        %v484 = vld [vmem:[%s3 + $0x18] sm:$0xff]
        %v485 = vld [vmem:[%s4] sm:$0x1]
        %v487 = vlaneseq
        %v488 = vshrl.u32 %v487, 7
        %v489 = vsub.s32 0, %v488
        %v490 = vrot.slane %v485, %v489
        %vm492 = vcmask 261120
        %v494 = vsel %vm492, %v477, 0
        %v497 = vsel %vm492, %v478, 0
        %v500 = vsel %vm492, %v479, 0
        %v503 = vsel %vm492, %v480, 0
        %505 = vmatprep.subr.mxu0 0.0
        %506 = vmatpush1.msra.mxu0 %v481
        %507 = vmatprep.subr.mxu0 0.0
        %508 = vmatpush1.msra.mxu0 %v482
        %509 = vmatprep.subr.mxu0 0.0
        %510 = vmatpush1.msra.mxu0 %v483
        %511 = vmatprep.subr.mxu0 0.0
        %512 = vmatpush1.msra.mxu0 %v484
        %513 = vmatprep.subr.mxu0 0.0
        %514 = vmatpush1.msra.mxu0 0.0
        %515 = vmatprep.subr.mxu0 0.0
        %516 = vmatpush1.msra.mxu0 0.0
        %517 = vmatprep.subr.mxu0 0.0
        %518 = vmatpush1.msra.mxu0 0.0
        %519 = vmatprep.subr.mxu0 0.0
        %520 = vmatpush1.msra.mxu0 0.0
        %521 = vmatprep.subr.mxu0 0.0
        %522 = vmatpush1.msra.mxu0 0.0
        %523 = vmatprep.subr.mxu0 0.0
        %524 = vmatpush1.msra.mxu0 0.0
        %525 = vmatprep.subr.mxu0 0.0
        %526 = vmatpush1.msra.mxu0 0.0
        %527 = vmatprep.subr.mxu0 0.0
        %528 = vmatpush1.msra.mxu0 0.0
        %529 = vmatprep.subr.mxu0 0.0
        %530 = vmatpush1.msra.mxu0 0.0
        %531 = vmatprep.subr.mxu0 0.0
        %532 = vmatpush1.msra.mxu0 0.0
        %533 = vmatprep.subr.mxu0 0.0
        %534 = vmatpush1.msra.mxu0 0.0
        %535 = vmatprep.subr.mxu0 0.0
        %536 = vmatpush1.msra.mxu0 0.0
        %537 = vmatprep.subr.mxu0 0.0
        %538 = vmatpush1.msra.mxu0 0.0
        %539 = vmatprep.subr.mxu0 0.0
        %540 = vmatpush1.msra.mxu0 0.0
        %541 = vmatprep.subr.mxu0 0.0
        %542 = vmatpush1.msra.mxu0 0.0
        %543 = vmatprep.subr.mxu0 0.0
        %544 = vmatpush1.msra.mxu0 0.0
        %545 = vmatprep.subr.mxu0 0.0
        %546 = vmatpush1.msra.mxu0 0.0
        %547 = vmatprep.subr.mxu0 0.0
        %548 = vmatpush1.msra.mxu0 0.0
        %549 = vmatprep.subr.mxu0 0.0
        %550 = vmatpush1.msra.mxu0 0.0
        %551 = vmatprep.subr.mxu0 0.0
        %552 = vmatpush1.msra.mxu0 0.0
        %553 = vmatprep.subr.mxu0 0.0
        %554 = vmatpush1.msra.mxu0 0.0
        %555 = vmatprep.subr.mxu0 0.0
        %556 = vmatpush1.msra.mxu0 0.0
        %557 = vmatprep.subr.mxu0 0.0
        %558 = vmatpush1.msra.mxu0 0.0
        %559 = vmatprep.subr.mxu0 0.0
        %560 = vmatpush1.msra.mxu0 0.0
        %561 = vmatprep.subr.mxu0 0.0
        %562 = vmatpush1.msra.mxu0 0.0
        %563 = vmatprep.subr.mxu0 0.0
        %564 = vmatpush1.msra.mxu0 0.0
        %565 = vmatprep.subr.mxu0 0.0
        %566 = vmatpush1.msra.mxu0 0.0
        %567 = vmatprep.subr.mxu0 0.0
        %568 = vmatpush1.msra.mxu0 0.0
        %569 = vmatprep.mubr.f32.mxu0 0.0
        %570 = vmatmul.mubr.f32.gmra.mrb[0].mxu0 %v494
        %v571 = vpop.f32.mrb[0].mxu0
        %v572 = vadd.f32 %v490, %v571
        %v573 = vpop.f32.mrb[0].mxu0
        %574 = vmatprep.mubr.f32.mxu0 0.0
        %575 = vmatmul.mubr.f32.gmra.mrb[0].mxu0 %v497
        %v576 = vpop.f32.mrb[0].mxu0
        %v577 = vadd.f32 %v490, %v576
        %v578 = vpop.f32.mrb[0].mxu0
        %579 = vmatprep.mubr.f32.mxu0 0.0
        %580 = vmatmul.mubr.f32.gmra.mrb[0].mxu0 %v500
        %v581 = vpop.f32.mrb[0].mxu0
        %v582 = vadd.f32 %v490, %v581
        %v583 = vpop.f32.mrb[0].mxu0
        %584 = vmatprep.mubr.f32.mxu0 0.0
        %585 = vmatmul.mubr.f32.gmra.mrb[0].mxu0 %v503
        %v586 = vpop.f32.mrb[0].mxu0
        %v587 = vadd.f32 %v490, %v586
        %v588 = vpop.f32.mrb[0].mxu0
        %589 = vdwg.mxu0
        %v590 = vld [vmem:[%s1] sm:$0xff]
        %v591 = vld [vmem:[%s1 + $0x8] sm:$0xff]
        %v592 = vld [vmem:[%s1 + $0x10] sm:$0xff]
        %v593 = vld [vmem:[%s1 + $0x18] sm:$0xff]
        %v594 = vld [vmem:[%s2] sm:$0xff]
        %v595 = vld [vmem:[%s2 + $0x8] sm:$0xff]
        %v596 = vld [vmem:[%s2 + $0x10] sm:$0xff]
        %v597 = vld [vmem:[%s2 + $0x18] sm:$0xff]
        %vm598 = vcmask 64512
        %v600 = vsel %vm598, %v572, 0
        %v603 = vsel %vm598, %v577, 0
        %v606 = vsel %vm598, %v590, 0
        %v609 = vsel %vm598, %v591, 0
        %611 = vmatprep.subr.mxu0 0.0
        %612 = vmatpush1.xpose.msra.mxu0 %v606
        %613 = vmatprep.subr.mxu0 0.0
        %614 = vmatpush1.xpose.msra.mxu0 %v609
        %615 = vmatprep.subr.mxu0 0.0
        %616 = vmatpush1.xpose.msra.mxu0 0.0
        %617 = vmatprep.subr.mxu0 0.0
        %618 = vmatpush1.xpose.msra.mxu0 0.0
        %619 = vmatprep.subr.mxu0 0.0
        %620 = vmatpush1.xpose.msra.mxu0 0.0
        %621 = vmatprep.subr.mxu0 0.0
        %622 = vmatpush1.xpose.msra.mxu0 0.0
        %623 = vmatprep.subr.mxu0 0.0
        %624 = vmatpush1.xpose.msra.mxu0 0.0
        %625 = vmatprep.subr.mxu0 0.0
        %626 = vmatpush1.xpose.msra.mxu0 0.0
        %627 = vmatprep.subr.mxu0 0.0
        %628 = vmatpush1.xpose.msra.mxu0 0.0
        %629 = vmatprep.subr.mxu0 0.0
        %630 = vmatpush1.xpose.msra.mxu0 0.0
        %631 = vmatprep.subr.mxu0 0.0
        %632 = vmatpush1.xpose.msra.mxu0 0.0
        %633 = vmatprep.subr.mxu0 0.0
        %634 = vmatpush1.xpose.msra.mxu0 0.0
        %635 = vmatprep.subr.mxu0 0.0
        %636 = vmatpush1.xpose.msra.mxu0 0.0
        %637 = vmatprep.subr.mxu0 0.0
        %638 = vmatpush1.xpose.msra.mxu0 0.0
        %639 = vmatprep.subr.mxu0 0.0
        %640 = vmatpush1.xpose.msra.mxu0 0.0
        %641 = vmatprep.subr.mxu0 0.0
        %642 = vmatpush1.xpose.msra.mxu0 0.0
        %643 = vmatprep.subr.mxu0 0.0
        %644 = vmatpush1.xpose.msra.mxu0 0.0
        %645 = vmatprep.subr.mxu0 0.0
        %646 = vmatpush1.xpose.msra.mxu0 0.0
        %647 = vmatprep.subr.mxu0 0.0
        %648 = vmatpush1.xpose.msra.mxu0 0.0
        %649 = vmatprep.subr.mxu0 0.0
        %650 = vmatpush1.xpose.msra.mxu0 0.0
        %651 = vmatprep.subr.mxu0 0.0
        %652 = vmatpush1.xpose.msra.mxu0 0.0
        %653 = vmatprep.subr.mxu0 0.0
        %654 = vmatpush1.xpose.msra.mxu0 0.0
        %655 = vmatprep.subr.mxu0 0.0
        %656 = vmatpush1.xpose.msra.mxu0 0.0
        %657 = vmatprep.subr.mxu0 0.0
        %658 = vmatpush1.xpose.msra.mxu0 0.0
        %659 = vmatprep.subr.mxu0 0.0
        %660 = vmatpush1.xpose.msra.mxu0 0.0
        %661 = vmatprep.subr.mxu0 0.0
        %662 = vmatpush1.xpose.msra.mxu0 0.0
        %663 = vmatprep.subr.mxu0 0.0
        %664 = vmatpush1.xpose.msra.mxu0 0.0
        %665 = vmatprep.subr.mxu0 0.0
        %666 = vmatpush1.xpose.msra.mxu0 0.0
        %667 = vmatprep.subr.mxu0 0.0
        %668 = vmatpush1.xpose.msra.mxu0 0.0
        %669 = vmatprep.subr.mxu0 0.0
        %670 = vmatpush1.xpose.msra.mxu0 0.0
        %671 = vmatprep.subr.mxu0 0.0
        %672 = vmatpush1.xpose.msra.mxu0 0.0
        %673 = vmatprep.subr.mxu0 0.0
        %674 = vmatpush1.xpose.msra.mxu0 0.0
        %675 = vmatprep.mubr.f32.mxu0 0.0
        %676 = vmatmul.mubr.f32.gmra.mrb[0].mxu0 %v600
        %v677 = vpop.f32.mrb[0].mxu0
        %v678 = vadd.f32 0.0, %v677
        %v679 = vpop.f32.mrb[0].mxu0
        %680 = vmatprep.mubr.f32.mxu0 0.0
        %681 = vmatmul.mubr.f32.gmra.mrb[0].mxu0 %v603
        %v682 = vpop.f32.mrb[0].mxu0
        %v683 = vadd.f32 0.0, %v682
        %v684 = vpop.f32.mrb[0].mxu0
        %685 = vdwg.mxu0
        %v687 = vsel %vm598, %v582, 0
        %v690 = vsel %vm598, %v587, 0
        %v693 = vsel %vm598, %v592, 0
        %v696 = vsel %vm598, %v593, 0
        %698 = vmatprep.subr.mxu0 0.0
        %699 = vmatpush1.xpose.msra.mxu0 %v693
        %700 = vmatprep.subr.mxu0 0.0
        %701 = vmatpush1.xpose.msra.mxu0 %v696
        %702 = vmatprep.subr.mxu0 0.0
        %703 = vmatpush1.xpose.msra.mxu0 0.0
        %704 = vmatprep.subr.mxu0 0.0
        %705 = vmatpush1.xpose.msra.mxu0 0.0
        %706 = vmatprep.subr.mxu0 0.0
        %707 = vmatpush1.xpose.msra.mxu0 0.0
        %708 = vmatprep.subr.mxu0 0.0
        %709 = vmatpush1.xpose.msra.mxu0 0.0
        %710 = vmatprep.subr.mxu0 0.0
        %711 = vmatpush1.xpose.msra.mxu0 0.0
        %712 = vmatprep.subr.mxu0 0.0
        %713 = vmatpush1.xpose.msra.mxu0 0.0
        %714 = vmatprep.subr.mxu0 0.0
        %715 = vmatpush1.xpose.msra.mxu0 0.0
        %716 = vmatprep.subr.mxu0 0.0
        %717 = vmatpush1.xpose.msra.mxu0 0.0
        %718 = vmatprep.subr.mxu0 0.0
        %719 = vmatpush1.xpose.msra.mxu0 0.0
        %720 = vmatprep.subr.mxu0 0.0
        %721 = vmatpush1.xpose.msra.mxu0 0.0
        %722 = vmatprep.subr.mxu0 0.0
        %723 = vmatpush1.xpose.msra.mxu0 0.0
        %724 = vmatprep.subr.mxu0 0.0
        %725 = vmatpush1.xpose.msra.mxu0 0.0
        %726 = vmatprep.subr.mxu0 0.0
        %727 = vmatpush1.xpose.msra.mxu0 0.0
        %728 = vmatprep.subr.mxu0 0.0
        %729 = vmatpush1.xpose.msra.mxu0 0.0
        %730 = vmatprep.subr.mxu0 0.0
        %731 = vmatpush1.xpose.msra.mxu0 0.0
        %732 = vmatprep.subr.mxu0 0.0
        %733 = vmatpush1.xpose.msra.mxu0 0.0
        %734 = vmatprep.subr.mxu0 0.0
        %735 = vmatpush1.xpose.msra.mxu0 0.0
        %736 = vmatprep.subr.mxu0 0.0
        %737 = vmatpush1.xpose.msra.mxu0 0.0
        %738 = vmatprep.subr.mxu0 0.0
        %739 = vmatpush1.xpose.msra.mxu0 0.0
        %740 = vmatprep.subr.mxu0 0.0
        %741 = vmatpush1.xpose.msra.mxu0 0.0
        %742 = vmatprep.subr.mxu0 0.0
        %743 = vmatpush1.xpose.msra.mxu0 0.0
        %744 = vmatprep.subr.mxu0 0.0
        %745 = vmatpush1.xpose.msra.mxu0 0.0
        %746 = vmatprep.subr.mxu0 0.0
        %747 = vmatpush1.xpose.msra.mxu0 0.0
        %748 = vmatprep.subr.mxu0 0.0
        %749 = vmatpush1.xpose.msra.mxu0 0.0
        %750 = vmatprep.subr.mxu0 0.0
        %751 = vmatpush1.xpose.msra.mxu0 0.0
        %752 = vmatprep.subr.mxu0 0.0
        %753 = vmatpush1.xpose.msra.mxu0 0.0
        %754 = vmatprep.subr.mxu0 0.0
        %755 = vmatpush1.xpose.msra.mxu0 0.0
        %756 = vmatprep.subr.mxu0 0.0
        %757 = vmatpush1.xpose.msra.mxu0 0.0
        %758 = vmatprep.subr.mxu0 0.0
        %759 = vmatpush1.xpose.msra.mxu0 0.0
        %760 = vmatprep.subr.mxu0 0.0
        %761 = vmatpush1.xpose.msra.mxu0 0.0
        %762 = vmatprep.mubr.f32.mxu0 0.0
        %763 = vmatmul.mubr.f32.gmra.mrb[0].mxu0 %v687
        %v764 = vpop.f32.mrb[0].mxu0
        %v765 = vadd.f32 0.0, %v764
        %v766 = vpop.f32.mrb[0].mxu0
        %767 = vmatprep.mubr.f32.mxu0 0.0
        %768 = vmatmul.mubr.f32.gmra.mrb[0].mxu0 %v690
        %v769 = vpop.f32.mrb[0].mxu0
        %v770 = vadd.f32 0.0, %v769
        %v771 = vpop.f32.mrb[0].mxu0
        %772 = vdwg.mxu0
        %v773 = vmul.f32 %v678, 0.35355338
        %v774 = vmul.f32 %v683, 0.35355338
        %v775 = vmul.f32 %v765, 0.35355338
        %v776 = vmul.f32 %v770, 0.35355338
        %vm777 = vcmask 130048
        %v778 = vsel %vm777, %v773, -inf
        %779 = vmax.xlane.f32.xlu0 %v778
        %v780 = vpop.xlane.xlu0 %779
        %v781 = vsel %vm777, %v774, -inf
        %782 = vmax.xlane.f32.xlu0 %v781
        %v783 = vpop.xlane.xlu0 %782
        %v784 = vsel %vm777, %v775, -inf
        %785 = vmax.xlane.f32.xlu0 %v784
        %v786 = vpop.xlane.xlu0 %785
        %v787 = vsel %vm777, %v776, -inf
        %788 = vmax.xlane.f32.xlu0 %v787
        %v789 = vpop.xlane.xlu0 %788
        %v790 = vsub.f32 %v773, %v780
        %v791 = vsub.f32 %v774, %v783
        %v792 = vsub.f32 %v775, %v786
        %v793 = vsub.f32 %v776, %v789
        %v794 = vmul.f32 %v790, 1.442695
        %v795 = vpow.pop %v794
        %v796 = vmul.f32 %v791, 1.442695
        %v797 = vpow.pop %v796
        %v798 = vmul.f32 %v792, 1.442695
        %v799 = vpow.pop %v798
        %v800 = vmul.f32 %v793, 1.442695
        %v801 = vpow.pop %v800
        %v802 = vsel %vm777, %v795, 0.0
        %803 = vadd.xlane.f32.xlu0 %v802
        %v804 = vpop.xlane.xlu0 %803
        %v805 = vsel %vm777, %v797, 0.0
        %806 = vadd.xlane.f32.xlu0 %v805
        %v807 = vpop.xlane.xlu0 %806
        %v808 = vsel %vm777, %v799, 0.0
        %809 = vadd.xlane.f32.xlu0 %v808
        %v810 = vpop.xlane.xlu0 %809
        %v811 = vsel %vm777, %v801, 0.0
        %812 = vadd.xlane.f32.xlu0 %v811
        %v813 = vpop.xlane.xlu0 %812
        %v815 = vsel %vm777, %v795, 0
        %v818 = vsel %vm777, %v797, 0
        %820 = vmatprep.subr.mxu0 0.0
        %821 = vmatpush1.msra.mxu0 %v594
        %822 = vmatprep.subr.mxu0 0.0
        %823 = vmatpush1.msra.mxu0 %v595
        %824 = vmatprep.subr.mxu0 0.0
        %825 = vmatpush1.msra.mxu0 0.0
        %826 = vmatprep.subr.mxu0 0.0
        %827 = vmatpush1.msra.mxu0 0.0
        %828 = vmatprep.subr.mxu0 0.0
        %829 = vmatpush1.msra.mxu0 0.0
        %830 = vmatprep.subr.mxu0 0.0
        %831 = vmatpush1.msra.mxu0 0.0
        %832 = vmatprep.subr.mxu0 0.0
        %833 = vmatpush1.msra.mxu0 0.0
        %834 = vmatprep.subr.mxu0 0.0
        %835 = vmatpush1.msra.mxu0 0.0
        %836 = vmatprep.subr.mxu0 0.0
        %837 = vmatpush1.msra.mxu0 0.0
        %838 = vmatprep.subr.mxu0 0.0
        %839 = vmatpush1.msra.mxu0 0.0
        %840 = vmatprep.subr.mxu0 0.0
        %841 = vmatpush1.msra.mxu0 0.0
        %842 = vmatprep.subr.mxu0 0.0
        %843 = vmatpush1.msra.mxu0 0.0
        %844 = vmatprep.subr.mxu0 0.0
        %845 = vmatpush1.msra.mxu0 0.0
        %846 = vmatprep.subr.mxu0 0.0
        %847 = vmatpush1.msra.mxu0 0.0
        %848 = vmatprep.subr.mxu0 0.0
        %849 = vmatpush1.msra.mxu0 0.0
        %850 = vmatprep.subr.mxu0 0.0
        %851 = vmatpush1.msra.mxu0 0.0
        %852 = vmatprep.subr.mxu0 0.0
        %853 = vmatpush1.msra.mxu0 0.0
        %854 = vmatprep.subr.mxu0 0.0
        %855 = vmatpush1.msra.mxu0 0.0
        %856 = vmatprep.subr.mxu0 0.0
        %857 = vmatpush1.msra.mxu0 0.0
        %858 = vmatprep.subr.mxu0 0.0
        %859 = vmatpush1.msra.mxu0 0.0
        %860 = vmatprep.subr.mxu0 0.0
        %861 = vmatpush1.msra.mxu0 0.0
        %862 = vmatprep.subr.mxu0 0.0
        %863 = vmatpush1.msra.mxu0 0.0
        %864 = vmatprep.subr.mxu0 0.0
        %865 = vmatpush1.msra.mxu0 0.0
        %866 = vmatprep.subr.mxu0 0.0
        %867 = vmatpush1.msra.mxu0 0.0
        %868 = vmatprep.subr.mxu0 0.0
        %869 = vmatpush1.msra.mxu0 0.0
        %870 = vmatprep.subr.mxu0 0.0
        %871 = vmatpush1.msra.mxu0 0.0
        %872 = vmatprep.subr.mxu0 0.0
        %873 = vmatpush1.msra.mxu0 0.0
        %874 = vmatprep.subr.mxu0 0.0
        %875 = vmatpush1.msra.mxu0 0.0
        %876 = vmatprep.subr.mxu0 0.0
        %877 = vmatpush1.msra.mxu0 0.0
        %878 = vmatprep.subr.mxu0 0.0
        %879 = vmatpush1.msra.mxu0 0.0
        %880 = vmatprep.subr.mxu0 0.0
        %881 = vmatpush1.msra.mxu0 0.0
        %882 = vmatprep.subr.mxu0 0.0
        %883 = vmatpush1.msra.mxu0 0.0
        %884 = vmatprep.mubr.f32.mxu0 0.0
        %885 = vmatmul.mubr.f32.gmra.mrb[0].mxu0 %v815
        %v886 = vpop.f32.mrb[0].mxu0
        %v887 = vadd.f32 0.0, %v886
        %v888 = vpop.f32.mrb[0].mxu0
        %889 = vmatprep.mubr.f32.mxu0 0.0
        %890 = vmatmul.mubr.f32.gmra.mrb[0].mxu0 %v818
        %v891 = vpop.f32.mrb[0].mxu0
        %v892 = vadd.f32 0.0, %v891
        %v893 = vpop.f32.mrb[0].mxu0
        %894 = vdwg.mxu0
        %v896 = vsel %vm777, %v799, 0
        %v899 = vsel %vm777, %v801, 0
        %901 = vmatprep.subr.mxu0 0.0
        %902 = vmatpush1.msra.mxu0 %v596
        %903 = vmatprep.subr.mxu0 0.0
        %904 = vmatpush1.msra.mxu0 %v597
        %905 = vmatprep.subr.mxu0 0.0
        %906 = vmatpush1.msra.mxu0 0.0
        %907 = vmatprep.subr.mxu0 0.0
        %908 = vmatpush1.msra.mxu0 0.0
        %909 = vmatprep.subr.mxu0 0.0
        %910 = vmatpush1.msra.mxu0 0.0
        %911 = vmatprep.subr.mxu0 0.0
        %912 = vmatpush1.msra.mxu0 0.0
        %913 = vmatprep.subr.mxu0 0.0
        %914 = vmatpush1.msra.mxu0 0.0
        %915 = vmatprep.subr.mxu0 0.0
        %916 = vmatpush1.msra.mxu0 0.0
        %917 = vmatprep.subr.mxu0 0.0
        %918 = vmatpush1.msra.mxu0 0.0
        %919 = vmatprep.subr.mxu0 0.0
        %920 = vmatpush1.msra.mxu0 0.0
        %921 = vmatprep.subr.mxu0 0.0
        %922 = vmatpush1.msra.mxu0 0.0
        %923 = vmatprep.subr.mxu0 0.0
        %924 = vmatpush1.msra.mxu0 0.0
        %925 = vmatprep.subr.mxu0 0.0
        %926 = vmatpush1.msra.mxu0 0.0
        %927 = vmatprep.subr.mxu0 0.0
        %928 = vmatpush1.msra.mxu0 0.0
        %929 = vmatprep.subr.mxu0 0.0
        %930 = vmatpush1.msra.mxu0 0.0
        %931 = vmatprep.subr.mxu0 0.0
        %932 = vmatpush1.msra.mxu0 0.0
        %933 = vmatprep.subr.mxu0 0.0
        %934 = vmatpush1.msra.mxu0 0.0
        %935 = vmatprep.subr.mxu0 0.0
        %936 = vmatpush1.msra.mxu0 0.0
        %937 = vmatprep.subr.mxu0 0.0
        %938 = vmatpush1.msra.mxu0 0.0
        %939 = vmatprep.subr.mxu0 0.0
        %940 = vmatpush1.msra.mxu0 0.0
        %941 = vmatprep.subr.mxu0 0.0
        %942 = vmatpush1.msra.mxu0 0.0
        %943 = vmatprep.subr.mxu0 0.0
        %944 = vmatpush1.msra.mxu0 0.0
        %945 = vmatprep.subr.mxu0 0.0
        %946 = vmatpush1.msra.mxu0 0.0
        %947 = vmatprep.subr.mxu0 0.0
        %948 = vmatpush1.msra.mxu0 0.0
        %949 = vmatprep.subr.mxu0 0.0
        %950 = vmatpush1.msra.mxu0 0.0
        %951 = vmatprep.subr.mxu0 0.0
        %952 = vmatpush1.msra.mxu0 0.0
        %953 = vmatprep.subr.mxu0 0.0
        %954 = vmatpush1.msra.mxu0 0.0
        %955 = vmatprep.subr.mxu0 0.0
        %956 = vmatpush1.msra.mxu0 0.0
        %957 = vmatprep.subr.mxu0 0.0
        %958 = vmatpush1.msra.mxu0 0.0
        %959 = vmatprep.subr.mxu0 0.0
        %960 = vmatpush1.msra.mxu0 0.0
        %961 = vmatprep.subr.mxu0 0.0
        %962 = vmatpush1.msra.mxu0 0.0
        %963 = vmatprep.subr.mxu0 0.0
        %964 = vmatpush1.msra.mxu0 0.0
        %965 = vmatprep.mubr.f32.mxu0 0.0
        %966 = vmatmul.mubr.f32.gmra.mrb[0].mxu0 %v896
        %v967 = vpop.f32.mrb[0].mxu0
        %v968 = vadd.f32 0.0, %v967
        %v969 = vpop.f32.mrb[0].mxu0
        %970 = vmatprep.mubr.f32.mxu0 0.0
        %971 = vmatmul.mubr.f32.gmra.mrb[0].mxu0 %v899
        %v972 = vpop.f32.mrb[0].mxu0
        %v973 = vadd.f32 0.0, %v972
        %v974 = vpop.f32.mrb[0].mxu0
        %975 = vdwg.mxu0
        %v976 = vrcp.pop %v804
        %v977 = vrcp.pop %v807
        %v978 = vrcp.pop %v810
        %v979 = vrcp.pop %v813
        %v980 = vmul.f32 %v887, %v976
        %v981 = vmul.f32 %v892, %v977
        %v982 = vmul.f32 %v968, %v978
        %v983 = vmul.f32 %v973, %v979
        %v984 = vld [vmem:[%s5] sm:$0xff]
        %s985 = scalar_lea.vmem %s1, 32
        %v986 = vld [vmem:[%s985] sm:$0xff]
        %v987 = vld [vmem:[%s985 + $0x8] sm:$0xff]
        %v988 = vld [vmem:[%s985 + $0x10] sm:$0xff]
        %v989 = vld [vmem:[%s985 + $0x18] sm:$0xff]
        %s990 = scalar_lea.vmem %s2, 32
        %v991 = vld [vmem:[%s990] sm:$0xff]
        %v992 = vld [vmem:[%s990 + $0x8] sm:$0xff]
        %v993 = vld [vmem:[%s990 + $0x10] sm:$0xff]
        %v994 = vld [vmem:[%s990 + $0x18] sm:$0xff]
        %995 = vrot.lane.b32.xlu0 %v572, 120
        %v996 = vpop.permute.xlu0 %995
        %997 = vrot.lane.b32.xlu0 %v577, 120
        %v998 = vpop.permute.xlu0 %997
        %v999 = vsel %vm598, %v996, 0
        %v1001 = vsel %vm598, %v998, 0
        %v1004 = vsel %vm598, %v986, 0
        %v1007 = vsel %vm598, %v987, 0
        %1009 = vmatprep.subr.mxu0 0.0
        %1010 = vmatpush1.xpose.msra.mxu0 %v1004
        %1011 = vmatprep.subr.mxu0 0.0
        %1012 = vmatpush1.xpose.msra.mxu0 %v1007
        %1013 = vmatprep.subr.mxu0 0.0
        %1014 = vmatpush1.xpose.msra.mxu0 0.0
        %1015 = vmatprep.subr.mxu0 0.0
        %1016 = vmatpush1.xpose.msra.mxu0 0.0
        %1017 = vmatprep.subr.mxu0 0.0
        %1018 = vmatpush1.xpose.msra.mxu0 0.0
        %1019 = vmatprep.subr.mxu0 0.0
        %1020 = vmatpush1.xpose.msra.mxu0 0.0
        %1021 = vmatprep.subr.mxu0 0.0
        %1022 = vmatpush1.xpose.msra.mxu0 0.0
        %1023 = vmatprep.subr.mxu0 0.0
        %1024 = vmatpush1.xpose.msra.mxu0 0.0
        %1025 = vmatprep.subr.mxu0 0.0
        %1026 = vmatpush1.xpose.msra.mxu0 0.0
        %1027 = vmatprep.subr.mxu0 0.0
        %1028 = vmatpush1.xpose.msra.mxu0 0.0
        %1029 = vmatprep.subr.mxu0 0.0
        %1030 = vmatpush1.xpose.msra.mxu0 0.0
        %1031 = vmatprep.subr.mxu0 0.0
        %1032 = vmatpush1.xpose.msra.mxu0 0.0
        %1033 = vmatprep.subr.mxu0 0.0
        %1034 = vmatpush1.xpose.msra.mxu0 0.0
        %1035 = vmatprep.subr.mxu0 0.0
        %1036 = vmatpush1.xpose.msra.mxu0 0.0
        %1037 = vmatprep.subr.mxu0 0.0
        %1038 = vmatpush1.xpose.msra.mxu0 0.0
        %1039 = vmatprep.subr.mxu0 0.0
        %1040 = vmatpush1.xpose.msra.mxu0 0.0
        %1041 = vmatprep.subr.mxu0 0.0
        %1042 = vmatpush1.xpose.msra.mxu0 0.0
        %1043 = vmatprep.subr.mxu0 0.0
        %1044 = vmatpush1.xpose.msra.mxu0 0.0
        %1045 = vmatprep.subr.mxu0 0.0
        %1046 = vmatpush1.xpose.msra.mxu0 0.0
        %1047 = vmatprep.subr.mxu0 0.0
        %1048 = vmatpush1.xpose.msra.mxu0 0.0
        %1049 = vmatprep.subr.mxu0 0.0
        %1050 = vmatpush1.xpose.msra.mxu0 0.0
        %1051 = vmatprep.subr.mxu0 0.0
        %1052 = vmatpush1.xpose.msra.mxu0 0.0
        %1053 = vmatprep.subr.mxu0 0.0
        %1054 = vmatpush1.xpose.msra.mxu0 0.0
        %1055 = vmatprep.subr.mxu0 0.0
        %1056 = vmatpush1.xpose.msra.mxu0 0.0
        %1057 = vmatprep.subr.mxu0 0.0
        %1058 = vmatpush1.xpose.msra.mxu0 0.0
        %1059 = vmatprep.subr.mxu0 0.0
        %1060 = vmatpush1.xpose.msra.mxu0 0.0
        %1061 = vmatprep.subr.mxu0 0.0
        %1062 = vmatpush1.xpose.msra.mxu0 0.0
        %1063 = vmatprep.subr.mxu0 0.0
        %1064 = vmatpush1.xpose.msra.mxu0 0.0
        %1065 = vmatprep.subr.mxu0 0.0
        %1066 = vmatpush1.xpose.msra.mxu0 0.0
        %1067 = vmatprep.subr.mxu0 0.0
        %1068 = vmatpush1.xpose.msra.mxu0 0.0
        %1069 = vmatprep.subr.mxu0 0.0
        %1070 = vmatpush1.xpose.msra.mxu0 0.0
        %1071 = vmatprep.subr.mxu0 0.0
        %1072 = vmatpush1.xpose.msra.mxu0 0.0
        %1073 = vmatprep.mubr.f32.mxu0 0.0
        %1074 = vmatmul.mubr.f32.gmra.mrb[0].mxu0 %v999
        %v1075 = vpop.f32.mrb[0].mxu0
        %v1076 = vadd.f32 0.0, %v1075
        %v1077 = vpop.f32.mrb[0].mxu0
        %1078 = vmatprep.mubr.f32.mxu0 0.0
        %1079 = vmatmul.mubr.f32.gmra.mrb[0].mxu0 %v1001
        %v1080 = vpop.f32.mrb[0].mxu0
        %v1081 = vadd.f32 0.0, %v1080
        %v1082 = vpop.f32.mrb[0].mxu0
        %1083 = vdwg.mxu0
        %1084 = vrot.lane.b32.xlu0 %v582, 120
        %v1085 = vpop.permute.xlu0 %1084
        %1086 = vrot.lane.b32.xlu0 %v587, 120
        %v1087 = vpop.permute.xlu0 %1086
        %v1088 = vsel %vm598, %v1085, 0
        %v1090 = vsel %vm598, %v1087, 0
        %v1093 = vsel %vm598, %v988, 0
        %v1096 = vsel %vm598, %v989, 0
        %1098 = vmatprep.subr.mxu0 0.0
        %1099 = vmatpush1.xpose.msra.mxu0 %v1093
        %1100 = vmatprep.subr.mxu0 0.0
        %1101 = vmatpush1.xpose.msra.mxu0 %v1096
        %1102 = vmatprep.subr.mxu0 0.0
        %1103 = vmatpush1.xpose.msra.mxu0 0.0
        %1104 = vmatprep.subr.mxu0 0.0
        %1105 = vmatpush1.xpose.msra.mxu0 0.0
        %1106 = vmatprep.subr.mxu0 0.0
        %1107 = vmatpush1.xpose.msra.mxu0 0.0
        %1108 = vmatprep.subr.mxu0 0.0
        %1109 = vmatpush1.xpose.msra.mxu0 0.0
        %1110 = vmatprep.subr.mxu0 0.0
        %1111 = vmatpush1.xpose.msra.mxu0 0.0
        %1112 = vmatprep.subr.mxu0 0.0
        %1113 = vmatpush1.xpose.msra.mxu0 0.0
        %1114 = vmatprep.subr.mxu0 0.0
        %1115 = vmatpush1.xpose.msra.mxu0 0.0
        %1116 = vmatprep.subr.mxu0 0.0
        %1117 = vmatpush1.xpose.msra.mxu0 0.0
        %1118 = vmatprep.subr.mxu0 0.0
        %1119 = vmatpush1.xpose.msra.mxu0 0.0
        %1120 = vmatprep.subr.mxu0 0.0
        %1121 = vmatpush1.xpose.msra.mxu0 0.0
        %1122 = vmatprep.subr.mxu0 0.0
        %1123 = vmatpush1.xpose.msra.mxu0 0.0
        %1124 = vmatprep.subr.mxu0 0.0
        %1125 = vmatpush1.xpose.msra.mxu0 0.0
        %1126 = vmatprep.subr.mxu0 0.0
        %1127 = vmatpush1.xpose.msra.mxu0 0.0
        %1128 = vmatprep.subr.mxu0 0.0
        %1129 = vmatpush1.xpose.msra.mxu0 0.0
        %1130 = vmatprep.subr.mxu0 0.0
        %1131 = vmatpush1.xpose.msra.mxu0 0.0
        %1132 = vmatprep.subr.mxu0 0.0
        %1133 = vmatpush1.xpose.msra.mxu0 0.0
        %1134 = vmatprep.subr.mxu0 0.0
        %1135 = vmatpush1.xpose.msra.mxu0 0.0
        %1136 = vmatprep.subr.mxu0 0.0
        %1137 = vmatpush1.xpose.msra.mxu0 0.0
        %1138 = vmatprep.subr.mxu0 0.0
        %1139 = vmatpush1.xpose.msra.mxu0 0.0
        %1140 = vmatprep.subr.mxu0 0.0
        %1141 = vmatpush1.xpose.msra.mxu0 0.0
        %1142 = vmatprep.subr.mxu0 0.0
        %1143 = vmatpush1.xpose.msra.mxu0 0.0
        %1144 = vmatprep.subr.mxu0 0.0
        %1145 = vmatpush1.xpose.msra.mxu0 0.0
        %1146 = vmatprep.subr.mxu0 0.0
        %1147 = vmatpush1.xpose.msra.mxu0 0.0
        %1148 = vmatprep.subr.mxu0 0.0
        %1149 = vmatpush1.xpose.msra.mxu0 0.0
        %1150 = vmatprep.subr.mxu0 0.0
        %1151 = vmatpush1.xpose.msra.mxu0 0.0
        %1152 = vmatprep.subr.mxu0 0.0
        %1153 = vmatpush1.xpose.msra.mxu0 0.0
        %1154 = vmatprep.subr.mxu0 0.0
        %1155 = vmatpush1.xpose.msra.mxu0 0.0
        %1156 = vmatprep.subr.mxu0 0.0
        %1157 = vmatpush1.xpose.msra.mxu0 0.0
        %1158 = vmatprep.subr.mxu0 0.0
        %1159 = vmatpush1.xpose.msra.mxu0 0.0
        %1160 = vmatprep.subr.mxu0 0.0
        %1161 = vmatpush1.xpose.msra.mxu0 0.0
        %1162 = vmatprep.mubr.f32.mxu0 0.0
        %1163 = vmatmul.mubr.f32.gmra.mrb[0].mxu0 %v1088
        %v1164 = vpop.f32.mrb[0].mxu0
        %v1165 = vadd.f32 0.0, %v1164
        %v1166 = vpop.f32.mrb[0].mxu0
        %1167 = vmatprep.mubr.f32.mxu0 0.0
        %1168 = vmatmul.mubr.f32.gmra.mrb[0].mxu0 %v1090
        %v1169 = vpop.f32.mrb[0].mxu0
        %v1170 = vadd.f32 0.0, %v1169
        %v1171 = vpop.f32.mrb[0].mxu0
        %1172 = vdwg.mxu0
        %v1173 = vmul.f32 %v1076, 0.35355338
        %v1174 = vmul.f32 %v1081, 0.35355338
        %v1175 = vmul.f32 %v1165, 0.35355338
        %v1176 = vmul.f32 %v1170, 0.35355338
        %v1177 = vsel %vm777, %v1173, -inf
        %1178 = vmax.xlane.f32.xlu0 %v1177
        %v1179 = vpop.xlane.xlu0 %1178
        %v1180 = vsel %vm777, %v1174, -inf
        %1181 = vmax.xlane.f32.xlu0 %v1180
        %v1182 = vpop.xlane.xlu0 %1181
        %v1183 = vsel %vm777, %v1175, -inf
        %1184 = vmax.xlane.f32.xlu0 %v1183
        %v1185 = vpop.xlane.xlu0 %1184
        %v1186 = vsel %vm777, %v1176, -inf
        %1187 = vmax.xlane.f32.xlu0 %v1186
        %v1188 = vpop.xlane.xlu0 %1187
        %v1189 = vsub.f32 %v1173, %v1179
        %v1190 = vsub.f32 %v1174, %v1182
        %v1191 = vsub.f32 %v1175, %v1185
        %v1192 = vsub.f32 %v1176, %v1188
        %v1193 = vmul.f32 %v1189, 1.442695
        %v1194 = vpow.pop %v1193
        %v1195 = vmul.f32 %v1190, 1.442695
        %v1196 = vpow.pop %v1195
        %v1197 = vmul.f32 %v1191, 1.442695
        %v1198 = vpow.pop %v1197
        %v1199 = vmul.f32 %v1192, 1.442695
        %v1200 = vpow.pop %v1199
        %v1201 = vsel %vm777, %v1194, 0.0
        %1202 = vadd.xlane.f32.xlu0 %v1201
        %v1203 = vpop.xlane.xlu0 %1202
        %v1204 = vsel %vm777, %v1196, 0.0
        %1205 = vadd.xlane.f32.xlu0 %v1204
        %v1206 = vpop.xlane.xlu0 %1205
        %v1207 = vsel %vm777, %v1198, 0.0
        %1208 = vadd.xlane.f32.xlu0 %v1207
        %v1209 = vpop.xlane.xlu0 %1208
        %v1210 = vsel %vm777, %v1200, 0.0
        %1211 = vadd.xlane.f32.xlu0 %v1210
        %v1212 = vpop.xlane.xlu0 %1211
        %v1214 = vsel %vm777, %v1194, 0
        %v1217 = vsel %vm777, %v1196, 0
        %1219 = vmatprep.subr.mxu0 0.0
        %1220 = vmatpush1.msra.mxu0 %v991
        %1221 = vmatprep.subr.mxu0 0.0
        %1222 = vmatpush1.msra.mxu0 %v992
        %1223 = vmatprep.subr.mxu0 0.0
        %1224 = vmatpush1.msra.mxu0 0.0
        %1225 = vmatprep.subr.mxu0 0.0
        %1226 = vmatpush1.msra.mxu0 0.0
        %1227 = vmatprep.subr.mxu0 0.0
        %1228 = vmatpush1.msra.mxu0 0.0
        %1229 = vmatprep.subr.mxu0 0.0
        %1230 = vmatpush1.msra.mxu0 0.0
        %1231 = vmatprep.subr.mxu0 0.0
        %1232 = vmatpush1.msra.mxu0 0.0
        %1233 = vmatprep.subr.mxu0 0.0
        %1234 = vmatpush1.msra.mxu0 0.0
        %1235 = vmatprep.subr.mxu0 0.0
        %1236 = vmatpush1.msra.mxu0 0.0
        %1237 = vmatprep.subr.mxu0 0.0
        %1238 = vmatpush1.msra.mxu0 0.0
        %1239 = vmatprep.subr.mxu0 0.0
        %1240 = vmatpush1.msra.mxu0 0.0
        %1241 = vmatprep.subr.mxu0 0.0
        %1242 = vmatpush1.msra.mxu0 0.0
        %1243 = vmatprep.subr.mxu0 0.0
        %1244 = vmatpush1.msra.mxu0 0.0
        %1245 = vmatprep.subr.mxu0 0.0
        %1246 = vmatpush1.msra.mxu0 0.0
        %1247 = vmatprep.subr.mxu0 0.0
        %1248 = vmatpush1.msra.mxu0 0.0
        %1249 = vmatprep.subr.mxu0 0.0
        %1250 = vmatpush1.msra.mxu0 0.0
        %1251 = vmatprep.subr.mxu0 0.0
        %1252 = vmatpush1.msra.mxu0 0.0
        %1253 = vmatprep.subr.mxu0 0.0
        %1254 = vmatpush1.msra.mxu0 0.0
        %1255 = vmatprep.subr.mxu0 0.0
        %1256 = vmatpush1.msra.mxu0 0.0
        %1257 = vmatprep.subr.mxu0 0.0
        %1258 = vmatpush1.msra.mxu0 0.0
        %1259 = vmatprep.subr.mxu0 0.0
        %1260 = vmatpush1.msra.mxu0 0.0
        %1261 = vmatprep.subr.mxu0 0.0
        %1262 = vmatpush1.msra.mxu0 0.0
        %1263 = vmatprep.subr.mxu0 0.0
        %1264 = vmatpush1.msra.mxu0 0.0
        %1265 = vmatprep.subr.mxu0 0.0
        %1266 = vmatpush1.msra.mxu0 0.0
        %1267 = vmatprep.subr.mxu0 0.0
        %1268 = vmatpush1.msra.mxu0 0.0
        %1269 = vmatprep.subr.mxu0 0.0
        %1270 = vmatpush1.msra.mxu0 0.0
        %1271 = vmatprep.subr.mxu0 0.0
        %1272 = vmatpush1.msra.mxu0 0.0
        %1273 = vmatprep.subr.mxu0 0.0
        %1274 = vmatpush1.msra.mxu0 0.0
        %1275 = vmatprep.subr.mxu0 0.0
        %1276 = vmatpush1.msra.mxu0 0.0
        %1277 = vmatprep.subr.mxu0 0.0
        %1278 = vmatpush1.msra.mxu0 0.0
        %1279 = vmatprep.subr.mxu0 0.0
        %1280 = vmatpush1.msra.mxu0 0.0
        %1281 = vmatprep.subr.mxu0 0.0
        %1282 = vmatpush1.msra.mxu0 0.0
        %1283 = vmatprep.mubr.f32.mxu0 0.0
        %1284 = vmatmul.mubr.f32.gmra.mrb[0].mxu0 %v1214
        %v1285 = vpop.f32.mrb[0].mxu0
        %v1286 = vadd.f32 0.0, %v1285
        %v1287 = vpop.f32.mrb[0].mxu0
        %1288 = vmatprep.mubr.f32.mxu0 0.0
        %1289 = vmatmul.mubr.f32.gmra.mrb[0].mxu0 %v1217
        %v1290 = vpop.f32.mrb[0].mxu0
        %v1291 = vadd.f32 0.0, %v1290
        %v1292 = vpop.f32.mrb[0].mxu0
        %1293 = vdwg.mxu0
        %v1295 = vsel %vm777, %v1198, 0
        %v1298 = vsel %vm777, %v1200, 0
        %1300 = vmatprep.subr.mxu0 0.0
        %1301 = vmatpush1.msra.mxu0 %v993
        %1302 = vmatprep.subr.mxu0 0.0
        %1303 = vmatpush1.msra.mxu0 %v994
        %1304 = vmatprep.subr.mxu0 0.0
        %1305 = vmatpush1.msra.mxu0 0.0
        %1306 = vmatprep.subr.mxu0 0.0
        %1307 = vmatpush1.msra.mxu0 0.0
        %1308 = vmatprep.subr.mxu0 0.0
        %1309 = vmatpush1.msra.mxu0 0.0
        %1310 = vmatprep.subr.mxu0 0.0
        %1311 = vmatpush1.msra.mxu0 0.0
        %1312 = vmatprep.subr.mxu0 0.0
        %1313 = vmatpush1.msra.mxu0 0.0
        %1314 = vmatprep.subr.mxu0 0.0
        %1315 = vmatpush1.msra.mxu0 0.0
        %1316 = vmatprep.subr.mxu0 0.0
        %1317 = vmatpush1.msra.mxu0 0.0
        %1318 = vmatprep.subr.mxu0 0.0
        %1319 = vmatpush1.msra.mxu0 0.0
        %1320 = vmatprep.subr.mxu0 0.0
        %1321 = vmatpush1.msra.mxu0 0.0
        %1322 = vmatprep.subr.mxu0 0.0
        %1323 = vmatpush1.msra.mxu0 0.0
        %1324 = vmatprep.subr.mxu0 0.0
        %1325 = vmatpush1.msra.mxu0 0.0
        %1326 = vmatprep.subr.mxu0 0.0
        %1327 = vmatpush1.msra.mxu0 0.0
        %1328 = vmatprep.subr.mxu0 0.0
        %1329 = vmatpush1.msra.mxu0 0.0
        %1330 = vmatprep.subr.mxu0 0.0
        %1331 = vmatpush1.msra.mxu0 0.0
        %1332 = vmatprep.subr.mxu0 0.0
        %1333 = vmatpush1.msra.mxu0 0.0
        %1334 = vmatprep.subr.mxu0 0.0
        %1335 = vmatpush1.msra.mxu0 0.0
        %1336 = vmatprep.subr.mxu0 0.0
        %1337 = vmatpush1.msra.mxu0 0.0
        %1338 = vmatprep.subr.mxu0 0.0
        %1339 = vmatpush1.msra.mxu0 0.0
        %1340 = vmatprep.subr.mxu0 0.0
        %1341 = vmatpush1.msra.mxu0 0.0
        %1342 = vmatprep.subr.mxu0 0.0
        %1343 = vmatpush1.msra.mxu0 0.0
        %1344 = vmatprep.subr.mxu0 0.0
        %1345 = vmatpush1.msra.mxu0 0.0
        %1346 = vmatprep.subr.mxu0 0.0
        %1347 = vmatpush1.msra.mxu0 0.0
        %1348 = vmatprep.subr.mxu0 0.0
        %1349 = vmatpush1.msra.mxu0 0.0
        %1350 = vmatprep.subr.mxu0 0.0
        %1351 = vmatpush1.msra.mxu0 0.0
        %1352 = vmatprep.subr.mxu0 0.0
        %1353 = vmatpush1.msra.mxu0 0.0
        %1354 = vmatprep.subr.mxu0 0.0
        %1355 = vmatpush1.msra.mxu0 0.0
        %1356 = vmatprep.subr.mxu0 0.0
        %1357 = vmatpush1.msra.mxu0 0.0
        %1358 = vmatprep.subr.mxu0 0.0
        %1359 = vmatpush1.msra.mxu0 0.0
        %1360 = vmatprep.subr.mxu0 0.0
        %1361 = vmatpush1.msra.mxu0 0.0
        %1362 = vmatprep.subr.mxu0 0.0
        %1363 = vmatpush1.msra.mxu0 0.0
        %1364 = vmatprep.mubr.f32.mxu0 0.0
        %1365 = vmatmul.mubr.f32.gmra.mrb[0].mxu0 %v1295
        %v1366 = vpop.f32.mrb[0].mxu0
        %v1367 = vadd.f32 0.0, %v1366
        %v1368 = vpop.f32.mrb[0].mxu0
        %1369 = vmatprep.mubr.f32.mxu0 0.0
        %1370 = vmatmul.mubr.f32.gmra.mrb[0].mxu0 %v1298
        %v1371 = vpop.f32.mrb[0].mxu0
        %v1372 = vadd.f32 0.0, %v1371
        %v1373 = vpop.f32.mrb[0].mxu0
        %1374 = vdwg.mxu0
        %v1375 = vrcp.pop %v1203
        %v1376 = vrcp.pop %v1206
        %v1377 = vrcp.pop %v1209
        %v1378 = vrcp.pop %v1212
        %v1379 = vmul.f32 %v1286, %v1375
        %v1380 = vmul.f32 %v1291, %v1376
        %v1381 = vmul.f32 %v1367, %v1377
        %v1382 = vmul.f32 %v1372, %v1378
        %s1383 = scalar_lea.vmem %s5, 8
        %v1384 = vld [vmem:[%s1383] sm:$0xff]
        %v1386 = vsel %vm598, %v1379, 0
        %v1389 = vsel %vm598, %v1380, 0
        %v1392 = vsel %vm598, %v1381, 0
        %v1395 = vsel %vm598, %v1382, 0
        %1397 = vmatprep.subr.mxu0 0.0
        %1398 = vmatpush1.msra.mxu0 %v1384
        %1399 = vmatprep.subr.mxu0 0.0
        %1400 = vmatpush1.msra.mxu0 0.0
        %1401 = vmatprep.subr.mxu0 0.0
        %1402 = vmatpush1.msra.mxu0 0.0
        %1403 = vmatprep.subr.mxu0 0.0
        %1404 = vmatpush1.msra.mxu0 0.0
        %1405 = vmatprep.subr.mxu0 0.0
        %1406 = vmatpush1.msra.mxu0 0.0
        %1407 = vmatprep.subr.mxu0 0.0
        %1408 = vmatpush1.msra.mxu0 0.0
        %1409 = vmatprep.subr.mxu0 0.0
        %1410 = vmatpush1.msra.mxu0 0.0
        %1411 = vmatprep.subr.mxu0 0.0
        %1412 = vmatpush1.msra.mxu0 0.0
        %1413 = vmatprep.subr.mxu0 0.0
        %1414 = vmatpush1.msra.mxu0 0.0
        %1415 = vmatprep.subr.mxu0 0.0
        %1416 = vmatpush1.msra.mxu0 0.0
        %1417 = vmatprep.subr.mxu0 0.0
        %1418 = vmatpush1.msra.mxu0 0.0
        %1419 = vmatprep.subr.mxu0 0.0
        %1420 = vmatpush1.msra.mxu0 0.0
        %1421 = vmatprep.subr.mxu0 0.0
        %1422 = vmatpush1.msra.mxu0 0.0
        %1423 = vmatprep.subr.mxu0 0.0
        %1424 = vmatpush1.msra.mxu0 0.0
        %1425 = vmatprep.subr.mxu0 0.0
        %1426 = vmatpush1.msra.mxu0 0.0
        %1427 = vmatprep.subr.mxu0 0.0
        %1428 = vmatpush1.msra.mxu0 0.0
        %1429 = vmatprep.subr.mxu0 0.0
        %1430 = vmatpush1.msra.mxu0 0.0
        %1431 = vmatprep.subr.mxu0 0.0
        %1432 = vmatpush1.msra.mxu0 0.0
        %1433 = vmatprep.subr.mxu0 0.0
        %1434 = vmatpush1.msra.mxu0 0.0
        %1435 = vmatprep.subr.mxu0 0.0
        %1436 = vmatpush1.msra.mxu0 0.0
        %1437 = vmatprep.subr.mxu0 0.0
        %1438 = vmatpush1.msra.mxu0 0.0
        %1439 = vmatprep.subr.mxu0 0.0
        %1440 = vmatpush1.msra.mxu0 0.0
        %1441 = vmatprep.subr.mxu0 0.0
        %1442 = vmatpush1.msra.mxu0 0.0
        %1443 = vmatprep.subr.mxu0 0.0
        %1444 = vmatpush1.msra.mxu0 0.0
        %1445 = vmatprep.subr.mxu0 0.0
        %1446 = vmatpush1.msra.mxu0 0.0
        %1447 = vmatprep.subr.mxu0 0.0
        %1448 = vmatpush1.msra.mxu0 0.0
        %1449 = vmatprep.subr.mxu0 0.0
        %1450 = vmatpush1.msra.mxu0 0.0
        %1451 = vmatprep.subr.mxu0 0.0
        %1452 = vmatpush1.msra.mxu0 0.0
        %1453 = vmatprep.subr.mxu0 0.0
        %1454 = vmatpush1.msra.mxu0 0.0
        %1455 = vmatprep.subr.mxu0 0.0
        %1456 = vmatpush1.msra.mxu0 0.0
        %1457 = vmatprep.subr.mxu0 0.0
        %1458 = vmatpush1.msra.mxu0 0.0
        %1459 = vmatprep.subr.mxu0 0.0
        %1460 = vmatpush1.msra.mxu0 0.0
        %1461 = vmatprep.mubr.f32.mxu0 0.0
        %1462 = vmatmul.mubr.f32.gmra.mrb[0].mxu0 %v1386
        %v1463 = vpop.f32.mrb[0].mxu0
        %v1464 = vadd.f32 0.0, %v1463
        %v1465 = vpop.f32.mrb[0].mxu0
        %1466 = vmatprep.mubr.f32.mxu0 0.0
        %1467 = vmatmul.mubr.f32.gmra.mrb[0].mxu0 %v1389
        %v1468 = vpop.f32.mrb[0].mxu0
        %v1469 = vadd.f32 0.0, %v1468
        %v1470 = vpop.f32.mrb[0].mxu0
        %1471 = vmatprep.mubr.f32.mxu0 0.0
        %1472 = vmatmul.mubr.f32.gmra.mrb[0].mxu0 %v1392
        %v1473 = vpop.f32.mrb[0].mxu0
        %v1474 = vadd.f32 0.0, %v1473
        %v1475 = vpop.f32.mrb[0].mxu0
        %1476 = vmatprep.mubr.f32.mxu0 0.0
        %1477 = vmatmul.mubr.f32.gmra.mrb[0].mxu0 %v1395
        %v1478 = vpop.f32.mrb[0].mxu0
        %v1479 = vadd.f32 0.0, %v1478
        %v1480 = vpop.f32.mrb[0].mxu0
        %1481 = vdwg.mxu0
        %v1483 = vsel %vm598, %v980, 0
        %v1486 = vsel %vm598, %v981, 0
        %v1489 = vsel %vm598, %v982, 0
        %v1492 = vsel %vm598, %v983, 0
        %1494 = vmatprep.subr.mxu0 0.0
        %1495 = vmatpush1.msra.mxu0 %v984
        %1496 = vmatprep.subr.mxu0 0.0
        %1497 = vmatpush1.msra.mxu0 0.0
        %1498 = vmatprep.subr.mxu0 0.0
        %1499 = vmatpush1.msra.mxu0 0.0
        %1500 = vmatprep.subr.mxu0 0.0
        %1501 = vmatpush1.msra.mxu0 0.0
        %1502 = vmatprep.subr.mxu0 0.0
        %1503 = vmatpush1.msra.mxu0 0.0
        %1504 = vmatprep.subr.mxu0 0.0
        %1505 = vmatpush1.msra.mxu0 0.0
        %1506 = vmatprep.subr.mxu0 0.0
        %1507 = vmatpush1.msra.mxu0 0.0
        %1508 = vmatprep.subr.mxu0 0.0
        %1509 = vmatpush1.msra.mxu0 0.0
        %1510 = vmatprep.subr.mxu0 0.0
        %1511 = vmatpush1.msra.mxu0 0.0
        %1512 = vmatprep.subr.mxu0 0.0
        %1513 = vmatpush1.msra.mxu0 0.0
        %1514 = vmatprep.subr.mxu0 0.0
        %1515 = vmatpush1.msra.mxu0 0.0
        %1516 = vmatprep.subr.mxu0 0.0
        %1517 = vmatpush1.msra.mxu0 0.0
        %1518 = vmatprep.subr.mxu0 0.0
        %1519 = vmatpush1.msra.mxu0 0.0
        %1520 = vmatprep.subr.mxu0 0.0
        %1521 = vmatpush1.msra.mxu0 0.0
        %1522 = vmatprep.subr.mxu0 0.0
        %1523 = vmatpush1.msra.mxu0 0.0
        %1524 = vmatprep.subr.mxu0 0.0
        %1525 = vmatpush1.msra.mxu0 0.0
        %1526 = vmatprep.subr.mxu0 0.0
        %1527 = vmatpush1.msra.mxu0 0.0
        %1528 = vmatprep.subr.mxu0 0.0
        %1529 = vmatpush1.msra.mxu0 0.0
        %1530 = vmatprep.subr.mxu0 0.0
        %1531 = vmatpush1.msra.mxu0 0.0
        %1532 = vmatprep.subr.mxu0 0.0
        %1533 = vmatpush1.msra.mxu0 0.0
        %1534 = vmatprep.subr.mxu0 0.0
        %1535 = vmatpush1.msra.mxu0 0.0
        %1536 = vmatprep.subr.mxu0 0.0
        %1537 = vmatpush1.msra.mxu0 0.0
        %1538 = vmatprep.subr.mxu0 0.0
        %1539 = vmatpush1.msra.mxu0 0.0
        %1540 = vmatprep.subr.mxu0 0.0
        %1541 = vmatpush1.msra.mxu0 0.0
        %1542 = vmatprep.subr.mxu0 0.0
        %1543 = vmatpush1.msra.mxu0 0.0
        %1544 = vmatprep.subr.mxu0 0.0
        %1545 = vmatpush1.msra.mxu0 0.0
        %1546 = vmatprep.subr.mxu0 0.0
        %1547 = vmatpush1.msra.mxu0 0.0
        %1548 = vmatprep.subr.mxu0 0.0
        %1549 = vmatpush1.msra.mxu0 0.0
        %1550 = vmatprep.subr.mxu0 0.0
        %1551 = vmatpush1.msra.mxu0 0.0
        %1552 = vmatprep.subr.mxu0 0.0
        %1553 = vmatpush1.msra.mxu0 0.0
        %1554 = vmatprep.subr.mxu0 0.0
        %1555 = vmatpush1.msra.mxu0 0.0
        %1556 = vmatprep.subr.mxu0 0.0
        %1557 = vmatpush1.msra.mxu0 0.0
        %1558 = vmatprep.mubr.f32.mxu0 0.0
        %1559 = vmatmul.mubr.f32.gmra.mrb[0].mxu0 %v1483
        %v1560 = vpop.f32.mrb[0].mxu0
        %v1561 = vadd.f32 %v1464, %v1560
        %v1562 = vpop.f32.mrb[0].mxu0
        %1563 = vmatprep.mubr.f32.mxu0 0.0
        %1564 = vmatmul.mubr.f32.gmra.mrb[0].mxu0 %v1486
        %v1565 = vpop.f32.mrb[0].mxu0
        %v1566 = vadd.f32 %v1469, %v1565
        %v1567 = vpop.f32.mrb[0].mxu0
        %1568 = vmatprep.mubr.f32.mxu0 0.0
        %1569 = vmatmul.mubr.f32.gmra.mrb[0].mxu0 %v1489
        %v1570 = vpop.f32.mrb[0].mxu0
        %v1571 = vadd.f32 %v1474, %v1570
        %v1572 = vpop.f32.mrb[0].mxu0
        %1573 = vmatprep.mubr.f32.mxu0 0.0
        %1574 = vmatmul.mubr.f32.gmra.mrb[0].mxu0 %v1492
        %v1575 = vpop.f32.mrb[0].mxu0
        %v1576 = vadd.f32 %v1479, %v1575
        %v1577 = vpop.f32.mrb[0].mxu0
        %1578 = vdwg.mxu0
        %s1579 = scalar_lea.vmem %s1, 64
        %v1580 = vld [vmem:[%s1579] sm:$0xff]
        %v1581 = vld [vmem:[%s1579 + $0x8] sm:$0xff]
        %v1582 = vld [vmem:[%s1579 + $0x10] sm:$0xff]
        %v1583 = vld [vmem:[%s1579 + $0x18] sm:$0xff]
        %s1584 = scalar_lea.vmem %s2, 64
        %v1585 = vld [vmem:[%s1584] sm:$0xff]
        %v1586 = vld [vmem:[%s1584 + $0x8] sm:$0xff]
        %v1587 = vld [vmem:[%s1584 + $0x10] sm:$0xff]
        %v1588 = vld [vmem:[%s1584 + $0x18] sm:$0xff]
        %1589 = vrot.lane.b32.xlu0 %v572, 112
        %v1590 = vpop.permute.xlu0 %1589
        %1591 = vrot.lane.b32.xlu0 %v577, 112
        %v1592 = vpop.permute.xlu0 %1591
        %v1593 = vsel %vm598, %v1590, 0
        %v1595 = vsel %vm598, %v1592, 0
        %v1598 = vsel %vm598, %v1580, 0
        %v1601 = vsel %vm598, %v1581, 0
        %1603 = vmatprep.subr.mxu0 0.0
        %1604 = vmatpush1.xpose.msra.mxu0 %v1598
        %1605 = vmatprep.subr.mxu0 0.0
        %1606 = vmatpush1.xpose.msra.mxu0 %v1601
        %1607 = vmatprep.subr.mxu0 0.0
        %1608 = vmatpush1.xpose.msra.mxu0 0.0
        %1609 = vmatprep.subr.mxu0 0.0
        %1610 = vmatpush1.xpose.msra.mxu0 0.0
        %1611 = vmatprep.subr.mxu0 0.0
        %1612 = vmatpush1.xpose.msra.mxu0 0.0
        %1613 = vmatprep.subr.mxu0 0.0
        %1614 = vmatpush1.xpose.msra.mxu0 0.0
        %1615 = vmatprep.subr.mxu0 0.0
        %1616 = vmatpush1.xpose.msra.mxu0 0.0
        %1617 = vmatprep.subr.mxu0 0.0
        %1618 = vmatpush1.xpose.msra.mxu0 0.0
        %1619 = vmatprep.subr.mxu0 0.0
        %1620 = vmatpush1.xpose.msra.mxu0 0.0
        %1621 = vmatprep.subr.mxu0 0.0
        %1622 = vmatpush1.xpose.msra.mxu0 0.0
        %1623 = vmatprep.subr.mxu0 0.0
        %1624 = vmatpush1.xpose.msra.mxu0 0.0
        %1625 = vmatprep.subr.mxu0 0.0
        %1626 = vmatpush1.xpose.msra.mxu0 0.0
        %1627 = vmatprep.subr.mxu0 0.0
        %1628 = vmatpush1.xpose.msra.mxu0 0.0
        %1629 = vmatprep.subr.mxu0 0.0
        %1630 = vmatpush1.xpose.msra.mxu0 0.0
        %1631 = vmatprep.subr.mxu0 0.0
        %1632 = vmatpush1.xpose.msra.mxu0 0.0
        %1633 = vmatprep.subr.mxu0 0.0
        %1634 = vmatpush1.xpose.msra.mxu0 0.0
        %1635 = vmatprep.subr.mxu0 0.0
        %1636 = vmatpush1.xpose.msra.mxu0 0.0
        %1637 = vmatprep.subr.mxu0 0.0
        %1638 = vmatpush1.xpose.msra.mxu0 0.0
        %1639 = vmatprep.subr.mxu0 0.0
        %1640 = vmatpush1.xpose.msra.mxu0 0.0
        %1641 = vmatprep.subr.mxu0 0.0
        %1642 = vmatpush1.xpose.msra.mxu0 0.0
        %1643 = vmatprep.subr.mxu0 0.0
        %1644 = vmatpush1.xpose.msra.mxu0 0.0
        %1645 = vmatprep.subr.mxu0 0.0
        %1646 = vmatpush1.xpose.msra.mxu0 0.0
        %1647 = vmatprep.subr.mxu0 0.0
        %1648 = vmatpush1.xpose.msra.mxu0 0.0
        %1649 = vmatprep.subr.mxu0 0.0
        %1650 = vmatpush1.xpose.msra.mxu0 0.0
        %1651 = vmatprep.subr.mxu0 0.0
        %1652 = vmatpush1.xpose.msra.mxu0 0.0
        %1653 = vmatprep.subr.mxu0 0.0
        %1654 = vmatpush1.xpose.msra.mxu0 0.0
        %1655 = vmatprep.subr.mxu0 0.0
        %1656 = vmatpush1.xpose.msra.mxu0 0.0
        %1657 = vmatprep.subr.mxu0 0.0
        %1658 = vmatpush1.xpose.msra.mxu0 0.0
        %1659 = vmatprep.subr.mxu0 0.0
        %1660 = vmatpush1.xpose.msra.mxu0 0.0
        %1661 = vmatprep.subr.mxu0 0.0
        %1662 = vmatpush1.xpose.msra.mxu0 0.0
        %1663 = vmatprep.subr.mxu0 0.0
        %1664 = vmatpush1.xpose.msra.mxu0 0.0
        %1665 = vmatprep.subr.mxu0 0.0
        %1666 = vmatpush1.xpose.msra.mxu0 0.0
        %1667 = vmatprep.mubr.f32.mxu0 0.0
        %1668 = vmatmul.mubr.f32.gmra.mrb[0].mxu0 %v1593
        %v1669 = vpop.f32.mrb[0].mxu0
        %v1670 = vadd.f32 0.0, %v1669
        %v1671 = vpop.f32.mrb[0].mxu0
        %1672 = vmatprep.mubr.f32.mxu0 0.0
        %1673 = vmatmul.mubr.f32.gmra.mrb[0].mxu0 %v1595
        %v1674 = vpop.f32.mrb[0].mxu0
        %v1675 = vadd.f32 0.0, %v1674
        %v1676 = vpop.f32.mrb[0].mxu0
        %1677 = vdwg.mxu0
        %1678 = vrot.lane.b32.xlu0 %v582, 112
        %v1679 = vpop.permute.xlu0 %1678
        %1680 = vrot.lane.b32.xlu0 %v587, 112
        %v1681 = vpop.permute.xlu0 %1680
        %v1682 = vsel %vm598, %v1679, 0
        %v1684 = vsel %vm598, %v1681, 0
        %v1687 = vsel %vm598, %v1582, 0
        %v1690 = vsel %vm598, %v1583, 0
        %1692 = vmatprep.subr.mxu0 0.0
        %1693 = vmatpush1.xpose.msra.mxu0 %v1687
        %1694 = vmatprep.subr.mxu0 0.0
        %1695 = vmatpush1.xpose.msra.mxu0 %v1690
        %1696 = vmatprep.subr.mxu0 0.0
        %1697 = vmatpush1.xpose.msra.mxu0 0.0
        %1698 = vmatprep.subr.mxu0 0.0
        %1699 = vmatpush1.xpose.msra.mxu0 0.0
        %1700 = vmatprep.subr.mxu0 0.0
        %1701 = vmatpush1.xpose.msra.mxu0 0.0
        %1702 = vmatprep.subr.mxu0 0.0
        %1703 = vmatpush1.xpose.msra.mxu0 0.0
        %1704 = vmatprep.subr.mxu0 0.0
        %1705 = vmatpush1.xpose.msra.mxu0 0.0
        %1706 = vmatprep.subr.mxu0 0.0
        %1707 = vmatpush1.xpose.msra.mxu0 0.0
        %1708 = vmatprep.subr.mxu0 0.0
        %1709 = vmatpush1.xpose.msra.mxu0 0.0
        %1710 = vmatprep.subr.mxu0 0.0
        %1711 = vmatpush1.xpose.msra.mxu0 0.0
        %1712 = vmatprep.subr.mxu0 0.0
        %1713 = vmatpush1.xpose.msra.mxu0 0.0
        %1714 = vmatprep.subr.mxu0 0.0
        %1715 = vmatpush1.xpose.msra.mxu0 0.0
        %1716 = vmatprep.subr.mxu0 0.0
        %1717 = vmatpush1.xpose.msra.mxu0 0.0
        %1718 = vmatprep.subr.mxu0 0.0
        %1719 = vmatpush1.xpose.msra.mxu0 0.0
        %1720 = vmatprep.subr.mxu0 0.0
        %1721 = vmatpush1.xpose.msra.mxu0 0.0
        %1722 = vmatprep.subr.mxu0 0.0
        %1723 = vmatpush1.xpose.msra.mxu0 0.0
        %1724 = vmatprep.subr.mxu0 0.0
        %1725 = vmatpush1.xpose.msra.mxu0 0.0
        %1726 = vmatprep.subr.mxu0 0.0
        %1727 = vmatpush1.xpose.msra.mxu0 0.0
        %1728 = vmatprep.subr.mxu0 0.0
        %1729 = vmatpush1.xpose.msra.mxu0 0.0
        %1730 = vmatprep.subr.mxu0 0.0
        %1731 = vmatpush1.xpose.msra.mxu0 0.0
        %1732 = vmatprep.subr.mxu0 0.0
        %1733 = vmatpush1.xpose.msra.mxu0 0.0
        %1734 = vmatprep.subr.mxu0 0.0
        %1735 = vmatpush1.xpose.msra.mxu0 0.0
        %1736 = vmatprep.subr.mxu0 0.0
        %1737 = vmatpush1.xpose.msra.mxu0 0.0
        %1738 = vmatprep.subr.mxu0 0.0
        %1739 = vmatpush1.xpose.msra.mxu0 0.0
        %1740 = vmatprep.subr.mxu0 0.0
        %1741 = vmatpush1.xpose.msra.mxu0 0.0
        %1742 = vmatprep.subr.mxu0 0.0
        %1743 = vmatpush1.xpose.msra.mxu0 0.0
        %1744 = vmatprep.subr.mxu0 0.0
        %1745 = vmatpush1.xpose.msra.mxu0 0.0
        %1746 = vmatprep.subr.mxu0 0.0
        %1747 = vmatpush1.xpose.msra.mxu0 0.0
        %1748 = vmatprep.subr.mxu0 0.0
        %1749 = vmatpush1.xpose.msra.mxu0 0.0
        %1750 = vmatprep.subr.mxu0 0.0
        %1751 = vmatpush1.xpose.msra.mxu0 0.0
        %1752 = vmatprep.subr.mxu0 0.0
        %1753 = vmatpush1.xpose.msra.mxu0 0.0
        %1754 = vmatprep.subr.mxu0 0.0
        %1755 = vmatpush1.xpose.msra.mxu0 0.0
        %1756 = vmatprep.mubr.f32.mxu0 0.0
        %1757 = vmatmul.mubr.f32.gmra.mrb[0].mxu0 %v1682
        %v1758 = vpop.f32.mrb[0].mxu0
        %v1759 = vadd.f32 0.0, %v1758
        %v1760 = vpop.f32.mrb[0].mxu0
        %1761 = vmatprep.mubr.f32.mxu0 0.0
        %1762 = vmatmul.mubr.f32.gmra.mrb[0].mxu0 %v1684
        %v1763 = vpop.f32.mrb[0].mxu0
        %v1764 = vadd.f32 0.0, %v1763
        %v1765 = vpop.f32.mrb[0].mxu0
        %1766 = vdwg.mxu0
        %v1767 = vmul.f32 %v1670, 0.35355338
        %v1768 = vmul.f32 %v1675, 0.35355338
        %v1769 = vmul.f32 %v1759, 0.35355338
        %v1770 = vmul.f32 %v1764, 0.35355338
        %v1771 = vsel %vm777, %v1767, -inf
        %1772 = vmax.xlane.f32.xlu0 %v1771
        %v1773 = vpop.xlane.xlu0 %1772
        %v1774 = vsel %vm777, %v1768, -inf
        %1775 = vmax.xlane.f32.xlu0 %v1774
        %v1776 = vpop.xlane.xlu0 %1775
        %v1777 = vsel %vm777, %v1769, -inf
        %1778 = vmax.xlane.f32.xlu0 %v1777
        %v1779 = vpop.xlane.xlu0 %1778
        %v1780 = vsel %vm777, %v1770, -inf
        %1781 = vmax.xlane.f32.xlu0 %v1780
        %v1782 = vpop.xlane.xlu0 %1781
        %v1783 = vsub.f32 %v1767, %v1773
        %v1784 = vsub.f32 %v1768, %v1776
        %v1785 = vsub.f32 %v1769, %v1779
        %v1786 = vsub.f32 %v1770, %v1782
        %v1787 = vmul.f32 %v1783, 1.442695
        %v1788 = vpow.pop %v1787
        %v1789 = vmul.f32 %v1784, 1.442695
        %v1790 = vpow.pop %v1789
        %v1791 = vmul.f32 %v1785, 1.442695
        %v1792 = vpow.pop %v1791
        %v1793 = vmul.f32 %v1786, 1.442695
        %v1794 = vpow.pop %v1793
        %v1795 = vsel %vm777, %v1788, 0.0
        %1796 = vadd.xlane.f32.xlu0 %v1795
        %v1797 = vpop.xlane.xlu0 %1796
        %v1798 = vsel %vm777, %v1790, 0.0
        %1799 = vadd.xlane.f32.xlu0 %v1798
        %v1800 = vpop.xlane.xlu0 %1799
        %v1801 = vsel %vm777, %v1792, 0.0
        %1802 = vadd.xlane.f32.xlu0 %v1801
        %v1803 = vpop.xlane.xlu0 %1802
        %v1804 = vsel %vm777, %v1794, 0.0
        %1805 = vadd.xlane.f32.xlu0 %v1804
        %v1806 = vpop.xlane.xlu0 %1805
        %v1808 = vsel %vm777, %v1788, 0
        %v1811 = vsel %vm777, %v1790, 0
        %1813 = vmatprep.subr.mxu0 0.0
        %1814 = vmatpush1.msra.mxu0 %v1585
        %1815 = vmatprep.subr.mxu0 0.0
        %1816 = vmatpush1.msra.mxu0 %v1586
        %1817 = vmatprep.subr.mxu0 0.0
        %1818 = vmatpush1.msra.mxu0 0.0
        %1819 = vmatprep.subr.mxu0 0.0
        %1820 = vmatpush1.msra.mxu0 0.0
        %1821 = vmatprep.subr.mxu0 0.0
        %1822 = vmatpush1.msra.mxu0 0.0
        %1823 = vmatprep.subr.mxu0 0.0
        %1824 = vmatpush1.msra.mxu0 0.0
        %1825 = vmatprep.subr.mxu0 0.0
        %1826 = vmatpush1.msra.mxu0 0.0
        %1827 = vmatprep.subr.mxu0 0.0
        %1828 = vmatpush1.msra.mxu0 0.0
        %1829 = vmatprep.subr.mxu0 0.0
        %1830 = vmatpush1.msra.mxu0 0.0
        %1831 = vmatprep.subr.mxu0 0.0
        %1832 = vmatpush1.msra.mxu0 0.0
        %1833 = vmatprep.subr.mxu0 0.0
        %1834 = vmatpush1.msra.mxu0 0.0
        %1835 = vmatprep.subr.mxu0 0.0
        %1836 = vmatpush1.msra.mxu0 0.0
        %1837 = vmatprep.subr.mxu0 0.0
        %1838 = vmatpush1.msra.mxu0 0.0
        %1839 = vmatprep.subr.mxu0 0.0
        %1840 = vmatpush1.msra.mxu0 0.0
        %1841 = vmatprep.subr.mxu0 0.0
        %1842 = vmatpush1.msra.mxu0 0.0
        %1843 = vmatprep.subr.mxu0 0.0
        %1844 = vmatpush1.msra.mxu0 0.0
        %1845 = vmatprep.subr.mxu0 0.0
        %1846 = vmatpush1.msra.mxu0 0.0
        %1847 = vmatprep.subr.mxu0 0.0
        %1848 = vmatpush1.msra.mxu0 0.0
        %1849 = vmatprep.subr.mxu0 0.0
        %1850 = vmatpush1.msra.mxu0 0.0
        %1851 = vmatprep.subr.mxu0 0.0
        %1852 = vmatpush1.msra.mxu0 0.0
        %1853 = vmatprep.subr.mxu0 0.0
        %1854 = vmatpush1.msra.mxu0 0.0
        %1855 = vmatprep.subr.mxu0 0.0
        %1856 = vmatpush1.msra.mxu0 0.0
        %1857 = vmatprep.subr.mxu0 0.0
        %1858 = vmatpush1.msra.mxu0 0.0
        %1859 = vmatprep.subr.mxu0 0.0
        %1860 = vmatpush1.msra.mxu0 0.0
        %1861 = vmatprep.subr.mxu0 0.0
        %1862 = vmatpush1.msra.mxu0 0.0
        %1863 = vmatprep.subr.mxu0 0.0
        %1864 = vmatpush1.msra.mxu0 0.0
        %1865 = vmatprep.subr.mxu0 0.0
        %1866 = vmatpush1.msra.mxu0 0.0
        %1867 = vmatprep.subr.mxu0 0.0
        %1868 = vmatpush1.msra.mxu0 0.0
        %1869 = vmatprep.subr.mxu0 0.0
        %1870 = vmatpush1.msra.mxu0 0.0
        %1871 = vmatprep.subr.mxu0 0.0
        %1872 = vmatpush1.msra.mxu0 0.0
        %1873 = vmatprep.subr.mxu0 0.0
        %1874 = vmatpush1.msra.mxu0 0.0
        %1875 = vmatprep.subr.mxu0 0.0
        %1876 = vmatpush1.msra.mxu0 0.0
        %1877 = vmatprep.mubr.f32.mxu0 0.0
        %1878 = vmatmul.mubr.f32.gmra.mrb[0].mxu0 %v1808
        %v1879 = vpop.f32.mrb[0].mxu0
        %v1880 = vadd.f32 0.0, %v1879
        %v1881 = vpop.f32.mrb[0].mxu0
        %1882 = vmatprep.mubr.f32.mxu0 0.0
        %1883 = vmatmul.mubr.f32.gmra.mrb[0].mxu0 %v1811
        %v1884 = vpop.f32.mrb[0].mxu0
        %v1885 = vadd.f32 0.0, %v1884
        %v1886 = vpop.f32.mrb[0].mxu0
        %1887 = vdwg.mxu0
        %v1889 = vsel %vm777, %v1792, 0
        %v1892 = vsel %vm777, %v1794, 0
        %1894 = vmatprep.subr.mxu0 0.0
        %1895 = vmatpush1.msra.mxu0 %v1587
        %1896 = vmatprep.subr.mxu0 0.0
        %1897 = vmatpush1.msra.mxu0 %v1588
        %1898 = vmatprep.subr.mxu0 0.0
        %1899 = vmatpush1.msra.mxu0 0.0
        %1900 = vmatprep.subr.mxu0 0.0
        %1901 = vmatpush1.msra.mxu0 0.0
        %1902 = vmatprep.subr.mxu0 0.0
        %1903 = vmatpush1.msra.mxu0 0.0
        %1904 = vmatprep.subr.mxu0 0.0
        %1905 = vmatpush1.msra.mxu0 0.0
        %1906 = vmatprep.subr.mxu0 0.0
        %1907 = vmatpush1.msra.mxu0 0.0
        %1908 = vmatprep.subr.mxu0 0.0
        %1909 = vmatpush1.msra.mxu0 0.0
        %1910 = vmatprep.subr.mxu0 0.0
        %1911 = vmatpush1.msra.mxu0 0.0
        %1912 = vmatprep.subr.mxu0 0.0
        %1913 = vmatpush1.msra.mxu0 0.0
        %1914 = vmatprep.subr.mxu0 0.0
        %1915 = vmatpush1.msra.mxu0 0.0
        %1916 = vmatprep.subr.mxu0 0.0
        %1917 = vmatpush1.msra.mxu0 0.0
        %1918 = vmatprep.subr.mxu0 0.0
        %1919 = vmatpush1.msra.mxu0 0.0
        %1920 = vmatprep.subr.mxu0 0.0
        %1921 = vmatpush1.msra.mxu0 0.0
        %1922 = vmatprep.subr.mxu0 0.0
        %1923 = vmatpush1.msra.mxu0 0.0
        %1924 = vmatprep.subr.mxu0 0.0
        %1925 = vmatpush1.msra.mxu0 0.0
        %1926 = vmatprep.subr.mxu0 0.0
        %1927 = vmatpush1.msra.mxu0 0.0
        %1928 = vmatprep.subr.mxu0 0.0
        %1929 = vmatpush1.msra.mxu0 0.0
        %1930 = vmatprep.subr.mxu0 0.0
        %1931 = vmatpush1.msra.mxu0 0.0
        %1932 = vmatprep.subr.mxu0 0.0
        %1933 = vmatpush1.msra.mxu0 0.0
        %1934 = vmatprep.subr.mxu0 0.0
        %1935 = vmatpush1.msra.mxu0 0.0
        %1936 = vmatprep.subr.mxu0 0.0
        %1937 = vmatpush1.msra.mxu0 0.0
        %1938 = vmatprep.subr.mxu0 0.0
        %1939 = vmatpush1.msra.mxu0 0.0
        %1940 = vmatprep.subr.mxu0 0.0
        %1941 = vmatpush1.msra.mxu0 0.0
        %1942 = vmatprep.subr.mxu0 0.0
        %1943 = vmatpush1.msra.mxu0 0.0
        %1944 = vmatprep.subr.mxu0 0.0
        %1945 = vmatpush1.msra.mxu0 0.0
        %1946 = vmatprep.subr.mxu0 0.0
        %1947 = vmatpush1.msra.mxu0 0.0
        %1948 = vmatprep.subr.mxu0 0.0
        %1949 = vmatpush1.msra.mxu0 0.0
        %1950 = vmatprep.subr.mxu0 0.0
        %1951 = vmatpush1.msra.mxu0 0.0
        %1952 = vmatprep.subr.mxu0 0.0
        %1953 = vmatpush1.msra.mxu0 0.0
        %1954 = vmatprep.subr.mxu0 0.0
        %1955 = vmatpush1.msra.mxu0 0.0
        %1956 = vmatprep.subr.mxu0 0.0
        %1957 = vmatpush1.msra.mxu0 0.0
        %1958 = vmatprep.mubr.f32.mxu0 0.0
        %1959 = vmatmul.mubr.f32.gmra.mrb[0].mxu0 %v1889
        %v1960 = vpop.f32.mrb[0].mxu0
        %v1961 = vadd.f32 0.0, %v1960
        %v1962 = vpop.f32.mrb[0].mxu0
        %1963 = vmatprep.mubr.f32.mxu0 0.0
        %1964 = vmatmul.mubr.f32.gmra.mrb[0].mxu0 %v1892
        %v1965 = vpop.f32.mrb[0].mxu0
        %v1966 = vadd.f32 0.0, %v1965
        %v1967 = vpop.f32.mrb[0].mxu0
        %1968 = vdwg.mxu0
        %v1969 = vrcp.pop %v1797
        %v1970 = vrcp.pop %v1800
        %v1971 = vrcp.pop %v1803
        %v1972 = vrcp.pop %v1806
        %v1973 = vmul.f32 %v1880, %v1969
        %v1974 = vmul.f32 %v1885, %v1970
        %v1975 = vmul.f32 %v1961, %v1971
        %v1976 = vmul.f32 %v1966, %v1972
        %s1977 = scalar_lea.vmem %s5, 16
        %v1978 = vld [vmem:[%s1977] sm:$0xff]
        %v1980 = vsel %vm598, %v1973, 0
        %v1983 = vsel %vm598, %v1974, 0
        %v1986 = vsel %vm598, %v1975, 0
        %v1989 = vsel %vm598, %v1976, 0
        %1991 = vmatprep.subr.mxu0 0.0
        %1992 = vmatpush1.msra.mxu0 %v1978
        %1993 = vmatprep.subr.mxu0 0.0
        %1994 = vmatpush1.msra.mxu0 0.0
        %1995 = vmatprep.subr.mxu0 0.0
        %1996 = vmatpush1.msra.mxu0 0.0
        %1997 = vmatprep.subr.mxu0 0.0
        %1998 = vmatpush1.msra.mxu0 0.0
        %1999 = vmatprep.subr.mxu0 0.0
        %2000 = vmatpush1.msra.mxu0 0.0
        %2001 = vmatprep.subr.mxu0 0.0
        %2002 = vmatpush1.msra.mxu0 0.0
        %2003 = vmatprep.subr.mxu0 0.0
        %2004 = vmatpush1.msra.mxu0 0.0
        %2005 = vmatprep.subr.mxu0 0.0
        %2006 = vmatpush1.msra.mxu0 0.0
        %2007 = vmatprep.subr.mxu0 0.0
        %2008 = vmatpush1.msra.mxu0 0.0
        %2009 = vmatprep.subr.mxu0 0.0
        %2010 = vmatpush1.msra.mxu0 0.0
        %2011 = vmatprep.subr.mxu0 0.0
        %2012 = vmatpush1.msra.mxu0 0.0
        %2013 = vmatprep.subr.mxu0 0.0
        %2014 = vmatpush1.msra.mxu0 0.0
        %2015 = vmatprep.subr.mxu0 0.0
        %2016 = vmatpush1.msra.mxu0 0.0
        %2017 = vmatprep.subr.mxu0 0.0
        %2018 = vmatpush1.msra.mxu0 0.0
        %2019 = vmatprep.subr.mxu0 0.0
        %2020 = vmatpush1.msra.mxu0 0.0
        %2021 = vmatprep.subr.mxu0 0.0
        %2022 = vmatpush1.msra.mxu0 0.0
        %2023 = vmatprep.subr.mxu0 0.0
        %2024 = vmatpush1.msra.mxu0 0.0
        %2025 = vmatprep.subr.mxu0 0.0
        %2026 = vmatpush1.msra.mxu0 0.0
        %2027 = vmatprep.subr.mxu0 0.0
        %2028 = vmatpush1.msra.mxu0 0.0
        %2029 = vmatprep.subr.mxu0 0.0
        %2030 = vmatpush1.msra.mxu0 0.0
        %2031 = vmatprep.subr.mxu0 0.0
        %2032 = vmatpush1.msra.mxu0 0.0
        %2033 = vmatprep.subr.mxu0 0.0
        %2034 = vmatpush1.msra.mxu0 0.0
        %2035 = vmatprep.subr.mxu0 0.0
        %2036 = vmatpush1.msra.mxu0 0.0
        %2037 = vmatprep.subr.mxu0 0.0
        %2038 = vmatpush1.msra.mxu0 0.0
        %2039 = vmatprep.subr.mxu0 0.0
        %2040 = vmatpush1.msra.mxu0 0.0
        %2041 = vmatprep.subr.mxu0 0.0
        %2042 = vmatpush1.msra.mxu0 0.0
        %2043 = vmatprep.subr.mxu0 0.0
        %2044 = vmatpush1.msra.mxu0 0.0
        %2045 = vmatprep.subr.mxu0 0.0
        %2046 = vmatpush1.msra.mxu0 0.0
        %2047 = vmatprep.subr.mxu0 0.0
        %2048 = vmatpush1.msra.mxu0 0.0
        %2049 = vmatprep.subr.mxu0 0.0
        %2050 = vmatpush1.msra.mxu0 0.0
        %2051 = vmatprep.subr.mxu0 0.0
        %2052 = vmatpush1.msra.mxu0 0.0
        %2053 = vmatprep.subr.mxu0 0.0
        %2054 = vmatpush1.msra.mxu0 0.0
        %2055 = vmatprep.mubr.f32.mxu0 0.0
        %2056 = vmatmul.mubr.f32.gmra.mrb[0].mxu0 %v1980
        %v2057 = vpop.f32.mrb[0].mxu0
        %v2058 = vadd.f32 0.0, %v2057
        %v2059 = vpop.f32.mrb[0].mxu0
        %2060 = vmatprep.mubr.f32.mxu0 0.0
        %2061 = vmatmul.mubr.f32.gmra.mrb[0].mxu0 %v1983
        %v2062 = vpop.f32.mrb[0].mxu0
        %v2063 = vadd.f32 0.0, %v2062
        %v2064 = vpop.f32.mrb[0].mxu0
        %2065 = vmatprep.mubr.f32.mxu0 0.0
        %2066 = vmatmul.mubr.f32.gmra.mrb[0].mxu0 %v1986
        %v2067 = vpop.f32.mrb[0].mxu0
        %v2068 = vadd.f32 0.0, %v2067
        %v2069 = vpop.f32.mrb[0].mxu0
        %2070 = vmatprep.mubr.f32.mxu0 0.0
        %2071 = vmatmul.mubr.f32.gmra.mrb[0].mxu0 %v1989
        %v2072 = vpop.f32.mrb[0].mxu0
        %v2073 = vadd.f32 0.0, %v2072
        %v2074 = vpop.f32.mrb[0].mxu0
        %2075 = vdwg.mxu0
        %v2076 = vadd.f32 %v1561, %v2058
        %v2077 = vadd.f32 %v1566, %v2063
        %v2078 = vadd.f32 %v1571, %v2068
        %v2079 = vadd.f32 %v1576, %v2073
        %s2080 = scalar_lea.vmem %s1, 96
        %v2081 = vld [vmem:[%s2080] sm:$0xff]
        %v2082 = vld [vmem:[%s2080 + $0x8] sm:$0xff]
        %v2083 = vld [vmem:[%s2080 + $0x10] sm:$0xff]
        %v2084 = vld [vmem:[%s2080 + $0x18] sm:$0xff]
        %s2085 = scalar_lea.vmem %s2, 96
        %v2086 = vld [vmem:[%s2085] sm:$0xff]
        %v2087 = vld [vmem:[%s2085 + $0x8] sm:$0xff]
        %v2088 = vld [vmem:[%s2085 + $0x10] sm:$0xff]
        %v2089 = vld [vmem:[%s2085 + $0x18] sm:$0xff]
        %2090 = vrot.lane.b32.xlu0 %v572, 104
        %v2091 = vpop.permute.xlu0 %2090
        %2092 = vrot.lane.b32.xlu0 %v577, 104
        %v2093 = vpop.permute.xlu0 %2092
        %v2094 = vsel %vm598, %v2091, 0
        %v2096 = vsel %vm598, %v2093, 0
        %v2099 = vsel %vm598, %v2081, 0
        %v2102 = vsel %vm598, %v2082, 0
        %2104 = vmatprep.subr.mxu0 0.0
        %2105 = vmatpush1.xpose.msra.mxu0 %v2099
        %2106 = vmatprep.subr.mxu0 0.0
        %2107 = vmatpush1.xpose.msra.mxu0 %v2102
        %2108 = vmatprep.subr.mxu0 0.0
        %2109 = vmatpush1.xpose.msra.mxu0 0.0
        %2110 = vmatprep.subr.mxu0 0.0
        %2111 = vmatpush1.xpose.msra.mxu0 0.0
        %2112 = vmatprep.subr.mxu0 0.0
        %2113 = vmatpush1.xpose.msra.mxu0 0.0
        %2114 = vmatprep.subr.mxu0 0.0
        %2115 = vmatpush1.xpose.msra.mxu0 0.0
        %2116 = vmatprep.subr.mxu0 0.0
        %2117 = vmatpush1.xpose.msra.mxu0 0.0
        %2118 = vmatprep.subr.mxu0 0.0
        %2119 = vmatpush1.xpose.msra.mxu0 0.0
        %2120 = vmatprep.subr.mxu0 0.0
        %2121 = vmatpush1.xpose.msra.mxu0 0.0
        %2122 = vmatprep.subr.mxu0 0.0
        %2123 = vmatpush1.xpose.msra.mxu0 0.0
        %2124 = vmatprep.subr.mxu0 0.0
        %2125 = vmatpush1.xpose.msra.mxu0 0.0
        %2126 = vmatprep.subr.mxu0 0.0
        %2127 = vmatpush1.xpose.msra.mxu0 0.0
        %2128 = vmatprep.subr.mxu0 0.0
        %2129 = vmatpush1.xpose.msra.mxu0 0.0
        %2130 = vmatprep.subr.mxu0 0.0
        %2131 = vmatpush1.xpose.msra.mxu0 0.0
        %2132 = vmatprep.subr.mxu0 0.0
        %2133 = vmatpush1.xpose.msra.mxu0 0.0
        %2134 = vmatprep.subr.mxu0 0.0
        %2135 = vmatpush1.xpose.msra.mxu0 0.0
        %2136 = vmatprep.subr.mxu0 0.0
        %2137 = vmatpush1.xpose.msra.mxu0 0.0
        %2138 = vmatprep.subr.mxu0 0.0
        %2139 = vmatpush1.xpose.msra.mxu0 0.0
        %2140 = vmatprep.subr.mxu0 0.0
        %2141 = vmatpush1.xpose.msra.mxu0 0.0
        %2142 = vmatprep.subr.mxu0 0.0
        %2143 = vmatpush1.xpose.msra.mxu0 0.0
        %2144 = vmatprep.subr.mxu0 0.0
        %2145 = vmatpush1.xpose.msra.mxu0 0.0
        %2146 = vmatprep.subr.mxu0 0.0
        %2147 = vmatpush1.xpose.msra.mxu0 0.0
        %2148 = vmatprep.subr.mxu0 0.0
        %2149 = vmatpush1.xpose.msra.mxu0 0.0
        %2150 = vmatprep.subr.mxu0 0.0
        %2151 = vmatpush1.xpose.msra.mxu0 0.0
        %2152 = vmatprep.subr.mxu0 0.0
        %2153 = vmatpush1.xpose.msra.mxu0 0.0
        %2154 = vmatprep.subr.mxu0 0.0
        %2155 = vmatpush1.xpose.msra.mxu0 0.0
        %2156 = vmatprep.subr.mxu0 0.0
        %2157 = vmatpush1.xpose.msra.mxu0 0.0
        %2158 = vmatprep.subr.mxu0 0.0
        %2159 = vmatpush1.xpose.msra.mxu0 0.0
        %2160 = vmatprep.subr.mxu0 0.0
        %2161 = vmatpush1.xpose.msra.mxu0 0.0
        %2162 = vmatprep.subr.mxu0 0.0
        %2163 = vmatpush1.xpose.msra.mxu0 0.0
        %2164 = vmatprep.subr.mxu0 0.0
        %2165 = vmatpush1.xpose.msra.mxu0 0.0
        %2166 = vmatprep.subr.mxu0 0.0
        %2167 = vmatpush1.xpose.msra.mxu0 0.0
        %2168 = vmatprep.mubr.f32.mxu0 0.0
        %2169 = vmatmul.mubr.f32.gmra.mrb[0].mxu0 %v2094
        %v2170 = vpop.f32.mrb[0].mxu0
        %v2171 = vadd.f32 0.0, %v2170
        %v2172 = vpop.f32.mrb[0].mxu0
        %2173 = vmatprep.mubr.f32.mxu0 0.0
        %2174 = vmatmul.mubr.f32.gmra.mrb[0].mxu0 %v2096
        %v2175 = vpop.f32.mrb[0].mxu0
        %v2176 = vadd.f32 0.0, %v2175
        %v2177 = vpop.f32.mrb[0].mxu0
        %2178 = vdwg.mxu0
        %2179 = vrot.lane.b32.xlu0 %v582, 104
        %v2180 = vpop.permute.xlu0 %2179
        %2181 = vrot.lane.b32.xlu0 %v587, 104
        %v2182 = vpop.permute.xlu0 %2181
        %v2183 = vsel %vm598, %v2180, 0
        %v2185 = vsel %vm598, %v2182, 0
        %v2188 = vsel %vm598, %v2083, 0
        %v2191 = vsel %vm598, %v2084, 0
        %2193 = vmatprep.subr.mxu0 0.0
        %2194 = vmatpush1.xpose.msra.mxu0 %v2188
        %2195 = vmatprep.subr.mxu0 0.0
        %2196 = vmatpush1.xpose.msra.mxu0 %v2191
        %2197 = vmatprep.subr.mxu0 0.0
        %2198 = vmatpush1.xpose.msra.mxu0 0.0
        %2199 = vmatprep.subr.mxu0 0.0
        %2200 = vmatpush1.xpose.msra.mxu0 0.0
        %2201 = vmatprep.subr.mxu0 0.0
        %2202 = vmatpush1.xpose.msra.mxu0 0.0
        %2203 = vmatprep.subr.mxu0 0.0
        %2204 = vmatpush1.xpose.msra.mxu0 0.0
        %2205 = vmatprep.subr.mxu0 0.0
        %2206 = vmatpush1.xpose.msra.mxu0 0.0
        %2207 = vmatprep.subr.mxu0 0.0
        %2208 = vmatpush1.xpose.msra.mxu0 0.0
        %2209 = vmatprep.subr.mxu0 0.0
        %2210 = vmatpush1.xpose.msra.mxu0 0.0
        %2211 = vmatprep.subr.mxu0 0.0
        %2212 = vmatpush1.xpose.msra.mxu0 0.0
        %2213 = vmatprep.subr.mxu0 0.0
        %2214 = vmatpush1.xpose.msra.mxu0 0.0
        %2215 = vmatprep.subr.mxu0 0.0
        %2216 = vmatpush1.xpose.msra.mxu0 0.0
        %2217 = vmatprep.subr.mxu0 0.0
        %2218 = vmatpush1.xpose.msra.mxu0 0.0
        %2219 = vmatprep.subr.mxu0 0.0
        %2220 = vmatpush1.xpose.msra.mxu0 0.0
        %2221 = vmatprep.subr.mxu0 0.0
        %2222 = vmatpush1.xpose.msra.mxu0 0.0
        %2223 = vmatprep.subr.mxu0 0.0
        %2224 = vmatpush1.xpose.msra.mxu0 0.0
        %2225 = vmatprep.subr.mxu0 0.0
        %2226 = vmatpush1.xpose.msra.mxu0 0.0
        %2227 = vmatprep.subr.mxu0 0.0
        %2228 = vmatpush1.xpose.msra.mxu0 0.0
        %2229 = vmatprep.subr.mxu0 0.0
        %2230 = vmatpush1.xpose.msra.mxu0 0.0
        %2231 = vmatprep.subr.mxu0 0.0
        %2232 = vmatpush1.xpose.msra.mxu0 0.0
        %2233 = vmatprep.subr.mxu0 0.0
        %2234 = vmatpush1.xpose.msra.mxu0 0.0
        %2235 = vmatprep.subr.mxu0 0.0
        %2236 = vmatpush1.xpose.msra.mxu0 0.0
        %2237 = vmatprep.subr.mxu0 0.0
        %2238 = vmatpush1.xpose.msra.mxu0 0.0
        %2239 = vmatprep.subr.mxu0 0.0
        %2240 = vmatpush1.xpose.msra.mxu0 0.0
        %2241 = vmatprep.subr.mxu0 0.0
        %2242 = vmatpush1.xpose.msra.mxu0 0.0
        %2243 = vmatprep.subr.mxu0 0.0
        %2244 = vmatpush1.xpose.msra.mxu0 0.0
        %2245 = vmatprep.subr.mxu0 0.0
        %2246 = vmatpush1.xpose.msra.mxu0 0.0
        %2247 = vmatprep.subr.mxu0 0.0
        %2248 = vmatpush1.xpose.msra.mxu0 0.0
        %2249 = vmatprep.subr.mxu0 0.0
        %2250 = vmatpush1.xpose.msra.mxu0 0.0
        %2251 = vmatprep.subr.mxu0 0.0
        %2252 = vmatpush1.xpose.msra.mxu0 0.0
        %2253 = vmatprep.subr.mxu0 0.0
        %2254 = vmatpush1.xpose.msra.mxu0 0.0
        %2255 = vmatprep.subr.mxu0 0.0
        %2256 = vmatpush1.xpose.msra.mxu0 0.0
        %2257 = vmatprep.mubr.f32.mxu0 0.0
        %2258 = vmatmul.mubr.f32.gmra.mrb[0].mxu0 %v2183
        %v2259 = vpop.f32.mrb[0].mxu0
        %v2260 = vadd.f32 0.0, %v2259
        %v2261 = vpop.f32.mrb[0].mxu0
        %2262 = vmatprep.mubr.f32.mxu0 0.0
        %2263 = vmatmul.mubr.f32.gmra.mrb[0].mxu0 %v2185
        %v2264 = vpop.f32.mrb[0].mxu0
        %v2265 = vadd.f32 0.0, %v2264
        %v2266 = vpop.f32.mrb[0].mxu0
        %2267 = vdwg.mxu0
        %v2268 = vmul.f32 %v2171, 0.35355338
        %v2269 = vmul.f32 %v2176, 0.35355338
        %v2270 = vmul.f32 %v2260, 0.35355338
        %v2271 = vmul.f32 %v2265, 0.35355338
        %v2272 = vsel %vm777, %v2268, -inf
        %2273 = vmax.xlane.f32.xlu0 %v2272
        %v2274 = vpop.xlane.xlu0 %2273
        %v2275 = vsel %vm777, %v2269, -inf
        %2276 = vmax.xlane.f32.xlu0 %v2275
        %v2277 = vpop.xlane.xlu0 %2276
        %v2278 = vsel %vm777, %v2270, -inf
        %2279 = vmax.xlane.f32.xlu0 %v2278
        %v2280 = vpop.xlane.xlu0 %2279
        %v2281 = vsel %vm777, %v2271, -inf
        %2282 = vmax.xlane.f32.xlu0 %v2281
        %v2283 = vpop.xlane.xlu0 %2282
        %v2284 = vsub.f32 %v2268, %v2274
        %v2285 = vsub.f32 %v2269, %v2277
        %v2286 = vsub.f32 %v2270, %v2280
        %v2287 = vsub.f32 %v2271, %v2283
        %v2288 = vmul.f32 %v2284, 1.442695
        %v2289 = vpow.pop %v2288
        %v2290 = vmul.f32 %v2285, 1.442695
        %v2291 = vpow.pop %v2290
        %v2292 = vmul.f32 %v2286, 1.442695
        %v2293 = vpow.pop %v2292
        %v2294 = vmul.f32 %v2287, 1.442695
        %v2295 = vpow.pop %v2294
        %v2296 = vsel %vm777, %v2289, 0.0
        %2297 = vadd.xlane.f32.xlu0 %v2296
        %v2298 = vpop.xlane.xlu0 %2297
        %v2299 = vsel %vm777, %v2291, 0.0
        %2300 = vadd.xlane.f32.xlu0 %v2299
        %v2301 = vpop.xlane.xlu0 %2300
        %v2302 = vsel %vm777, %v2293, 0.0
        %2303 = vadd.xlane.f32.xlu0 %v2302
        %v2304 = vpop.xlane.xlu0 %2303
        %v2305 = vsel %vm777, %v2295, 0.0
        %2306 = vadd.xlane.f32.xlu0 %v2305
        %v2307 = vpop.xlane.xlu0 %2306
        %v2309 = vsel %vm777, %v2289, 0
        %v2312 = vsel %vm777, %v2291, 0
        %2314 = vmatprep.subr.mxu0 0.0
        %2315 = vmatpush1.msra.mxu0 %v2086
        %2316 = vmatprep.subr.mxu0 0.0
        %2317 = vmatpush1.msra.mxu0 %v2087
        %2318 = vmatprep.subr.mxu0 0.0
        %2319 = vmatpush1.msra.mxu0 0.0
        %2320 = vmatprep.subr.mxu0 0.0
        %2321 = vmatpush1.msra.mxu0 0.0
        %2322 = vmatprep.subr.mxu0 0.0
        %2323 = vmatpush1.msra.mxu0 0.0
        %2324 = vmatprep.subr.mxu0 0.0
        %2325 = vmatpush1.msra.mxu0 0.0
        %2326 = vmatprep.subr.mxu0 0.0
        %2327 = vmatpush1.msra.mxu0 0.0
        %2328 = vmatprep.subr.mxu0 0.0
        %2329 = vmatpush1.msra.mxu0 0.0
        %2330 = vmatprep.subr.mxu0 0.0
        %2331 = vmatpush1.msra.mxu0 0.0
        %2332 = vmatprep.subr.mxu0 0.0
        %2333 = vmatpush1.msra.mxu0 0.0
        %2334 = vmatprep.subr.mxu0 0.0
        %2335 = vmatpush1.msra.mxu0 0.0
        %2336 = vmatprep.subr.mxu0 0.0
        %2337 = vmatpush1.msra.mxu0 0.0
        %2338 = vmatprep.subr.mxu0 0.0
        %2339 = vmatpush1.msra.mxu0 0.0
        %2340 = vmatprep.subr.mxu0 0.0
        %2341 = vmatpush1.msra.mxu0 0.0
        %2342 = vmatprep.subr.mxu0 0.0
        %2343 = vmatpush1.msra.mxu0 0.0
        %2344 = vmatprep.subr.mxu0 0.0
        %2345 = vmatpush1.msra.mxu0 0.0
        %2346 = vmatprep.subr.mxu0 0.0
        %2347 = vmatpush1.msra.mxu0 0.0
        %2348 = vmatprep.subr.mxu0 0.0
        %2349 = vmatpush1.msra.mxu0 0.0
        %2350 = vmatprep.subr.mxu0 0.0
        %2351 = vmatpush1.msra.mxu0 0.0
        %2352 = vmatprep.subr.mxu0 0.0
        %2353 = vmatpush1.msra.mxu0 0.0
        %2354 = vmatprep.subr.mxu0 0.0
        %2355 = vmatpush1.msra.mxu0 0.0
        %2356 = vmatprep.subr.mxu0 0.0
        %2357 = vmatpush1.msra.mxu0 0.0
        %2358 = vmatprep.subr.mxu0 0.0
        %2359 = vmatpush1.msra.mxu0 0.0
        %2360 = vmatprep.subr.mxu0 0.0
        %2361 = vmatpush1.msra.mxu0 0.0
        %2362 = vmatprep.subr.mxu0 0.0
        %2363 = vmatpush1.msra.mxu0 0.0
        %2364 = vmatprep.subr.mxu0 0.0
        %2365 = vmatpush1.msra.mxu0 0.0
        %2366 = vmatprep.subr.mxu0 0.0
        %2367 = vmatpush1.msra.mxu0 0.0
        %2368 = vmatprep.subr.mxu0 0.0
        %2369 = vmatpush1.msra.mxu0 0.0
        %2370 = vmatprep.subr.mxu0 0.0
        %2371 = vmatpush1.msra.mxu0 0.0
        %2372 = vmatprep.subr.mxu0 0.0
        %2373 = vmatpush1.msra.mxu0 0.0
        %2374 = vmatprep.subr.mxu0 0.0
        %2375 = vmatpush1.msra.mxu0 0.0
        %2376 = vmatprep.subr.mxu0 0.0
        %2377 = vmatpush1.msra.mxu0 0.0
        %2378 = vmatprep.mubr.f32.mxu0 0.0
        %2379 = vmatmul.mubr.f32.gmra.mrb[0].mxu0 %v2309
        %v2380 = vpop.f32.mrb[0].mxu0
        %v2381 = vadd.f32 0.0, %v2380
        %v2382 = vpop.f32.mrb[0].mxu0
        %2383 = vmatprep.mubr.f32.mxu0 0.0
        %2384 = vmatmul.mubr.f32.gmra.mrb[0].mxu0 %v2312
        %v2385 = vpop.f32.mrb[0].mxu0
        %v2386 = vadd.f32 0.0, %v2385
        %v2387 = vpop.f32.mrb[0].mxu0
        %2388 = vdwg.mxu0
        %v2390 = vsel %vm777, %v2293, 0
        %v2393 = vsel %vm777, %v2295, 0
        %2395 = vmatprep.subr.mxu0 0.0
        %2396 = vmatpush1.msra.mxu0 %v2088
        %2397 = vmatprep.subr.mxu0 0.0
        %2398 = vmatpush1.msra.mxu0 %v2089
        %2399 = vmatprep.subr.mxu0 0.0
        %2400 = vmatpush1.msra.mxu0 0.0
        %2401 = vmatprep.subr.mxu0 0.0
        %2402 = vmatpush1.msra.mxu0 0.0
        %2403 = vmatprep.subr.mxu0 0.0
        %2404 = vmatpush1.msra.mxu0 0.0
        %2405 = vmatprep.subr.mxu0 0.0
        %2406 = vmatpush1.msra.mxu0 0.0
        %2407 = vmatprep.subr.mxu0 0.0
        %2408 = vmatpush1.msra.mxu0 0.0
        %2409 = vmatprep.subr.mxu0 0.0
        %2410 = vmatpush1.msra.mxu0 0.0
        %2411 = vmatprep.subr.mxu0 0.0
        %2412 = vmatpush1.msra.mxu0 0.0
        %2413 = vmatprep.subr.mxu0 0.0
        %2414 = vmatpush1.msra.mxu0 0.0
        %2415 = vmatprep.subr.mxu0 0.0
        %2416 = vmatpush1.msra.mxu0 0.0
        %2417 = vmatprep.subr.mxu0 0.0
        %2418 = vmatpush1.msra.mxu0 0.0
        %2419 = vmatprep.subr.mxu0 0.0
        %2420 = vmatpush1.msra.mxu0 0.0
        %2421 = vmatprep.subr.mxu0 0.0
        %2422 = vmatpush1.msra.mxu0 0.0
        %2423 = vmatprep.subr.mxu0 0.0
        %2424 = vmatpush1.msra.mxu0 0.0
        %2425 = vmatprep.subr.mxu0 0.0
        %2426 = vmatpush1.msra.mxu0 0.0
        %2427 = vmatprep.subr.mxu0 0.0
        %2428 = vmatpush1.msra.mxu0 0.0
        %2429 = vmatprep.subr.mxu0 0.0
        %2430 = vmatpush1.msra.mxu0 0.0
        %2431 = vmatprep.subr.mxu0 0.0
        %2432 = vmatpush1.msra.mxu0 0.0
        %2433 = vmatprep.subr.mxu0 0.0
        %2434 = vmatpush1.msra.mxu0 0.0
        %2435 = vmatprep.subr.mxu0 0.0
        %2436 = vmatpush1.msra.mxu0 0.0
        %2437 = vmatprep.subr.mxu0 0.0
        %2438 = vmatpush1.msra.mxu0 0.0
        %2439 = vmatprep.subr.mxu0 0.0
        %2440 = vmatpush1.msra.mxu0 0.0
        %2441 = vmatprep.subr.mxu0 0.0
        %2442 = vmatpush1.msra.mxu0 0.0
        %2443 = vmatprep.subr.mxu0 0.0
        %2444 = vmatpush1.msra.mxu0 0.0
        %2445 = vmatprep.subr.mxu0 0.0
        %2446 = vmatpush1.msra.mxu0 0.0
        %2447 = vmatprep.subr.mxu0 0.0
        %2448 = vmatpush1.msra.mxu0 0.0
        %2449 = vmatprep.subr.mxu0 0.0
        %2450 = vmatpush1.msra.mxu0 0.0
        %2451 = vmatprep.subr.mxu0 0.0
        %2452 = vmatpush1.msra.mxu0 0.0
        %2453 = vmatprep.subr.mxu0 0.0
        %2454 = vmatpush1.msra.mxu0 0.0
        %2455 = vmatprep.subr.mxu0 0.0
        %2456 = vmatpush1.msra.mxu0 0.0
        %2457 = vmatprep.subr.mxu0 0.0
        %2458 = vmatpush1.msra.mxu0 0.0
        %2459 = vmatprep.mubr.f32.mxu0 0.0
        %2460 = vmatmul.mubr.f32.gmra.mrb[0].mxu0 %v2390
        %v2461 = vpop.f32.mrb[0].mxu0
        %v2462 = vadd.f32 0.0, %v2461
        %v2463 = vpop.f32.mrb[0].mxu0
        %2464 = vmatprep.mubr.f32.mxu0 0.0
        %2465 = vmatmul.mubr.f32.gmra.mrb[0].mxu0 %v2393
        %v2466 = vpop.f32.mrb[0].mxu0
        %v2467 = vadd.f32 0.0, %v2466
        %v2468 = vpop.f32.mrb[0].mxu0
        %2469 = vdwg.mxu0
        %v2470 = vrcp.pop %v2298
        %v2471 = vrcp.pop %v2301
        %v2472 = vrcp.pop %v2304
        %v2473 = vrcp.pop %v2307
        %v2474 = vmul.f32 %v2381, %v2470
        %v2475 = vmul.f32 %v2386, %v2471
        %v2476 = vmul.f32 %v2462, %v2472
        %v2477 = vmul.f32 %v2467, %v2473
        %s2478 = scalar_lea.vmem %s5, 24
        %v2479 = vld [vmem:[%s2478] sm:$0xff]
        %v2481 = vsel %vm598, %v2474, 0
        %v2484 = vsel %vm598, %v2475, 0
        %v2487 = vsel %vm598, %v2476, 0
        %v2490 = vsel %vm598, %v2477, 0
        %2492 = vmatprep.subr.mxu0 0.0
        %2493 = vmatpush1.msra.mxu0 %v2479
        %2494 = vmatprep.subr.mxu0 0.0
        %2495 = vmatpush1.msra.mxu0 0.0
        %2496 = vmatprep.subr.mxu0 0.0
        %2497 = vmatpush1.msra.mxu0 0.0
        %2498 = vmatprep.subr.mxu0 0.0
        %2499 = vmatpush1.msra.mxu0 0.0
        %2500 = vmatprep.subr.mxu0 0.0
        %2501 = vmatpush1.msra.mxu0 0.0
        %2502 = vmatprep.subr.mxu0 0.0
        %2503 = vmatpush1.msra.mxu0 0.0
        %2504 = vmatprep.subr.mxu0 0.0
        %2505 = vmatpush1.msra.mxu0 0.0
        %2506 = vmatprep.subr.mxu0 0.0
        %2507 = vmatpush1.msra.mxu0 0.0
        %2508 = vmatprep.subr.mxu0 0.0
        %2509 = vmatpush1.msra.mxu0 0.0
        %2510 = vmatprep.subr.mxu0 0.0
        %2511 = vmatpush1.msra.mxu0 0.0
        %2512 = vmatprep.subr.mxu0 0.0
        %2513 = vmatpush1.msra.mxu0 0.0
        %2514 = vmatprep.subr.mxu0 0.0
        %2515 = vmatpush1.msra.mxu0 0.0
        %2516 = vmatprep.subr.mxu0 0.0
        %2517 = vmatpush1.msra.mxu0 0.0
        %2518 = vmatprep.subr.mxu0 0.0
        %2519 = vmatpush1.msra.mxu0 0.0
        %2520 = vmatprep.subr.mxu0 0.0
        %2521 = vmatpush1.msra.mxu0 0.0
        %2522 = vmatprep.subr.mxu0 0.0
        %2523 = vmatpush1.msra.mxu0 0.0
        %2524 = vmatprep.subr.mxu0 0.0
        %2525 = vmatpush1.msra.mxu0 0.0
        %2526 = vmatprep.subr.mxu0 0.0
        %2527 = vmatpush1.msra.mxu0 0.0
        %2528 = vmatprep.subr.mxu0 0.0
        %2529 = vmatpush1.msra.mxu0 0.0
        %2530 = vmatprep.subr.mxu0 0.0
        %2531 = vmatpush1.msra.mxu0 0.0
        %2532 = vmatprep.subr.mxu0 0.0
        %2533 = vmatpush1.msra.mxu0 0.0
        %2534 = vmatprep.subr.mxu0 0.0
        %2535 = vmatpush1.msra.mxu0 0.0
        %2536 = vmatprep.subr.mxu0 0.0
        %2537 = vmatpush1.msra.mxu0 0.0
        %2538 = vmatprep.subr.mxu0 0.0
        %2539 = vmatpush1.msra.mxu0 0.0
        %2540 = vmatprep.subr.mxu0 0.0
        %2541 = vmatpush1.msra.mxu0 0.0
        %2542 = vmatprep.subr.mxu0 0.0
        %2543 = vmatpush1.msra.mxu0 0.0
        %2544 = vmatprep.subr.mxu0 0.0
        %2545 = vmatpush1.msra.mxu0 0.0
        %2546 = vmatprep.subr.mxu0 0.0
        %2547 = vmatpush1.msra.mxu0 0.0
        %2548 = vmatprep.subr.mxu0 0.0
        %2549 = vmatpush1.msra.mxu0 0.0
        %2550 = vmatprep.subr.mxu0 0.0
        %2551 = vmatpush1.msra.mxu0 0.0
        %2552 = vmatprep.subr.mxu0 0.0
        %2553 = vmatpush1.msra.mxu0 0.0
        %2554 = vmatprep.subr.mxu0 0.0
        %2555 = vmatpush1.msra.mxu0 0.0
        %2556 = vmatprep.mubr.f32.mxu0 0.0
        %2557 = vmatmul.mubr.f32.gmra.mrb[0].mxu0 %v2481
        %v2558 = vpop.f32.mrb[0].mxu0
        %v2559 = vadd.f32 0.0, %v2558
        %v2560 = vpop.f32.mrb[0].mxu0
        %2561 = vmatprep.mubr.f32.mxu0 0.0
        %2562 = vmatmul.mubr.f32.gmra.mrb[0].mxu0 %v2484
        %v2563 = vpop.f32.mrb[0].mxu0
        %v2564 = vadd.f32 0.0, %v2563
        %v2565 = vpop.f32.mrb[0].mxu0
        %2566 = vmatprep.mubr.f32.mxu0 0.0
        %2567 = vmatmul.mubr.f32.gmra.mrb[0].mxu0 %v2487
        %v2568 = vpop.f32.mrb[0].mxu0
        %v2569 = vadd.f32 0.0, %v2568
        %v2570 = vpop.f32.mrb[0].mxu0
        %2571 = vmatprep.mubr.f32.mxu0 0.0
        %2572 = vmatmul.mubr.f32.gmra.mrb[0].mxu0 %v2490
        %v2573 = vpop.f32.mrb[0].mxu0
        %v2574 = vadd.f32 0.0, %v2573
        %v2575 = vpop.f32.mrb[0].mxu0
        %2576 = vdwg.mxu0
        %v2577 = vadd.f32 %v2076, %v2559
        %v2578 = vadd.f32 %v2077, %v2564
        %v2579 = vadd.f32 %v2078, %v2569
        %v2580 = vadd.f32 %v2079, %v2574
        %v2581 = vld [vmem:[%s6] sm:$0x1]
        %v2583 = vlaneseq
        %v2584 = vshrl.u32 %v2583, 7
        %v2585 = vsub.s32 0, %v2584
        %v2586 = vrot.slane %v2581, %v2585
        %v2588 = vadd.f32 %v2577, %v2586
        %v2589 = vadd.f32 %v2578, %v2586
        %v2590 = vadd.f32 %v2579, %v2586
        %v2591 = vadd.f32 %v2580, %v2586
        %v2592 = vld [vmem:[%s7] sm:$0xff]
        %v2593 = vld [vmem:[%s7 + $0x8] sm:$0xff]
        %v2594 = vld [vmem:[%s7 + $0x10] sm:$0xff]
        %v2595 = vld [vmem:[%s7 + $0x18] sm:$0xff]
        %v2596 = vld [vmem:[%s8] sm:$0xff]
        %v2597 = vld [vmem:[%s8 + $0x8] sm:$0xff]
        %v2598 = vld [vmem:[%s8 + $0x10] sm:$0xff]
        %v2599 = vld [vmem:[%s8 + $0x18] sm:$0xff]
        %v2601 = vsel %vm492, %v2588, 0
        %v2604 = vsel %vm492, %v2589, 0
        %v2607 = vsel %vm492, %v2590, 0
        %v2610 = vsel %vm492, %v2591, 0
        %2612 = vmatprep.subr.mxu0 0.0
        %2613 = vmatpush1.msra.mxu0 %v2596
        %2614 = vmatprep.subr.mxu0 0.0
        %2615 = vmatpush1.msra.mxu0 %v2597
        %2616 = vmatprep.subr.mxu0 0.0
        %2617 = vmatpush1.msra.mxu0 %v2598
        %2618 = vmatprep.subr.mxu0 0.0
        %2619 = vmatpush1.msra.mxu0 %v2599
        %2620 = vmatprep.subr.mxu0 0.0
        %2621 = vmatpush1.msra.mxu0 0.0
        %2622 = vmatprep.subr.mxu0 0.0
        %2623 = vmatpush1.msra.mxu0 0.0
        %2624 = vmatprep.subr.mxu0 0.0
        %2625 = vmatpush1.msra.mxu0 0.0
        %2626 = vmatprep.subr.mxu0 0.0
        %2627 = vmatpush1.msra.mxu0 0.0
        %2628 = vmatprep.subr.mxu0 0.0
        %2629 = vmatpush1.msra.mxu0 0.0
        %2630 = vmatprep.subr.mxu0 0.0
        %2631 = vmatpush1.msra.mxu0 0.0
        %2632 = vmatprep.subr.mxu0 0.0
        %2633 = vmatpush1.msra.mxu0 0.0
        %2634 = vmatprep.subr.mxu0 0.0
        %2635 = vmatpush1.msra.mxu0 0.0
        %2636 = vmatprep.subr.mxu0 0.0
        %2637 = vmatpush1.msra.mxu0 0.0
        %2638 = vmatprep.subr.mxu0 0.0
        %2639 = vmatpush1.msra.mxu0 0.0
        %2640 = vmatprep.subr.mxu0 0.0
        %2641 = vmatpush1.msra.mxu0 0.0
        %2642 = vmatprep.subr.mxu0 0.0
        %2643 = vmatpush1.msra.mxu0 0.0
        %2644 = vmatprep.subr.mxu0 0.0
        %2645 = vmatpush1.msra.mxu0 0.0
        %2646 = vmatprep.subr.mxu0 0.0
        %2647 = vmatpush1.msra.mxu0 0.0
        %2648 = vmatprep.subr.mxu0 0.0
        %2649 = vmatpush1.msra.mxu0 0.0
        %2650 = vmatprep.subr.mxu0 0.0
        %2651 = vmatpush1.msra.mxu0 0.0
        %2652 = vmatprep.subr.mxu0 0.0
        %2653 = vmatpush1.msra.mxu0 0.0
        %2654 = vmatprep.subr.mxu0 0.0
        %2655 = vmatpush1.msra.mxu0 0.0
        %2656 = vmatprep.subr.mxu0 0.0
        %2657 = vmatpush1.msra.mxu0 0.0
        %2658 = vmatprep.subr.mxu0 0.0
        %2659 = vmatpush1.msra.mxu0 0.0
        %2660 = vmatprep.subr.mxu0 0.0
        %2661 = vmatpush1.msra.mxu0 0.0
        %2662 = vmatprep.subr.mxu0 0.0
        %2663 = vmatpush1.msra.mxu0 0.0
        %2664 = vmatprep.subr.mxu0 0.0
        %2665 = vmatpush1.msra.mxu0 0.0
        %2666 = vmatprep.subr.mxu0 0.0
        %2667 = vmatpush1.msra.mxu0 0.0
        %2668 = vmatprep.subr.mxu0 0.0
        %2669 = vmatpush1.msra.mxu0 0.0
        %2670 = vmatprep.subr.mxu0 0.0
        %2671 = vmatpush1.msra.mxu0 0.0
        %2672 = vmatprep.subr.mxu0 0.0
        %2673 = vmatpush1.msra.mxu0 0.0
        %2674 = vmatprep.subr.mxu0 0.0
        %2675 = vmatpush1.msra.mxu0 0.0
        %2676 = vmatprep.mubr.f32.mxu0 0.0
        %2677 = vmatmul.mubr.f32.gmra.mrb[0].mxu0 %v2601
        %v2678 = vpop.f32.mrb[0].mxu0
        %v2679 = vadd.f32 0.0, %v2678
        %v2680 = vpop.f32.mrb[0].mxu0
        %2681 = vmatprep.mubr.f32.mxu0 0.0
        %2682 = vmatmul.mubr.f32.gmra.mrb[0].mxu0 %v2604
        %v2683 = vpop.f32.mrb[0].mxu0
        %v2684 = vadd.f32 0.0, %v2683
        %v2685 = vpop.f32.mrb[0].mxu0
        %2686 = vmatprep.mubr.f32.mxu0 0.0
        %2687 = vmatmul.mubr.f32.gmra.mrb[0].mxu0 %v2607
        %v2688 = vpop.f32.mrb[0].mxu0
        %v2689 = vadd.f32 0.0, %v2688
        %v2690 = vpop.f32.mrb[0].mxu0
        %2691 = vmatprep.mubr.f32.mxu0 0.0
        %2692 = vmatmul.mubr.f32.gmra.mrb[0].mxu0 %v2610
        %v2693 = vpop.f32.mrb[0].mxu0
        %v2694 = vadd.f32 0.0, %v2693
        %v2695 = vpop.f32.mrb[0].mxu0
        %2696 = vdwg.mxu0
        %2697 = vmatprep.subr.mxu0 0.0
        %2698 = vmatpush1.msra.mxu0 %v2592
        %2699 = vmatprep.subr.mxu0 0.0
        %2700 = vmatpush1.msra.mxu0 %v2593
        %2701 = vmatprep.subr.mxu0 0.0
        %2702 = vmatpush1.msra.mxu0 %v2594
        %2703 = vmatprep.subr.mxu0 0.0
        %2704 = vmatpush1.msra.mxu0 %v2595
        %2705 = vmatprep.subr.mxu0 0.0
        %2706 = vmatpush1.msra.mxu0 0.0
        %2707 = vmatprep.subr.mxu0 0.0
        %2708 = vmatpush1.msra.mxu0 0.0
        %2709 = vmatprep.subr.mxu0 0.0
        %2710 = vmatpush1.msra.mxu0 0.0
        %2711 = vmatprep.subr.mxu0 0.0
        %2712 = vmatpush1.msra.mxu0 0.0
        %2713 = vmatprep.subr.mxu0 0.0
        %2714 = vmatpush1.msra.mxu0 0.0
        %2715 = vmatprep.subr.mxu0 0.0
        %2716 = vmatpush1.msra.mxu0 0.0
        %2717 = vmatprep.subr.mxu0 0.0
        %2718 = vmatpush1.msra.mxu0 0.0
        %2719 = vmatprep.subr.mxu0 0.0
        %2720 = vmatpush1.msra.mxu0 0.0
        %2721 = vmatprep.subr.mxu0 0.0
        %2722 = vmatpush1.msra.mxu0 0.0
        %2723 = vmatprep.subr.mxu0 0.0
        %2724 = vmatpush1.msra.mxu0 0.0
        %2725 = vmatprep.subr.mxu0 0.0
        %2726 = vmatpush1.msra.mxu0 0.0
        %2727 = vmatprep.subr.mxu0 0.0
        %2728 = vmatpush1.msra.mxu0 0.0
        %2729 = vmatprep.subr.mxu0 0.0
        %2730 = vmatpush1.msra.mxu0 0.0
        %2731 = vmatprep.subr.mxu0 0.0
        %2732 = vmatpush1.msra.mxu0 0.0
        %2733 = vmatprep.subr.mxu0 0.0
        %2734 = vmatpush1.msra.mxu0 0.0
        %2735 = vmatprep.subr.mxu0 0.0
        %2736 = vmatpush1.msra.mxu0 0.0
        %2737 = vmatprep.subr.mxu0 0.0
        %2738 = vmatpush1.msra.mxu0 0.0
        %2739 = vmatprep.subr.mxu0 0.0
        %2740 = vmatpush1.msra.mxu0 0.0
        %2741 = vmatprep.subr.mxu0 0.0
        %2742 = vmatpush1.msra.mxu0 0.0
        %2743 = vmatprep.subr.mxu0 0.0
        %2744 = vmatpush1.msra.mxu0 0.0
        %2745 = vmatprep.subr.mxu0 0.0
        %2746 = vmatpush1.msra.mxu0 0.0
        %2747 = vmatprep.subr.mxu0 0.0
        %2748 = vmatpush1.msra.mxu0 0.0
        %2749 = vmatprep.subr.mxu0 0.0
        %2750 = vmatpush1.msra.mxu0 0.0
        %2751 = vmatprep.subr.mxu0 0.0
        %2752 = vmatpush1.msra.mxu0 0.0
        %2753 = vmatprep.subr.mxu0 0.0
        %2754 = vmatpush1.msra.mxu0 0.0
        %2755 = vmatprep.subr.mxu0 0.0
        %2756 = vmatpush1.msra.mxu0 0.0
        %2757 = vmatprep.subr.mxu0 0.0
        %2758 = vmatpush1.msra.mxu0 0.0
        %2759 = vmatprep.subr.mxu0 0.0
        %2760 = vmatpush1.msra.mxu0 0.0
        %2761 = vmatprep.mubr.f32.mxu0 0.0
        %2762 = vmatmul.mubr.f32.gmra.mrb[0].mxu0 %v494
        %v2763 = vpop.f32.mrb[0].mxu0
        %v2764 = vadd.f32 %v2679, %v2763
        %v2765 = vpop.f32.mrb[0].mxu0
        %2766 = vmatprep.mubr.f32.mxu0 0.0
        %2767 = vmatmul.mubr.f32.gmra.mrb[0].mxu0 %v497
        %v2768 = vpop.f32.mrb[0].mxu0
        %v2769 = vadd.f32 %v2684, %v2768
        %v2770 = vpop.f32.mrb[0].mxu0
        %2771 = vmatprep.mubr.f32.mxu0 0.0
        %2772 = vmatmul.mubr.f32.gmra.mrb[0].mxu0 %v500
        %v2773 = vpop.f32.mrb[0].mxu0
        %v2774 = vadd.f32 %v2689, %v2773
        %v2775 = vpop.f32.mrb[0].mxu0
        %2776 = vmatprep.mubr.f32.mxu0 0.0
        %2777 = vmatmul.mubr.f32.gmra.mrb[0].mxu0 %v503
        %v2778 = vpop.f32.mrb[0].mxu0
        %v2779 = vadd.f32 %v2694, %v2778
        %v2780 = vpop.f32.mrb[0].mxu0
        %2781 = vdwg.mxu0
        %v2782 = vld [vmem:[%s9] sm:$0x1]
        %v2784 = vlaneseq
        %v2785 = vshrl.u32 %v2784, 7
        %v2786 = vsub.s32 0, %v2785
        %v2787 = vrot.slane %v2782, %v2786
        %v2789 = vadd.f32 %v2764, %v2787
        %v2790 = vadd.f32 %v2769, %v2787
        %v2791 = vadd.f32 %v2774, %v2787
        %v2792 = vadd.f32 %v2779, %v2787
        %vm2793 = vcmask 523264
        %2794 = vst.msk [vmem:[%s462] sm:$0xff] %vm2793, %v2789
        %2795 = vst.msk [vmem:[%s462 + $0x8] sm:$0xff] %vm2793, %v2790
        %2796 = vst.msk [vmem:[%s462 + $0x10] sm:$0xff] %vm2793, %v2791
        %2797 = vst.msk [vmem:[%s462 + $0x18] sm:$0xff] %vm2793, %v2792
        %v2798 = vsel %vm2793, %v2789, 0.0
        %v2799 = vsel %vm2793, %v2790, 0.0
        %v2800 = vadd.f32 %v2798, %v2799
        %v2801 = vsel %vm2793, %v2791, 0.0
        %v2802 = vadd.f32 %v2800, %v2801
        %v2803 = vsel %vm2793, %v2792, 0.0
        %v2804 = vadd.f32 %v2802, %v2803
        %v2805 = vrot.slane %v2804, 4
        %v2806 = vadd.f32 %v2804, %v2805
        %v2807 = vrot.slane %v2806, 2
        %v2808 = vadd.f32 %v2806, %v2807
        %v2809 = vrot.slane %v2808, 1
        %v2810 = vadd.f32 %v2808, %v2809
        %vm2811 = vcmask 516096
        %2812 = vst.msk [vmem:[%s468] sm:$0x1] %vm2811, %v2810
        %v2813 = vmul.f32 %v2789, %v2789
        %v2814 = vmul.f32 %v2790, %v2790
        %v2815 = vmul.f32 %v2791, %v2791
        %v2816 = vmul.f32 %v2792, %v2792
        %v2817 = vsel %vm2793, %v2813, 0.0
        %v2818 = vsel %vm2793, %v2814, 0.0
        %v2819 = vadd.f32 %v2817, %v2818
        %v2820 = vsel %vm2793, %v2815, 0.0
        %v2821 = vadd.f32 %v2819, %v2820
        %v2822 = vsel %vm2793, %v2816, 0.0
        %v2823 = vadd.f32 %v2821, %v2822
        %v2824 = vrot.slane %v2823, 4
        %v2825 = vadd.f32 %v2823, %v2824
        %v2826 = vrot.slane %v2825, 2
        %v2827 = vadd.f32 %v2825, %v2826
        %v2828 = vrot.slane %v2827, 1
        %v2829 = vadd.f32 %v2827, %v2828
        %2830 = vst.msk [vmem:[%s474] sm:$0x1] %vm2811, %v2829
        %s2831 = sand.u32 %s253, 1
        %s2832 = scalar_lea.sflag [#allocation4], %s2831
        %s2833 = sand.u32 %s253, 1
        %s2834 = smul.addr %s2833, 32
        %s2835 = scalar_lea.vmem [#allocation3], %s2834
        %s2836 = sand.u32 %s30, 1
        %s2837 = scalar_lea.sflag [#allocation6], %s2836
        %s2838 = sand.u32 %s279, 1
        %s2839 = scalar_lea.vmem [#allocation5], %s2838
        %s2840 = sand.u32 %s30, 1
        %s2841 = scalar_lea.sflag [#allocation6], %s2840
        %s2842 = sand.u32 %s305, 1
        %s2843 = scalar_lea.vmem [#allocation7], %s2842
        // Predicated region
        $region99: #{tpu_custom_call.1} parent=93 // pred_check
          %p2844 = pneg %p263
        $region100: #{tpu_custom_call.1} parent=93 // pred_check_branch
          %2846 = sbr.rel (%p2844) target = $region102
        $region101: #{tpu_custom_call.1} parent=93 // pred_region
          #allocation9 [shape = 'u32[6]{0}', space=smem, size = 0x18, scoped, tag = 'DMA stride descriptor']
          %s2847 = smul.u32 2, %s30
          %s2849 = ssub.s32 512, 512
          %2850 = vsyncadd %s2832, %s2849
          %s2851 = smul.addr %s2847, 128
          %s2852 = scalar_lea.hbm %s10, %s2851
          %s2854 = sshll.u32 1, 14
          %s2855 = sxor.u32 4294967295, %s2854
          %s2858 = sshll.u32 7, 18
          %s2859 = sxor.u32 4294967295, %s2858
          %s2860 = sand.u32 0, %s2859
          %s2862 = sor.u32 %s2860, 0
          %s2864 = sshll.u32 3, 24
          %s2865 = sxor.u32 4294967295, %s2864
          %s2866 = sand.u32 %s2862, %s2865
          %s2868 = sor.u32 %s2866, 0
          %s2869 = sshll.u32 %s2835, 4
          %s2870 = int_to_ptr.vmem [resolvable:$true] %s2869
          %2876 = sst [smem:[#allocation9]] 256
          %s2877 = scalar_lea.smem [#allocation9], 1
          %2878 = sst [smem:[%s2877]] 512
          %s2879 = scalar_lea.smem [#allocation9], 2
          %2880 = sst [smem:[%s2879]] 2
          %s2881 = scalar_lea.smem [#allocation9], 3
          %2882 = sst [smem:[%s2881]] 128
          %s2883 = scalar_lea.smem [#allocation9], 4
          %2884 = sst [smem:[%s2883]] 128
          %s2885 = scalar_lea.smem [#allocation9], 5
          %2886 = sst [smem:[%s2885]] 8
          %2888 = dma.general %s2870, 512, %s2852, %s2832, [#allocation8], [#allocation9], %s2868, 0
        $region102: #{tpu_custom_call.1} parent=93 // pred_fallthru
          _
        // Predicated region
        $region103: #{tpu_custom_call.1} parent=93 // pred_check
          %p2889 = pneg %p289
        $region104: #{tpu_custom_call.1} parent=93 // pred_check_branch
          %2891 = sbr.rel (%p2889) target = $region106
        $region105: #{tpu_custom_call.1} parent=93 // pred_region
          %s2893 = ssub.s32 16, 16
          %2894 = vsyncadd %s2837, %s2893
          %s2895 = smul.addr %s30, 16
          %s2896 = scalar_lea.hbm %s11, %s2895
          %s2898 = sshll.u32 %s2839, 4
          %s2899 = int_to_ptr.vmem [resolvable:$true] %s2898
          %2901 = dma.vmem_to_hbm [thread:$0]  %s2899, 16, %s2896, %s2837
        $region106: #{tpu_custom_call.1} parent=93 // pred_fallthru
          _
        // Predicated region
        $region107: #{tpu_custom_call.1} parent=93 // pred_check
          %p2902 = pneg %p315
        $region108: #{tpu_custom_call.1} parent=93 // pred_check_branch
          %2904 = sbr.rel (%p2902) target = $region110
        $region109: #{tpu_custom_call.1} parent=93 // pred_region
          %s2906 = ssub.s32 16, 16
          %2907 = vsyncadd %s2841, %s2906
          %s2908 = smul.addr %s30, 16
          %s2909 = scalar_lea.hbm %s12, %s2908
          %s2911 = sshll.u32 %s2843, 4
          %s2912 = int_to_ptr.vmem [resolvable:$true] %s2911
          %2914 = dma.vmem_to_hbm [thread:$0]  %s2912, 16, %s2909, %s2841
        $region110: #{tpu_custom_call.1} parent=93 // pred_fallthru
          _
      $region94: #{tpu_custom_call.1} parent=5 // pred_fallthru
        _
      %p2915 = scmp.le.s32.totalorder 2, %s25
      // Predicated region
      $region111: #{tpu_custom_call.1} parent=5 // pred_check
        %p2916 = pneg %p2915
      $region112: #{tpu_custom_call.1} parent=5 // pred_check_branch
        %2918 = sbr.rel (%p2916) target = $region114
      $region113: #{tpu_custom_call.1} parent=5 // pred_region
        %s2919 = ssub.s32 %s25, 2
        // Predicated region
        $region115: #{tpu_custom_call.1} parent=113 // pred_check
          %p2920 = pneg %p269
        $region116: #{tpu_custom_call.1} parent=113 // pred_check_branch
          %2922 = sbr.rel (%p2920) target = $region118
        $region117: #{tpu_custom_call.1} parent=113 // pred_region
          %s2923 = sand.u32 %s254, 1
          %s2924 = scalar_lea.sflag [#allocation4], %s2923
          %s2925 = sand.u32 %s254, 1
          %s2926 = smul.addr %s2925, 32
          %s2927 = scalar_lea.vmem [#allocation3], %s2926
          %2928 = dma.done %s2924, 512
        $region118: #{tpu_custom_call.1} parent=113 // pred_fallthru
          _
        // Predicated region
        $region119: #{tpu_custom_call.1} parent=113 // pred_check
          %p2929 = pneg %p295
        $region120: #{tpu_custom_call.1} parent=113 // pred_check_branch
          %2931 = sbr.rel (%p2929) target = $region122
        $region121: #{tpu_custom_call.1} parent=113 // pred_region
          %s2932 = sand.u32 %s31, 1
          %s2933 = scalar_lea.sflag [#allocation6], %s2932
          %s2934 = sand.u32 %s280, 1
          %s2935 = scalar_lea.vmem [#allocation5], %s2934
          %2936 = dma.done %s2933, 16
        $region122: #{tpu_custom_call.1} parent=113 // pred_fallthru
          _
        // Predicated region
        $region123: #{tpu_custom_call.1} parent=113 // pred_check
          %p2937 = pneg %p321
        $region124: #{tpu_custom_call.1} parent=113 // pred_check_branch
          %2939 = sbr.rel (%p2937) target = $region126
        $region125: #{tpu_custom_call.1} parent=113 // pred_region
          %s2940 = sand.u32 %s31, 1
          %s2941 = scalar_lea.sflag [#allocation6], %s2940
          %s2942 = sand.u32 %s306, 1
          %s2943 = scalar_lea.vmem [#allocation7], %s2942
          %2944 = dma.done %s2941, 16
        $region126: #{tpu_custom_call.1} parent=113 // pred_fallthru
          _
      $region114: #{tpu_custom_call.1} parent=5 // pred_fallthru
        _
    $region6: #{tpu_custom_call.1} parent=1 // loop_footer
      %s29 = sadd.s32 1, %s25
    $region7: #{tpu_custom_call.1} parent=1 // loop_footer_branch
      %24 = sbr.rel target = $region3
    $region8: #{tpu_custom_call.1} parent=1 // loop_exit
      _
    %2945 = vsyncpa [#allocation4], 1
    %s2946 = scalar_lea.sflag [#allocation4], 1
    %2947 = vsyncpa %s2946, 1
    %2948 = vsyncpa [#allocation6], 1
    %s2949 = scalar_lea.sflag [#allocation6], 1
    %2950 = vsyncpa %s2949, 1

</llo_original>
